<compile_context>
chip_gen: v6e
topology: v6e:2x2x1
jax: 0.10.0
libtpu: 0.0.40
codegen_flags: <defaults>
</compile_context>

<pallas_src>
import jax
import jax.numpy as jnp
from jax.experimental import pallas as pl

# ---- small, module-consistent config ----
BATCH = 64                  # whole batch, one grid step (per review: amortize overhead)
L, D = 8, 32                # maxlen, hidden_units
NV, NH = 2, 4               # n_v, n_h
P, N = 3, 3                 # positives / negatives
T = P + N
NUM_USERS, NUM_ITEMS = 10, 20
F_IN = NV * D + NH * L      # fc1 input dim (fc1_dim_v + fc1_dim_h)
LD = L * D                  # 256 — im2col lane width
LNH = L * NH                # 32  — all horizontal-conv channels, lane packed
SLAB_W = 128                # per-row scoring slab lane width (W2 | b2 | pad)
OUT_W = 128                 # lane-dense output width (scores live in cols [0, T))
BM_ROWS = BATCH * L         # rows of the pre-tiled bias/time-mask
C_ROWS = ((BM_ROWS + LNH + 1 + 7) // 8) * 8   # consts slab rows (sublane padded)

assert LNH == D             # consts slab uses a single 32-lane width


def caser_kernel(x_ref, w_ref, c_ref, u_ref, s_ref, res_ref):
    # 1) ONE MXU matmul evaluates every horizontal Conv2d(1,NH,(i,D)) filter AND
    #    the (vertical conv ∘ fc1) contribution: W_all = [WhF | WvF].
    full = jnp.dot(x_ref[...], w_ref[...],
                   preferred_element_type=jnp.float32)          # (B*L, LNH+D)

    cvals = c_ref[...]                                          # (C_ROWS, 32) f32
    bm_t = cvals[:BM_ROWS, :LNH]                                # pre-tiled bias + (-1e30) mask
    w1h = cvals[BM_ROWS:BM_ROWS + LNH, :D]                      # fc1 rows acting on out_h
    b1 = cvals[BM_ROWS + LNH:BM_ROWS + LNH + 1, :D]             # fused fc1 bias (+ vconv bias)

    # 2) Horizontal epilogue: additive bias+time-mask in 2-D form, relu, ONE
    #    reshape, max-pool over time (masked entries are 0 post-relu).
    act = jnp.maximum(full[:, :LNH] + bm_t, 0.0)                # (B*L, LNH)
    out_h = jnp.max(act.reshape(BATCH, L, LNH), axis=1)         # (B, LNH)

    # 3) Vertical conv folded into fc1: the t==0 im2col row equals E_flat, so
    #    out_v @ W1v is already in the matmul result.
    v_pre = full.reshape(BATCH, L, LNH + D)[:, 0, LNH:]         # (B, D)

    # 4) fc1 + relu.  Dropout is identity in eval mode.
    # TODO(synk): training-mode dropout (nn.Dropout) is not implemented.
    z = jnp.maximum(
        v_pre + jnp.dot(out_h, w1h, preferred_element_type=jnp.float32) + b1,
        0.0)                                                    # (B, D)

    # 5) baddbmm scoring as VPU multiply + one lane reduce; exact sigmoid.
    slab = s_ref[...]                                           # (B, T, 128)
    u = u_ref[...]                                              # (B, D)
    scores = (jnp.sum(slab[..., :D] * z[:, None, :]
                      + slab[..., D:2 * D] * u[:, None, :], axis=-1)
              + slab[..., 2 * D])                               # (B, T)
    sig = 1.0 / (1.0 + jnp.exp(-scores))

    # 6) Lane-dense writeback: pad T -> 128 lanes; wrapper slices [:, :T].
    res_ref[...] = jnp.concatenate(
        [sig, jnp.zeros((BATCH, OUT_W - T), jnp.float32)], axis=1)


def caser_forward(params, packed, seq, user, pos, neg):
    # ---- plain-JAX glue: embedding gathers + layout plumbing ----
    E = params["item_emb"][seq]                      # (B, L, D)
    U = params["user_emb"][user[:, 0]]               # (B, D)   (squeeze(1))
    item_var = jnp.concatenate([pos, neg], axis=1)   # (B, T)
    W2g = params["W2"][item_var]                     # (B, T, 2D)
    b2g = params["b2"][item_var][..., 0]             # (B, T)
    # One lane-dense per-row scoring slab: [W2_z | W2_u | b2 | 0-pad].
    slab = jnp.zeros((BATCH, T, SLAB_W), jnp.float32)
    slab = slab.at[:, :, :2 * D].set(W2g).at[:, :, 2 * D].set(b2g)

    # im2col via a single gather: X[b, t, j*D+d] = E[b, t+j, d] (0 past seq end;
    # those rows are masked before the time max-pool inside the kernel).
    Epad = jnp.concatenate([E, jnp.zeros_like(E)], axis=1)       # (B, 2L, D)
    gidx = jnp.arange(L)[:, None] + jnp.arange(L)[None, :]       # (L, L): t + j
    X2 = Epad[:, gidx, :].reshape(BATCH * L, LD).astype(jnp.bfloat16)

    res = pl.pallas_call(
        caser_kernel,
        out_shape=jax.ShapeDtypeStruct((BATCH, OUT_W), jnp.float32),
        grid=(1,),
        in_specs=[
            pl.BlockSpec((BATCH * L, LD), lambda i: (0, 0)),        # im2col X (bf16)
            pl.BlockSpec((LD, LNH + D), lambda i: (0, 0)),          # [WhF | WvF] (bf16)
            pl.BlockSpec((C_ROWS, D), lambda i: (0, 0)),            # consts slab (f32)
            pl.BlockSpec((BATCH, D), lambda i: (0, 0)),             # user embeddings
            pl.BlockSpec((BATCH, T, SLAB_W), lambda i: (0, 0, 0)),  # W2/b2 slab
        ],
        out_specs=pl.BlockSpec((BATCH, OUT_W), lambda i: (0, 0)),
    )(X2, packed["w_all"], packed["consts"], U, slab)

    scores = res[:, :T]
    return scores[:, :P], scores[:, P:]


def pack_params(p):
    """One-time repack of weights into lane-dense, kernel-ready buffers."""
    # fc1 split: rows [0, NV*D) act on out_v, rows [NV*D, F_IN) on out_h.
    W1v = p["W1T"][:NV * D, :].reshape(NV, D, D)        # [c, d, e]
    W1h = p["W1T"][NV * D:, :]                          # (LNH, D)
    # Fold the vertical conv into fc1:
    #   out_v[b, c*D+d] = bv[c] + sum_l E[b,l,d] Wv[c,l]
    #   => out_v @ W1v = E_flat @ WvF + const_v
    WvF = jnp.einsum("lc,cde->lde", p["WvT"], W1v).reshape(LD, D)
    const_v = jnp.einsum("c,cde->e", p["bv"][0], W1v)
    b1f = (p["b1"] + const_v[None, :])[0]               # (D,)
    # Horizontal conv weights: Wh4[i-1, c, j, d] -> WhF[j*D+d, (i-1)*NH+c]
    WhF = jnp.transpose(p["Wh4"], (2, 3, 0, 1)).reshape(LD, LNH)
    # Single bf16 matmul weight: [all horizontal filters | folded vertical conv].
    w_all = jnp.concatenate([WhF, WvF], axis=1).astype(jnp.bfloat16)  # (LD, LNH+D)

    # Additive bias + time mask: filter of height i is valid for t <= L - i.
    t_idx = jnp.arange(L)[:, None]
    i_idx = jnp.repeat(jnp.arange(1, L + 1), NH)[None, :]
    bm = jnp.where(t_idx + i_idx <= L,
                   jnp.broadcast_to(p["bh"].reshape(1, LNH), (L, LNH)),
                   -1e30).astype(jnp.float32)           # (L, LNH)
    bm_tiled = jnp.tile(bm, (BATCH, 1))                 # pre-tiled (per review)

    consts = jnp.zeros((C_ROWS, D), jnp.float32)
    consts = consts.at[:BM_ROWS, :].set(bm_tiled)
    consts = consts.at[BM_ROWS:BM_ROWS + LNH, :].set(W1h)
    consts = consts.at[BM_ROWS + LNH, :].set(b1f)
    return {"w_all": w_all, "consts": consts}


def caser_reference(params, seq, user, pos, neg):
    # Pure-JAX mirror of the PyTorch forward, for correctness checking.
    E = params["item_emb"][seq]
    U = params["user_emb"][user[:, 0]]
    item_var = jnp.concatenate([pos, neg], axis=1)
    W2g = params["W2"][item_var]
    b2g = params["b2"][item_var][..., 0]

    Wv = params["WvT"].T                                     # (NV, L)
    out_v = jnp.einsum("bld,cl->bcd", E, Wv) + params["bv"].reshape(NV, 1)
    out_v = out_v.reshape(E.shape[0], NV * D)

    h_parts = []
    for i in range(1, L + 1):
        lout = L - i + 1
        conv = jnp.zeros((E.shape[0], lout, NH), jnp.float32)
        for j in range(i):
            w_ij = params["Wh4"][i - 1, :, j, :]             # (NH, D)
            conv = conv + jnp.einsum("btd,cd->btc", E[:, j:j + lout, :], w_ij)
        conv = conv + params["bh"][i - 1][None, None, :]
        h_parts.append(jnp.max(jax.nn.relu(conv), axis=1))
    out_h = jnp.concatenate(h_parts, axis=-1)

    out = jnp.concatenate([out_v, out_h], axis=-1)
    z = jax.nn.relu(out @ params["W1T"] + params["b1"])
    x = jnp.concatenate([z, U], axis=-1)
    scores = jnp.einsum("btk,bk->bt", W2g, x) + b2g
    res = jax.nn.sigmoid(scores)
    return res[:, :P], res[:, P:]


def init_params(key):
    ks = jax.random.split(key, 8)
    p = {}
    # Embedding tables (module does .normal_(0, 1/dim) after construction).
    p["user_emb"] = (1.0 / D) * jax.random.normal(ks[0], (NUM_USERS + 1, D), jnp.float32)
    p["item_emb"] = (1.0 / D) * jax.random.normal(ks[1], (NUM_ITEMS + 1, D), jnp.float32)
    p["W2"] = (1.0 / (2 * D)) * jax.random.normal(ks[2], (NUM_ITEMS + 1, 2 * D), jnp.float32)
    p["b2"] = jnp.zeros((NUM_ITEMS + 1, 1), jnp.float32)
    # conv_v: Conv2d(1, NV, (L, 1)) -> weight (NV, 1, L, 1); store transposed (L, NV).
    p["WvT"] = 0.1 * jax.random.normal(ks[3], (L, NV), jnp.float32)
    p["bv"] = 0.1 * jax.random.normal(ks[4], (1, NV), jnp.float32)
    # conv_h[i]: Conv2d(1, NH, (i, D)) -> weight (NH, 1, i, D); store as
    # Wh4[i-1, c, j, d] with zero padding for j >= i (never used).
    wh_rows, bh_rows = [], []
    khs = jax.random.split(ks[5], 2 * L)
    for i in range(1, L + 1):
        w_i = 0.1 * jax.random.normal(khs[2 * (i - 1)], (NH, i, D), jnp.float32)
        w_i = jnp.pad(w_i, ((0, 0), (0, L - i), (0, 0)))     # (NH, L, D)
        wh_rows.append(w_i)
        bh_rows.append(0.1 * jax.random.normal(khs[2 * (i - 1) + 1], (NH,), jnp.float32))
    p["Wh4"] = jnp.stack(wh_rows, axis=0)                    # (L, NH, L, D)
    p["bh"] = jnp.stack(bh_rows, axis=0)                     # (L, NH)
    # fc1: Linear(F_IN, D); store transposed weight (F_IN, D) and bias (1, D).
    p["W1T"] = 0.1 * jax.random.normal(ks[6], (F_IN, D), jnp.float32)
    p["b1"] = 0.1 * jax.random.normal(ks[7], (1, D), jnp.float32)
    return p


if __name__ == "__main__":
    key = jax.random.PRNGKey(0)
    kp, k1, k2, k3, k4 = jax.random.split(key, 5)
    params = init_params(kp)
    packed = pack_params(params)

    seq = jax.random.randint(k1, (BATCH, L), 1, NUM_ITEMS + 1, dtype=jnp.int32)
    user = jax.random.randint(k2, (BATCH, 1), 1, NUM_USERS + 1, dtype=jnp.int32)
    pos = jax.random.randint(k3, (BATCH, P), 1, NUM_ITEMS + 1, dtype=jnp.int32)
    neg = jax.random.randint(k4, (BATCH, N), 1, NUM_ITEMS + 1, dtype=jnp.int32)

    fwd = jax.jit(caser_forward)
    tgt, negs = fwd(params, packed, seq, user, pos, neg)
    jax.block_until_ready((tgt, negs))

    tgt_ref, negs_ref = caser_reference(params, seq, user, pos, neg)
    assert tgt.shape == (BATCH, P) and negs.shape == (BATCH, N)
    assert jnp.allclose(tgt, tgt_ref, atol=2e-3, rtol=2e-3)
    assert jnp.allclose(negs, negs_ref, atol=2e-3, rtol=2e-3)

    print("KERNEL_OK")
</pallas_src>

<mosaic_0001>
module attributes {stable_mosaic.version = 11 : i64} {
  func.func @caser_kernel(%arg0: i32, %arg1: memref<512x256xbf16, #tpu.memory_space<vmem>>, %arg2: memref<256x64xbf16, #tpu.memory_space<vmem>>, %arg3: memref<552x32xf32, #tpu.memory_space<vmem>>, %arg4: memref<64x32xf32, #tpu.memory_space<vmem>>, %arg5: memref<64x6x128xf32, #tpu.memory_space<vmem>>, %arg6: memref<64x128xf32, #tpu.memory_space<vmem>>) attributes {dimension_semantics = [#tpu.dimension_semantics<arbitrary>], iteration_bounds = array<i64: 1>, scalar_prefetch = 0 : i64, scratch_operands = 0 : i64, tpu.core_type = #tpu.core_type<tc>, window_params = [{pipeline_mode = #tpu.pipeline_mode<synchronous>, transform_indices = @transform_0, window_bounds = array<i64: 512, 256>}, {pipeline_mode = #tpu.pipeline_mode<synchronous>, transform_indices = @transform_1, window_bounds = array<i64: 256, 64>}, {pipeline_mode = #tpu.pipeline_mode<synchronous>, transform_indices = @transform_2, window_bounds = array<i64: 552, 32>}, {pipeline_mode = #tpu.pipeline_mode<synchronous>, transform_indices = @transform_3, window_bounds = array<i64: 64, 32>}, {pipeline_mode = #tpu.pipeline_mode<synchronous>, transform_indices = @transform_4, window_bounds = array<i64: 64, 6, 128>}, {pipeline_mode = #tpu.pipeline_mode<synchronous>, transform_indices = @transform_5, window_bounds = array<i64: 64, 128>}]} {
    %c0 = arith.constant 0 : index
    %c0_0 = arith.constant 0 : index
    %0 = vector.load %arg1[%c0, %c0_0] : memref<512x256xbf16, #tpu.memory_space<vmem>>, vector<512x256xbf16>
    %c0_1 = arith.constant 0 : index
    %c0_2 = arith.constant 0 : index
    %1 = vector.load %arg2[%c0_1, %c0_2] : memref<256x64xbf16, #tpu.memory_space<vmem>>, vector<256x64xbf16>
    %cst = arith.constant dense<0.000000e+00> : vector<512x64xf32>
    %2 = tpu.matmul %0, %1, %cst {dimension_numbers = #tpu.dot_dimension_numbers<[1], [0], [0], [1], [0, 0, 1, 1], [], []>} : vector<512x256xbf16>, vector<256x64xbf16>, vector<512x64xf32> -> vector<512x64xf32>
    %c0_3 = arith.constant 0 : index
    %c0_4 = arith.constant 0 : index
    %3 = vector.load %arg3[%c0_3, %c0_4] : memref<552x32xf32, #tpu.memory_space<vmem>>, vector<552x32xf32>
    %4 = vector.extract_strided_slice %3 {offsets = [0, 0], sizes = [512, 32], strides = [1, 1]} : vector<552x32xf32> to vector<512x32xf32>
    %5 = vector.extract_strided_slice %3 {offsets = [512, 0], sizes = [32, 32], strides = [1, 1]} : vector<552x32xf32> to vector<32x32xf32>
    %6 = vector.extract_strided_slice %3 {offsets = [544, 0], sizes = [1, 32], strides = [1, 1]} : vector<552x32xf32> to vector<1x32xf32>
    %7 = vector.extract_strided_slice %2 {offsets = [0, 0], sizes = [512, 32], strides = [1, 1]} : vector<512x64xf32> to vector<512x32xf32>
    %8 = arith.addf %7, %4 : vector<512x32xf32>
    %cst_5 = arith.constant 0.000000e+00 : f32
    %9 = vector.broadcast %cst_5 : f32 to vector<512x32xf32>
    %10 = arith.maximumf %8, %9 : vector<512x32xf32>
    %11 = vector.shape_cast %10 : vector<512x32xf32> to vector<64x8x32xf32>
    %cst_6 = arith.constant dense<0xFF800000> : vector<64x32xf32>
    %12 = vector.multi_reduction <maximumf>, %11, %cst_6 [1] : vector<64x8x32xf32> to vector<64x32xf32>
    %13 = vector.shape_cast %2 : vector<512x64xf32> to vector<64x8x64xf32>
    %14 = vector.extract_strided_slice %13 {offsets = [0, 0, 32], sizes = [64, 1, 32], strides = [1, 1, 1]} : vector<64x8x64xf32> to vector<64x1x32xf32>
    %15 = vector.shape_cast %14 : vector<64x1x32xf32> to vector<64x32xf32>
    %cst_7 = arith.constant dense<0.000000e+00> : vector<64x32xf32>
    %16 = tpu.matmul %12, %5, %cst_7 {dimension_numbers = #tpu.dot_dimension_numbers<[1], [0], [0], [1], [0, 0, 1, 1], [], []>} : vector<64x32xf32>, vector<32x32xf32>, vector<64x32xf32> -> vector<64x32xf32>
    %17 = arith.addf %15, %16 : vector<64x32xf32>
    %18 = vector.broadcast %6 : vector<1x32xf32> to vector<64x32xf32>
    %19 = arith.addf %17, %18 : vector<64x32xf32>
    %cst_8 = arith.constant 0.000000e+00 : f32
    %20 = vector.broadcast %cst_8 : f32 to vector<64x32xf32>
    %21 = arith.maximumf %19, %20 : vector<64x32xf32>
    %c0_9 = arith.constant 0 : index
    %c0_10 = arith.constant 0 : index
    %c0_11 = arith.constant 0 : index
    %22 = vector.load %arg5[%c0_9, %c0_10, %c0_11] : memref<64x6x128xf32, #tpu.memory_space<vmem>>, vector<64x6x128xf32>
    %c0_12 = arith.constant 0 : index
    %c0_13 = arith.constant 0 : index
    %23 = vector.load %arg4[%c0_12, %c0_13] : memref<64x32xf32, #tpu.memory_space<vmem>>, vector<64x32xf32>
    %24 = vector.extract_strided_slice %22 {offsets = [0, 0, 0], sizes = [64, 6, 32], strides = [1, 1, 1]} : vector<64x6x128xf32> to vector<64x6x32xf32>
    %25 = vector.shape_cast %21 : vector<64x32xf32> to vector<64x1x32xf32>
    %26 = vector.broadcast %25 : vector<64x1x32xf32> to vector<64x6x32xf32>
    %27 = arith.mulf %24, %26 : vector<64x6x32xf32>
    %28 = vector.extract_strided_slice %22 {offsets = [0, 0, 32], sizes = [64, 6, 32], strides = [1, 1, 1]} : vector<64x6x128xf32> to vector<64x6x32xf32>
    %29 = vector.shape_cast %23 : vector<64x32xf32> to vector<64x1x32xf32>
    %30 = vector.broadcast %29 : vector<64x1x32xf32> to vector<64x6x32xf32>
    %31 = arith.mulf %28, %30 : vector<64x6x32xf32>
    %32 = arith.addf %27, %31 : vector<64x6x32xf32>
    %cst_14 = arith.constant dense<0.000000e+00> : vector<64x6xf32>
    %33 = vector.multi_reduction <add>, %32, %cst_14 [2] : vector<64x6x32xf32> to vector<64x6xf32>
    %34 = vector.extract_strided_slice %22 {offsets = [0, 0, 64], sizes = [64, 6, 1], strides = [1, 1, 1]} : vector<64x6x128xf32> to vector<64x6x1xf32>
    %35 = vector.shape_cast %34 : vector<64x6x1xf32> to vector<64x6xf32>
    %36 = arith.addf %33, %35 : vector<64x6xf32>
    %cst_15 = arith.constant 0.000000e+00 : f32
    %37 = vector.broadcast %cst_15 : f32 to vector<64x6xf32>
    %38 = arith.subf %37, %36 : vector<64x6xf32>
    %39 = math.exp %38 : vector<64x6xf32>
    %cst_16 = arith.constant 1.000000e+00 : f32
    %40 = vector.broadcast %cst_16 : f32 to vector<64x6xf32>
    %41 = arith.addf %40, %39 : vector<64x6xf32>
    %cst_17 = arith.constant 1.000000e+00 : f32
    %42 = vector.broadcast %cst_17 : f32 to vector<64x6xf32>
    %43 = arith.divf %42, %41 : vector<64x6xf32>
    %cst_18 = arith.constant 0.000000e+00 : f32
    %44 = vector.broadcast %cst_18 : f32 to vector<64x122xf32>
    %45 = tpu.concatenate %43, %44 in 1 : vector<64x6xf32>, vector<64x122xf32> -> vector<64x128xf32>
    %c0_19 = arith.constant 0 : index
    %c0_20 = arith.constant 0 : index
    %46 = vector.load %arg6[%c0_19, %c0_20] : memref<64x128xf32, #tpu.memory_space<vmem>>, vector<64x128xf32>
    tpu.vector_store %arg6[%c0_19, %c0_20], %45 {strides = array<i32>} : memref<64x128xf32, #tpu.memory_space<vmem>>, vector<64x128xf32>,
    return
  }
  func.func @transform_0(%arg0: i32) -> (i32, i32) {
    %c0_i32 = arith.constant 0 : i32
    %c0_i32_0 = arith.constant 0 : i32
    %c0_i32_1 = arith.constant 0 : i32
    return %c0_i32, %c0_i32_0 : i32, i32
  }
  func.func @transform_1(%arg0: i32) -> (i32, i32) {
    %c0_i32 = arith.constant 0 : i32
    %c0_i32_0 = arith.constant 0 : i32
    %c0_i32_1 = arith.constant 0 : i32
    return %c0_i32, %c0_i32_0 : i32, i32
  }
  func.func @transform_2(%arg0: i32) -> (i32, i32) {
    %c0_i32 = arith.constant 0 : i32
    %c0_i32_0 = arith.constant 0 : i32
    %c0_i32_1 = arith.constant 0 : i32
    return %c0_i32, %c0_i32_0 : i32, i32
  }
  func.func @transform_3(%arg0: i32) -> (i32, i32) {
    %c0_i32 = arith.constant 0 : i32
    %c0_i32_0 = arith.constant 0 : i32
    %c0_i32_1 = arith.constant 0 : i32
    return %c0_i32, %c0_i32_0 : i32, i32
  }
  func.func @transform_4(%arg0: i32) -> (i32, i32, i32) {
    %c0_i32 = arith.constant 0 : i32
    %c0_i32_0 = arith.constant 0 : i32
    %c0_i32_1 = arith.constant 0 : i32
    %c0_i32_2 = arith.constant 0 : i32
    return %c0_i32, %c0_i32_0, %c0_i32_1 : i32, i32, i32
  }
  func.func @transform_5(%arg0: i32) -> (i32, i32) {
    %c0_i32 = arith.constant 0 : i32
    %c0_i32_0 = arith.constant 0 : i32
    %c0_i32_1 = arith.constant 0 : i32
    return %c0_i32, %c0_i32_0 : i32, i32
  }
}

</mosaic_0001>

<llo_original>
// kernel: caser_forward.1
$region0: #{caser_forward.1}
  #allocation0 [shape = 'u32[]', space=smem, size = 0x4, offset = 0x4, fixed_abs, tag = 'smem constant byte address 0x4 - core index']
  #allocation1 [shape = 'u32[144,128]{1,0:T(1,128)}', space=vmem, size = 0x12000, scoped, tag = 'internal scratch']
  %s0 = inlined_call_operand.vmem [shape: bf16[512,256], index: 0, kind: input, shape index: {}]
  %s1 = inlined_call_operand.vmem [shape: bf16[256,64], index: 1, kind: input, shape index: {}]
  %s2 = inlined_call_operand.vmem [shape: f32[552,32], index: 2, kind: input, shape index: {}]
  %s3 = inlined_call_operand.vmem [shape: f32[64,32], index: 3, kind: input, shape index: {}]
  %s4 = inlined_call_operand.vmem [shape: f32[64,6,128], index: 4, kind: input, shape index: {}]
  %s5 = inlined_call_operand.vmem [shape: f32[64,128], index: 5, kind: output, shape index: {}]
  %s6 = sld [smem:[#allocation0]]
  $region30: #{caser_forward.1} parent=0
    _
  %s8 = ssub.s32 1, %s6
  %s9 = scalar_select 0, %s8, %s6
  // Predicated region
  $region2: #{caser_forward.1} parent=0 // pred_check
    _
  $region3: #{caser_forward.1} parent=0 // pred_check_branch
    %11 = sbr.rel (0) target = $region5
  $region4: #{caser_forward.1} parent=0 // pred_region
    _
  $region5: #{caser_forward.1} parent=0 // pred_fallthru
    _
  // Predicated region
  $region6: #{caser_forward.1} parent=0 // pred_check
    _
  $region7: #{caser_forward.1} parent=0 // pred_check_branch
    %13 = sbr.rel (0) target = $region9
  $region8: #{caser_forward.1} parent=0 // pred_region
    _
  $region9: #{caser_forward.1} parent=0 // pred_fallthru
    _
  // Predicated region
  $region10: #{caser_forward.1} parent=0 // pred_check
    _
  $region11: #{caser_forward.1} parent=0 // pred_check_branch
    %15 = sbr.rel (0) target = $region13
  $region12: #{caser_forward.1} parent=0 // pred_region
    _
  $region13: #{caser_forward.1} parent=0 // pred_fallthru
    _
  // Predicated region
  $region14: #{caser_forward.1} parent=0 // pred_check
    _
  $region15: #{caser_forward.1} parent=0 // pred_check_branch
    %17 = sbr.rel (0) target = $region17
  $region16: #{caser_forward.1} parent=0 // pred_region
    _
  $region17: #{caser_forward.1} parent=0 // pred_fallthru
    _
  // Predicated region
  $region18: #{caser_forward.1} parent=0 // pred_check
    _
  $region19: #{caser_forward.1} parent=0 // pred_check_branch
    %19 = sbr.rel (0) target = $region21
  $region20: #{caser_forward.1} parent=0 // pred_region
    _
  $region21: #{caser_forward.1} parent=0 // pred_fallthru
    _
  %v21 = vld [vmem:[%s0] sm:$0xff]
  %v22 = vld [vmem:[%s0 + $0x8] sm:$0xff]
  %v23 = vld [vmem:[%s0 + $0x10] sm:$0xff]
  %v24 = vld [vmem:[%s0 + $0x18] sm:$0xff]
  %v25 = vld [vmem:[%s0 + $0x20] sm:$0xff]
  %v26 = vld [vmem:[%s0 + $0x28] sm:$0xff]
  %v27 = vld [vmem:[%s0 + $0x30] sm:$0xff]
  %v28 = vld [vmem:[%s0 + $0x38] sm:$0xff]
  %v29 = vld [vmem:[%s0 + $0x40] sm:$0xff]
  %v30 = vld [vmem:[%s0 + $0x48] sm:$0xff]
  %v31 = vld [vmem:[%s0 + $0x50] sm:$0xff]
  %v32 = vld [vmem:[%s0 + $0x58] sm:$0xff]
  %v33 = vld [vmem:[%s0 + $0x60] sm:$0xff]
  %v34 = vld [vmem:[%s0 + $0x68] sm:$0xff]
  %v35 = vld [vmem:[%s0 + $0x70] sm:$0xff]
  %v36 = vld [vmem:[%s0 + $0x78] sm:$0xff]
  %v37 = vld [vmem:[%s0 + $0x80] sm:$0xff]
  %v38 = vld [vmem:[%s0 + $0x88] sm:$0xff]
  %v39 = vld [vmem:[%s0 + $0x90] sm:$0xff]
  %v40 = vld [vmem:[%s0 + $0x98] sm:$0xff]
  %v41 = vld [vmem:[%s0 + $0xa0] sm:$0xff]
  %v42 = vld [vmem:[%s0 + $0xa8] sm:$0xff]
  %v43 = vld [vmem:[%s0 + $0xb0] sm:$0xff]
  %v44 = vld [vmem:[%s0 + $0xb8] sm:$0xff]
  %v45 = vld [vmem:[%s0 + $0xc0] sm:$0xff]
  %v46 = vld [vmem:[%s0 + $0xc8] sm:$0xff]
  %v47 = vld [vmem:[%s0 + $0xd0] sm:$0xff]
  %v48 = vld [vmem:[%s0 + $0xd8] sm:$0xff]
  %v49 = vld [vmem:[%s0 + $0xe0] sm:$0xff]
  %v50 = vld [vmem:[%s0 + $0xe8] sm:$0xff]
  %v51 = vld [vmem:[%s0 + $0xf0] sm:$0xff]
  %v52 = vld [vmem:[%s0 + $0xf8] sm:$0xff]
  %v53 = vld [vmem:[%s0 + $0x100] sm:$0xff]
  %v54 = vld [vmem:[%s0 + $0x108] sm:$0xff]
  %v55 = vld [vmem:[%s0 + $0x110] sm:$0xff]
  %v56 = vld [vmem:[%s0 + $0x118] sm:$0xff]
  %v57 = vld [vmem:[%s0 + $0x120] sm:$0xff]
  %v58 = vld [vmem:[%s0 + $0x128] sm:$0xff]
  %v59 = vld [vmem:[%s0 + $0x130] sm:$0xff]
  %v60 = vld [vmem:[%s0 + $0x138] sm:$0xff]
  %v61 = vld [vmem:[%s0 + $0x140] sm:$0xff]
  %v62 = vld [vmem:[%s0 + $0x148] sm:$0xff]
  %v63 = vld [vmem:[%s0 + $0x150] sm:$0xff]
  %v64 = vld [vmem:[%s0 + $0x158] sm:$0xff]
  %v65 = vld [vmem:[%s0 + $0x160] sm:$0xff]
  %v66 = vld [vmem:[%s0 + $0x168] sm:$0xff]
  %v67 = vld [vmem:[%s0 + $0x170] sm:$0xff]
  %v68 = vld [vmem:[%s0 + $0x178] sm:$0xff]
  %v69 = vld [vmem:[%s0 + $0x180] sm:$0xff]
  %v70 = vld [vmem:[%s0 + $0x188] sm:$0xff]
  %v71 = vld [vmem:[%s0 + $0x190] sm:$0xff]
  %v72 = vld [vmem:[%s0 + $0x198] sm:$0xff]
  %v73 = vld [vmem:[%s0 + $0x1a0] sm:$0xff]
  %v74 = vld [vmem:[%s0 + $0x1a8] sm:$0xff]
  %v75 = vld [vmem:[%s0 + $0x1b0] sm:$0xff]
  %v76 = vld [vmem:[%s0 + $0x1b8] sm:$0xff]
  %v77 = vld [vmem:[%s0 + $0x1c0] sm:$0xff]
  %v78 = vld [vmem:[%s0 + $0x1c8] sm:$0xff]
  %v79 = vld [vmem:[%s0 + $0x1d0] sm:$0xff]
  %v80 = vld [vmem:[%s0 + $0x1d8] sm:$0xff]
  %v81 = vld [vmem:[%s0 + $0x1e0] sm:$0xff]
  %v82 = vld [vmem:[%s0 + $0x1e8] sm:$0xff]
  %v83 = vld [vmem:[%s0 + $0x1f0] sm:$0xff]
  %v84 = vld [vmem:[%s0 + $0x1f8] sm:$0xff]
  %v85 = vld [vmem:[%s1] sm:$0xf]
  %v86 = vld [vmem:[%s1 + $0x4] sm:$0xf]
  %v87 = vld [vmem:[%s1 + $0x8] sm:$0xf]
  %v88 = vld [vmem:[%s1 + $0xc] sm:$0xf]
  %v89 = vld [vmem:[%s1 + $0x10] sm:$0xf]
  %v90 = vld [vmem:[%s1 + $0x14] sm:$0xf]
  %v91 = vld [vmem:[%s1 + $0x18] sm:$0xf]
  %v92 = vld [vmem:[%s1 + $0x1c] sm:$0xf]
  %v93 = vld [vmem:[%s1 + $0x20] sm:$0xf]
  %v94 = vld [vmem:[%s1 + $0x24] sm:$0xf]
  %v95 = vld [vmem:[%s1 + $0x28] sm:$0xf]
  %v96 = vld [vmem:[%s1 + $0x2c] sm:$0xf]
  %v97 = vld [vmem:[%s1 + $0x30] sm:$0xf]
  %v98 = vld [vmem:[%s1 + $0x34] sm:$0xf]
  %v99 = vld [vmem:[%s1 + $0x38] sm:$0xf]
  %v100 = vld [vmem:[%s1 + $0x3c] sm:$0xf]
  %v101 = vld [vmem:[%s1 + $0x40] sm:$0xf]
  %v102 = vld [vmem:[%s1 + $0x44] sm:$0xf]
  %v103 = vld [vmem:[%s1 + $0x48] sm:$0xf]
  %v104 = vld [vmem:[%s1 + $0x4c] sm:$0xf]
  %v105 = vld [vmem:[%s1 + $0x50] sm:$0xf]
  %v106 = vld [vmem:[%s1 + $0x54] sm:$0xf]
  %v107 = vld [vmem:[%s1 + $0x58] sm:$0xf]
  %v108 = vld [vmem:[%s1 + $0x5c] sm:$0xf]
  %v109 = vld [vmem:[%s1 + $0x60] sm:$0xf]
  %v110 = vld [vmem:[%s1 + $0x64] sm:$0xf]
  %v111 = vld [vmem:[%s1 + $0x68] sm:$0xf]
  %v112 = vld [vmem:[%s1 + $0x6c] sm:$0xf]
  %v113 = vld [vmem:[%s1 + $0x70] sm:$0xf]
  %v114 = vld [vmem:[%s1 + $0x74] sm:$0xf]
  %v115 = vld [vmem:[%s1 + $0x78] sm:$0xf]
  %v116 = vld [vmem:[%s1 + $0x7c] sm:$0xf]
  %v181 = vunpack.c.l.b16 %v21
  %v182 = vunpack.c.h.b16 %v21
  %v183 = vunpack.c.l.b16 %v22
  %v184 = vunpack.c.h.b16 %v22
  %v185 = vunpack.c.l.b16 %v23
  %v186 = vunpack.c.h.b16 %v23
  %v187 = vunpack.c.l.b16 %v24
  %v188 = vunpack.c.h.b16 %v24
  %v189 = vunpack.c.l.b16 %v25
  %v190 = vunpack.c.h.b16 %v25
  %v191 = vunpack.c.l.b16 %v26
  %v192 = vunpack.c.h.b16 %v26
  %v193 = vunpack.c.l.b16 %v27
  %v194 = vunpack.c.h.b16 %v27
  %v195 = vunpack.c.l.b16 %v28
  %v196 = vunpack.c.h.b16 %v28
  %v197 = vunpack.c.l.b16 %v29
  %v198 = vunpack.c.h.b16 %v29
  %v199 = vunpack.c.l.b16 %v30
  %v200 = vunpack.c.h.b16 %v30
  %v201 = vunpack.c.l.b16 %v31
  %v202 = vunpack.c.h.b16 %v31
  %v203 = vunpack.c.l.b16 %v32
  %v204 = vunpack.c.h.b16 %v32
  %v205 = vunpack.c.l.b16 %v33
  %v206 = vunpack.c.h.b16 %v33
  %v207 = vunpack.c.l.b16 %v34
  %v208 = vunpack.c.h.b16 %v34
  %v209 = vunpack.c.l.b16 %v35
  %v210 = vunpack.c.h.b16 %v35
  %v211 = vunpack.c.l.b16 %v36
  %v212 = vunpack.c.h.b16 %v36
  %v213 = vunpack.c.l.b16 %v37
  %v214 = vunpack.c.h.b16 %v37
  %v215 = vunpack.c.l.b16 %v38
  %v216 = vunpack.c.h.b16 %v38
  %v217 = vunpack.c.l.b16 %v39
  %v218 = vunpack.c.h.b16 %v39
  %v219 = vunpack.c.l.b16 %v40
  %v220 = vunpack.c.h.b16 %v40
  %v221 = vunpack.c.l.b16 %v41
  %v222 = vunpack.c.h.b16 %v41
  %v223 = vunpack.c.l.b16 %v42
  %v224 = vunpack.c.h.b16 %v42
  %v225 = vunpack.c.l.b16 %v43
  %v226 = vunpack.c.h.b16 %v43
  %v227 = vunpack.c.l.b16 %v44
  %v228 = vunpack.c.h.b16 %v44
  %v229 = vunpack.c.l.b16 %v45
  %v230 = vunpack.c.h.b16 %v45
  %v231 = vunpack.c.l.b16 %v46
  %v232 = vunpack.c.h.b16 %v46
  %v233 = vunpack.c.l.b16 %v47
  %v234 = vunpack.c.h.b16 %v47
  %v235 = vunpack.c.l.b16 %v48
  %v236 = vunpack.c.h.b16 %v48
  %v237 = vunpack.c.l.b16 %v49
  %v238 = vunpack.c.h.b16 %v49
  %v239 = vunpack.c.l.b16 %v50
  %v240 = vunpack.c.h.b16 %v50
  %v241 = vunpack.c.l.b16 %v51
  %v242 = vunpack.c.h.b16 %v51
  %v243 = vunpack.c.l.b16 %v52
  %v244 = vunpack.c.h.b16 %v52
  %v245 = vunpack.c.l.b16 %v53
  %v246 = vunpack.c.h.b16 %v53
  %v247 = vunpack.c.l.b16 %v54
  %v248 = vunpack.c.h.b16 %v54
  %v249 = vunpack.c.l.b16 %v55
  %v250 = vunpack.c.h.b16 %v55
  %v251 = vunpack.c.l.b16 %v56
  %v252 = vunpack.c.h.b16 %v56
  %v253 = vunpack.c.l.b16 %v57
  %v254 = vunpack.c.h.b16 %v57
  %v255 = vunpack.c.l.b16 %v58
  %v256 = vunpack.c.h.b16 %v58
  %v257 = vunpack.c.l.b16 %v59
  %v258 = vunpack.c.h.b16 %v59
  %v259 = vunpack.c.l.b16 %v60
  %v260 = vunpack.c.h.b16 %v60
  %v261 = vunpack.c.l.b16 %v61
  %v262 = vunpack.c.h.b16 %v61
  %v263 = vunpack.c.l.b16 %v62
  %v264 = vunpack.c.h.b16 %v62
  %v265 = vunpack.c.l.b16 %v63
  %v266 = vunpack.c.h.b16 %v63
  %v267 = vunpack.c.l.b16 %v64
  %v268 = vunpack.c.h.b16 %v64
  %v269 = vunpack.c.l.b16 %v65
  %v270 = vunpack.c.h.b16 %v65
  %v271 = vunpack.c.l.b16 %v66
  %v272 = vunpack.c.h.b16 %v66
  %v273 = vunpack.c.l.b16 %v67
  %v274 = vunpack.c.h.b16 %v67
  %v275 = vunpack.c.l.b16 %v68
  %v276 = vunpack.c.h.b16 %v68
  %v277 = vunpack.c.l.b16 %v69
  %v278 = vunpack.c.h.b16 %v69
  %v279 = vunpack.c.l.b16 %v70
  %v280 = vunpack.c.h.b16 %v70
  %v281 = vunpack.c.l.b16 %v71
  %v282 = vunpack.c.h.b16 %v71
  %v283 = vunpack.c.l.b16 %v72
  %v284 = vunpack.c.h.b16 %v72
  %v285 = vunpack.c.l.b16 %v73
  %v286 = vunpack.c.h.b16 %v73
  %v287 = vunpack.c.l.b16 %v74
  %v288 = vunpack.c.h.b16 %v74
  %v289 = vunpack.c.l.b16 %v75
  %v290 = vunpack.c.h.b16 %v75
  %v291 = vunpack.c.l.b16 %v76
  %v292 = vunpack.c.h.b16 %v76
  %v293 = vunpack.c.l.b16 %v77
  %v294 = vunpack.c.h.b16 %v77
  %v295 = vunpack.c.l.b16 %v78
  %v296 = vunpack.c.h.b16 %v78
  %v297 = vunpack.c.l.b16 %v79
  %v298 = vunpack.c.h.b16 %v79
  %v299 = vunpack.c.l.b16 %v80
  %v300 = vunpack.c.h.b16 %v80
  %v301 = vunpack.c.l.b16 %v81
  %v302 = vunpack.c.h.b16 %v81
  %v303 = vunpack.c.l.b16 %v82
  %v304 = vunpack.c.h.b16 %v82
  %v305 = vunpack.c.l.b16 %v83
  %v306 = vunpack.c.h.b16 %v83
  %v307 = vunpack.c.l.b16 %v84
  %v308 = vunpack.c.h.b16 %v84
  %v309 = vpack.c.b16 %v183, %v181
  %v310 = vpack.c.b16 %v184, %v182
  %v311 = vpack.c.b16 %v187, %v185
  %v312 = vpack.c.b16 %v188, %v186
  %v313 = vpack.c.b16 %v191, %v189
  %v314 = vpack.c.b16 %v192, %v190
  %v315 = vpack.c.b16 %v195, %v193
  %v316 = vpack.c.b16 %v196, %v194
  %v317 = vpack.c.b16 %v199, %v197
  %v318 = vpack.c.b16 %v200, %v198
  %v319 = vpack.c.b16 %v203, %v201
  %v320 = vpack.c.b16 %v204, %v202
  %v321 = vpack.c.b16 %v207, %v205
  %v322 = vpack.c.b16 %v208, %v206
  %v323 = vpack.c.b16 %v211, %v209
  %v324 = vpack.c.b16 %v212, %v210
  %v325 = vpack.c.b16 %v215, %v213
  %v326 = vpack.c.b16 %v216, %v214
  %v327 = vpack.c.b16 %v219, %v217
  %v328 = vpack.c.b16 %v220, %v218
  %v329 = vpack.c.b16 %v223, %v221
  %v330 = vpack.c.b16 %v224, %v222
  %v331 = vpack.c.b16 %v227, %v225
  %v332 = vpack.c.b16 %v228, %v226
  %v333 = vpack.c.b16 %v231, %v229
  %v334 = vpack.c.b16 %v232, %v230
  %v335 = vpack.c.b16 %v235, %v233
  %v336 = vpack.c.b16 %v236, %v234
  %v337 = vpack.c.b16 %v239, %v237
  %v338 = vpack.c.b16 %v240, %v238
  %v339 = vpack.c.b16 %v243, %v241
  %v340 = vpack.c.b16 %v244, %v242
  %v341 = vpack.c.b16 %v247, %v245
  %v342 = vpack.c.b16 %v248, %v246
  %v343 = vpack.c.b16 %v251, %v249
  %v344 = vpack.c.b16 %v252, %v250
  %v345 = vpack.c.b16 %v255, %v253
  %v346 = vpack.c.b16 %v256, %v254
  %v347 = vpack.c.b16 %v259, %v257
  %v348 = vpack.c.b16 %v260, %v258
  %v349 = vpack.c.b16 %v263, %v261
  %v350 = vpack.c.b16 %v264, %v262
  %v351 = vpack.c.b16 %v267, %v265
  %v352 = vpack.c.b16 %v268, %v266
  %v353 = vpack.c.b16 %v271, %v269
  %v354 = vpack.c.b16 %v272, %v270
  %v355 = vpack.c.b16 %v275, %v273
  %v356 = vpack.c.b16 %v276, %v274
  %v357 = vpack.c.b16 %v279, %v277
  %v358 = vpack.c.b16 %v280, %v278
  %v359 = vpack.c.b16 %v283, %v281
  %v360 = vpack.c.b16 %v284, %v282
  %v361 = vpack.c.b16 %v287, %v285
  %v362 = vpack.c.b16 %v288, %v286
  %v363 = vpack.c.b16 %v291, %v289
  %v364 = vpack.c.b16 %v292, %v290
  %v365 = vpack.c.b16 %v295, %v293
  %v366 = vpack.c.b16 %v296, %v294
  %v367 = vpack.c.b16 %v299, %v297
  %v368 = vpack.c.b16 %v300, %v298
  %v369 = vpack.c.b16 %v303, %v301
  %v370 = vpack.c.b16 %v304, %v302
  %v371 = vpack.c.b16 %v307, %v305
  %v372 = vpack.c.b16 %v308, %v306
  %v469 = vunpack.c.l.b16 %v85
  %v470 = vunpack.c.l.b16 %v86
  %v471 = vunpack.c.l.b16 %v87
  %v472 = vunpack.c.l.b16 %v88
  %v473 = vunpack.c.l.b16 %v89
  %v474 = vunpack.c.l.b16 %v90
  %v475 = vunpack.c.l.b16 %v91
  %v476 = vunpack.c.l.b16 %v92
  %v477 = vunpack.c.l.b16 %v93
  %v478 = vunpack.c.l.b16 %v94
  %v479 = vunpack.c.l.b16 %v95
  %v480 = vunpack.c.l.b16 %v96
  %v481 = vunpack.c.l.b16 %v97
  %v482 = vunpack.c.l.b16 %v98
  %v483 = vunpack.c.l.b16 %v99
  %v484 = vunpack.c.l.b16 %v100
  %v485 = vunpack.c.l.b16 %v101
  %v486 = vunpack.c.l.b16 %v102
  %v487 = vunpack.c.l.b16 %v103
  %v488 = vunpack.c.l.b16 %v104
  %v489 = vunpack.c.l.b16 %v105
  %v490 = vunpack.c.l.b16 %v106
  %v491 = vunpack.c.l.b16 %v107
  %v492 = vunpack.c.l.b16 %v108
  %v493 = vunpack.c.l.b16 %v109
  %v494 = vunpack.c.l.b16 %v110
  %v495 = vunpack.c.l.b16 %v111
  %v496 = vunpack.c.l.b16 %v112
  %v497 = vunpack.c.l.b16 %v113
  %v498 = vunpack.c.l.b16 %v114
  %v499 = vunpack.c.l.b16 %v115
  %v500 = vunpack.c.l.b16 %v116
  %v501 = vpack.c.b16 %v470, %v469
  %v502 = vpack.c.b16 %v472, %v471
  %v503 = vpack.c.b16 %v474, %v473
  %v504 = vpack.c.b16 %v476, %v475
  %v505 = vpack.c.b16 %v478, %v477
  %v506 = vpack.c.b16 %v480, %v479
  %v507 = vpack.c.b16 %v482, %v481
  %v508 = vpack.c.b16 %v484, %v483
  %v509 = vpack.c.b16 %v486, %v485
  %v510 = vpack.c.b16 %v488, %v487
  %v511 = vpack.c.b16 %v490, %v489
  %v512 = vpack.c.b16 %v492, %v491
  %v513 = vpack.c.b16 %v494, %v493
  %v514 = vpack.c.b16 %v496, %v495
  %v515 = vpack.c.b16 %v498, %v497
  %v516 = vpack.c.b16 %v500, %v499
  %533 = vmatprep.subr.bf16.mxu0 0
  %534 = vmatpush1.bf16.msra.mxu0 %v508
  %535 = vmatprep.subr.bf16.mxu0 0
  %536 = vmatpush1.bf16.msra.mxu0 %v507
  %537 = vmatprep.subr.bf16.mxu0 0
  %538 = vmatpush1.bf16.msra.mxu0 %v506
  %539 = vmatprep.subr.bf16.mxu0 0
  %540 = vmatpush1.bf16.msra.mxu0 %v505
  %541 = vmatprep.subr.bf16.mxu0 0
  %542 = vmatpush1.bf16.msra.mxu0 %v504
  %543 = vmatprep.subr.bf16.mxu0 0
  %544 = vmatpush1.bf16.msra.mxu0 %v503
  %545 = vmatprep.subr.bf16.mxu0 0
  %546 = vmatpush1.bf16.msra.mxu0 %v502
  %547 = vmatprep.subr.bf16.mxu0 0
  %548 = vmatpush1.bf16.msra.mxu0 %v501
  %549 = vmatprep.subr.bf16.mxu0 0
  %550 = vmatpush2.bf16.msra.mxu0 %v516
  %551 = vmatprep.subr.bf16.mxu0 0
  %552 = vmatpush2.bf16.msra.mxu0 %v515
  %553 = vmatprep.subr.bf16.mxu0 0
  %554 = vmatpush2.bf16.msra.mxu0 %v514
  %555 = vmatprep.subr.bf16.mxu0 0
  %556 = vmatpush2.bf16.msra.mxu0 %v513
  %557 = vmatprep.subr.bf16.mxu0 0
  %558 = vmatpush2.bf16.msra.mxu0 %v512
  %559 = vmatprep.subr.bf16.mxu0 0
  %560 = vmatpush2.bf16.msra.mxu0 %v511
  %561 = vmatprep.subr.bf16.mxu0 0
  %562 = vmatpush2.bf16.msra.mxu0 %v510
  %563 = vmatprep.subr.bf16.mxu0 0
  %564 = vmatpush2.bf16.msra.mxu0 %v509
  %565 = vmatprep.mubr.bf16.mxu0 %v310
  %566 = vmatmul.mubr.bf16.gmra.mxu0 %v309
  %v567 = vpop.f32.mrf.mxu0
  %v568 = vadd.f32 0.0, %v567
  %v569 = vpop.f32.mrf.mxu0
  %v570 = vpop.f32.mrf.mxu0
  %v571 = vadd.f32 0.0, %v570
  %v572 = vpop.f32.mrf.mxu0
  %573 = vmatprep.mubr.bf16.mxu0 %v312
  %574 = vmatmul.mubr.bf16.gmra.mxu0 %v311
  %v575 = vpop.f32.mrf.mxu0
  %v576 = vadd.f32 0.0, %v575
  %v577 = vpop.f32.mrf.mxu0
  %v578 = vpop.f32.mrf.mxu0
  %v579 = vadd.f32 0.0, %v578
  %v580 = vpop.f32.mrf.mxu0
  %581 = vmatprep.mubr.bf16.mxu0 %v314
  %582 = vmatmul.mubr.bf16.gmra.mxu0 %v313
  %v583 = vpop.f32.mrf.mxu0
  %v584 = vadd.f32 0.0, %v583
  %v585 = vpop.f32.mrf.mxu0
  %v586 = vpop.f32.mrf.mxu0
  %v587 = vadd.f32 0.0, %v586
  %v588 = vpop.f32.mrf.mxu0
  %589 = vmatprep.mubr.bf16.mxu0 %v316
  %590 = vmatmul.mubr.bf16.gmra.mxu0 %v315
  %v591 = vpop.f32.mrf.mxu0
  %v592 = vadd.f32 0.0, %v591
  %v593 = vpop.f32.mrf.mxu0
  %v594 = vpop.f32.mrf.mxu0
  %v595 = vadd.f32 0.0, %v594
  %v596 = vpop.f32.mrf.mxu0
  %597 = vmatprep.mubr.bf16.mxu0 %v318
  %598 = vmatmul.mubr.bf16.gmra.mxu0 %v317
  %v599 = vpop.f32.mrf.mxu0
  %v600 = vadd.f32 0.0, %v599
  %v601 = vpop.f32.mrf.mxu0
  %v602 = vpop.f32.mrf.mxu0
  %v603 = vadd.f32 0.0, %v602
  %v604 = vpop.f32.mrf.mxu0
  %605 = vmatprep.mubr.bf16.mxu0 %v320
  %606 = vmatmul.mubr.bf16.gmra.mxu0 %v319
  %v607 = vpop.f32.mrf.mxu0
  %v608 = vadd.f32 0.0, %v607
  %v609 = vpop.f32.mrf.mxu0
  %v610 = vpop.f32.mrf.mxu0
  %v611 = vadd.f32 0.0, %v610
  %v612 = vpop.f32.mrf.mxu0
  %613 = vmatprep.mubr.bf16.mxu0 %v322
  %614 = vmatmul.mubr.bf16.gmra.mxu0 %v321
  %v615 = vpop.f32.mrf.mxu0
  %v616 = vadd.f32 0.0, %v615
  %v617 = vpop.f32.mrf.mxu0
  %v618 = vpop.f32.mrf.mxu0
  %v619 = vadd.f32 0.0, %v618
  %v620 = vpop.f32.mrf.mxu0
  %621 = vmatprep.mubr.bf16.mxu0 %v324
  %622 = vmatmul.mubr.bf16.gmra.mxu0 %v323
  %v623 = vpop.f32.mrf.mxu0
  %v624 = vadd.f32 0.0, %v623
  %v625 = vpop.f32.mrf.mxu0
  %v626 = vpop.f32.mrf.mxu0
  %v627 = vadd.f32 0.0, %v626
  %v628 = vpop.f32.mrf.mxu0
  %629 = vmatprep.mubr.bf16.mxu0 %v326
  %630 = vmatmul.mubr.bf16.gmra.mxu0 %v325
  %v631 = vpop.f32.mrf.mxu0
  %v632 = vadd.f32 0.0, %v631
  %v633 = vpop.f32.mrf.mxu0
  %v634 = vpop.f32.mrf.mxu0
  %v635 = vadd.f32 0.0, %v634
  %v636 = vpop.f32.mrf.mxu0
  %637 = vmatprep.mubr.bf16.mxu0 %v328
  %638 = vmatmul.mubr.bf16.gmra.mxu0 %v327
  %v639 = vpop.f32.mrf.mxu0
  %v640 = vadd.f32 0.0, %v639
  %v641 = vpop.f32.mrf.mxu0
  %v642 = vpop.f32.mrf.mxu0
  %v643 = vadd.f32 0.0, %v642
  %v644 = vpop.f32.mrf.mxu0
  %645 = vmatprep.mubr.bf16.mxu0 %v330
  %646 = vmatmul.mubr.bf16.gmra.mxu0 %v329
  %v647 = vpop.f32.mrf.mxu0
  %v648 = vadd.f32 0.0, %v647
  %v649 = vpop.f32.mrf.mxu0
  %v650 = vpop.f32.mrf.mxu0
  %v651 = vadd.f32 0.0, %v650
  %v652 = vpop.f32.mrf.mxu0
  %653 = vmatprep.mubr.bf16.mxu0 %v332
  %654 = vmatmul.mubr.bf16.gmra.mxu0 %v331
  %v655 = vpop.f32.mrf.mxu0
  %v656 = vadd.f32 0.0, %v655
  %v657 = vpop.f32.mrf.mxu0
  %v658 = vpop.f32.mrf.mxu0
  %v659 = vadd.f32 0.0, %v658
  %v660 = vpop.f32.mrf.mxu0
  %661 = vmatprep.mubr.bf16.mxu0 %v334
  %662 = vmatmul.mubr.bf16.gmra.mxu0 %v333
  %v663 = vpop.f32.mrf.mxu0
  %v664 = vadd.f32 0.0, %v663
  %v665 = vpop.f32.mrf.mxu0
  %v666 = vpop.f32.mrf.mxu0
  %v667 = vadd.f32 0.0, %v666
  %v668 = vpop.f32.mrf.mxu0
  %669 = vmatprep.mubr.bf16.mxu0 %v336
  %670 = vmatmul.mubr.bf16.gmra.mxu0 %v335
  %v671 = vpop.f32.mrf.mxu0
  %v672 = vadd.f32 0.0, %v671
  %v673 = vpop.f32.mrf.mxu0
  %v674 = vpop.f32.mrf.mxu0
  %v675 = vadd.f32 0.0, %v674
  %v676 = vpop.f32.mrf.mxu0
  %677 = vmatprep.mubr.bf16.mxu0 %v338
  %678 = vmatmul.mubr.bf16.gmra.mxu0 %v337
  %v679 = vpop.f32.mrf.mxu0
  %v680 = vadd.f32 0.0, %v679
  %v681 = vpop.f32.mrf.mxu0
  %v682 = vpop.f32.mrf.mxu0
  %v683 = vadd.f32 0.0, %v682
  %v684 = vpop.f32.mrf.mxu0
  %685 = vmatprep.mubr.bf16.mxu0 %v340
  %686 = vmatmul.mubr.bf16.gmra.mxu0 %v339
  %v687 = vpop.f32.mrf.mxu0
  %v688 = vadd.f32 0.0, %v687
  %v689 = vpop.f32.mrf.mxu0
  %v690 = vpop.f32.mrf.mxu0
  %v691 = vadd.f32 0.0, %v690
  %v692 = vpop.f32.mrf.mxu0
  %693 = vmatprep.mubr.bf16.mxu0 %v342
  %694 = vmatmul.mubr.bf16.gmra.mxu0 %v341
  %v695 = vpop.f32.mrf.mxu0
  %v696 = vadd.f32 0.0, %v695
  %v697 = vpop.f32.mrf.mxu0
  %v698 = vpop.f32.mrf.mxu0
  %v699 = vadd.f32 0.0, %v698
  %v700 = vpop.f32.mrf.mxu0
  %701 = vmatprep.mubr.bf16.mxu0 %v344
  %702 = vmatmul.mubr.bf16.gmra.mxu0 %v343
  %v703 = vpop.f32.mrf.mxu0
  %v704 = vadd.f32 0.0, %v703
  %v705 = vpop.f32.mrf.mxu0
  %v706 = vpop.f32.mrf.mxu0
  %v707 = vadd.f32 0.0, %v706
  %v708 = vpop.f32.mrf.mxu0
  %709 = vmatprep.mubr.bf16.mxu0 %v346
  %710 = vmatmul.mubr.bf16.gmra.mxu0 %v345
  %v711 = vpop.f32.mrf.mxu0
  %v712 = vadd.f32 0.0, %v711
  %v713 = vpop.f32.mrf.mxu0
  %v714 = vpop.f32.mrf.mxu0
  %v715 = vadd.f32 0.0, %v714
  %v716 = vpop.f32.mrf.mxu0
  %717 = vmatprep.mubr.bf16.mxu0 %v348
  %718 = vmatmul.mubr.bf16.gmra.mxu0 %v347
  %v719 = vpop.f32.mrf.mxu0
  %v720 = vadd.f32 0.0, %v719
  %v721 = vpop.f32.mrf.mxu0
  %v722 = vpop.f32.mrf.mxu0
  %v723 = vadd.f32 0.0, %v722
  %v724 = vpop.f32.mrf.mxu0
  %725 = vmatprep.mubr.bf16.mxu0 %v350
  %726 = vmatmul.mubr.bf16.gmra.mxu0 %v349
  %v727 = vpop.f32.mrf.mxu0
  %v728 = vadd.f32 0.0, %v727
  %v729 = vpop.f32.mrf.mxu0
  %v730 = vpop.f32.mrf.mxu0
  %v731 = vadd.f32 0.0, %v730
  %v732 = vpop.f32.mrf.mxu0
  %733 = vmatprep.mubr.bf16.mxu0 %v352
  %734 = vmatmul.mubr.bf16.gmra.mxu0 %v351
  %v735 = vpop.f32.mrf.mxu0
  %v736 = vadd.f32 0.0, %v735
  %v737 = vpop.f32.mrf.mxu0
  %v738 = vpop.f32.mrf.mxu0
  %v739 = vadd.f32 0.0, %v738
  %v740 = vpop.f32.mrf.mxu0
  %741 = vmatprep.mubr.bf16.mxu0 %v354
  %742 = vmatmul.mubr.bf16.gmra.mxu0 %v353
  %v743 = vpop.f32.mrf.mxu0
  %v744 = vadd.f32 0.0, %v743
  %v745 = vpop.f32.mrf.mxu0
  %v746 = vpop.f32.mrf.mxu0
  %v747 = vadd.f32 0.0, %v746
  %v748 = vpop.f32.mrf.mxu0
  %749 = vmatprep.mubr.bf16.mxu0 %v356
  %750 = vmatmul.mubr.bf16.gmra.mxu0 %v355
  %v751 = vpop.f32.mrf.mxu0
  %v752 = vadd.f32 0.0, %v751
  %v753 = vpop.f32.mrf.mxu0
  %v754 = vpop.f32.mrf.mxu0
  %v755 = vadd.f32 0.0, %v754
  %v756 = vpop.f32.mrf.mxu0
  %757 = vmatprep.mubr.bf16.mxu0 %v358
  %758 = vmatmul.mubr.bf16.gmra.mxu0 %v357
  %v759 = vpop.f32.mrf.mxu0
  %v760 = vadd.f32 0.0, %v759
  %v761 = vpop.f32.mrf.mxu0
  %v762 = vpop.f32.mrf.mxu0
  %v763 = vadd.f32 0.0, %v762
  %v764 = vpop.f32.mrf.mxu0
  %765 = vmatprep.mubr.bf16.mxu0 %v360
  %766 = vmatmul.mubr.bf16.gmra.mxu0 %v359
  %v767 = vpop.f32.mrf.mxu0
  %v768 = vadd.f32 0.0, %v767
  %v769 = vpop.f32.mrf.mxu0
  %v770 = vpop.f32.mrf.mxu0
  %v771 = vadd.f32 0.0, %v770
  %v772 = vpop.f32.mrf.mxu0
  %773 = vmatprep.mubr.bf16.mxu0 %v362
  %774 = vmatmul.mubr.bf16.gmra.mxu0 %v361
  %v775 = vpop.f32.mrf.mxu0
  %v776 = vadd.f32 0.0, %v775
  %v777 = vpop.f32.mrf.mxu0
  %v778 = vpop.f32.mrf.mxu0
  %v779 = vadd.f32 0.0, %v778
  %v780 = vpop.f32.mrf.mxu0
  %781 = vmatprep.mubr.bf16.mxu0 %v364
  %782 = vmatmul.mubr.bf16.gmra.mxu0 %v363
  %v783 = vpop.f32.mrf.mxu0
  %v784 = vadd.f32 0.0, %v783
  %v785 = vpop.f32.mrf.mxu0
  %v786 = vpop.f32.mrf.mxu0
  %v787 = vadd.f32 0.0, %v786
  %v788 = vpop.f32.mrf.mxu0
  %789 = vmatprep.mubr.bf16.mxu0 %v366
  %790 = vmatmul.mubr.bf16.gmra.mxu0 %v365
  %v791 = vpop.f32.mrf.mxu0
  %v792 = vadd.f32 0.0, %v791
  %v793 = vpop.f32.mrf.mxu0
  %v794 = vpop.f32.mrf.mxu0
  %v795 = vadd.f32 0.0, %v794
  %v796 = vpop.f32.mrf.mxu0
  %797 = vmatprep.mubr.bf16.mxu0 %v368
  %798 = vmatmul.mubr.bf16.gmra.mxu0 %v367
  %v799 = vpop.f32.mrf.mxu0
  %v800 = vadd.f32 0.0, %v799
  %v801 = vpop.f32.mrf.mxu0
  %v802 = vpop.f32.mrf.mxu0
  %v803 = vadd.f32 0.0, %v802
  %v804 = vpop.f32.mrf.mxu0
  %805 = vmatprep.mubr.bf16.mxu0 %v370
  %806 = vmatmul.mubr.bf16.gmra.mxu0 %v369
  %v807 = vpop.f32.mrf.mxu0
  %v808 = vadd.f32 0.0, %v807
  %v809 = vpop.f32.mrf.mxu0
  %v810 = vpop.f32.mrf.mxu0
  %v811 = vadd.f32 0.0, %v810
  %v812 = vpop.f32.mrf.mxu0
  %813 = vmatprep.mubr.bf16.mxu0 %v372
  %814 = vmatmul.mubr.bf16.gmra.mxu0 %v371
  %v815 = vpop.f32.mrf.mxu0
  %v816 = vadd.f32 0.0, %v815
  %v817 = vpop.f32.mrf.mxu0
  %v818 = vpop.f32.mrf.mxu0
  %v819 = vadd.f32 0.0, %v818
  %v820 = vpop.f32.mrf.mxu0
  %821 = vdwg.mxu0
  %v822 = vld [vmem:[%s2] sm:$0xff]
  %v823 = vld [vmem:[%s2 + $0x8] sm:$0xff]
  %v824 = vld [vmem:[%s2 + $0x10] sm:$0xff]
  %v825 = vld [vmem:[%s2 + $0x18] sm:$0xff]
  %v826 = vld [vmem:[%s2 + $0x20] sm:$0xff]
  %v827 = vld [vmem:[%s2 + $0x28] sm:$0xff]
  %v828 = vld [vmem:[%s2 + $0x30] sm:$0xff]
  %v829 = vld [vmem:[%s2 + $0x38] sm:$0xff]
  %v830 = vld [vmem:[%s2 + $0x40] sm:$0xff]
  %v831 = vld [vmem:[%s2 + $0x48] sm:$0xff]
  %v832 = vld [vmem:[%s2 + $0x50] sm:$0xff]
  %v833 = vld [vmem:[%s2 + $0x58] sm:$0xff]
  %v834 = vld [vmem:[%s2 + $0x60] sm:$0xff]
  %v835 = vld [vmem:[%s2 + $0x68] sm:$0xff]
  %v836 = vld [vmem:[%s2 + $0x70] sm:$0xff]
  %v837 = vld [vmem:[%s2 + $0x78] sm:$0xff]
  %v838 = vld [vmem:[%s2 + $0x80] sm:$0xff]
  %v839 = vld [vmem:[%s2 + $0x88] sm:$0xff]
  %v840 = vld [vmem:[%s2 + $0x90] sm:$0xff]
  %v841 = vld [vmem:[%s2 + $0x98] sm:$0xff]
  %v842 = vld [vmem:[%s2 + $0xa0] sm:$0xff]
  %v843 = vld [vmem:[%s2 + $0xa8] sm:$0xff]
  %v844 = vld [vmem:[%s2 + $0xb0] sm:$0xff]
  %v845 = vld [vmem:[%s2 + $0xb8] sm:$0xff]
  %v846 = vld [vmem:[%s2 + $0xc0] sm:$0xff]
  %v847 = vld [vmem:[%s2 + $0xc8] sm:$0xff]
  %v848 = vld [vmem:[%s2 + $0xd0] sm:$0xff]
  %v849 = vld [vmem:[%s2 + $0xd8] sm:$0xff]
  %v850 = vld [vmem:[%s2 + $0xe0] sm:$0xff]
  %v851 = vld [vmem:[%s2 + $0xe8] sm:$0xff]
  %v852 = vld [vmem:[%s2 + $0xf0] sm:$0xff]
  %v853 = vld [vmem:[%s2 + $0xf8] sm:$0xff]
  %v854 = vld [vmem:[%s2 + $0x100] sm:$0xff]
  %v855 = vld [vmem:[%s2 + $0x108] sm:$0xff]
  %v856 = vld [vmem:[%s2 + $0x110] sm:$0xff]
  %v857 = vld [vmem:[%s2 + $0x118] sm:$0xff]
  %v858 = vld [vmem:[%s2 + $0x120] sm:$0xff]
  %v859 = vld [vmem:[%s2 + $0x128] sm:$0xff]
  %v860 = vld [vmem:[%s2 + $0x130] sm:$0xff]
  %v861 = vld [vmem:[%s2 + $0x138] sm:$0xff]
  %v862 = vld [vmem:[%s2 + $0x140] sm:$0xff]
  %v863 = vld [vmem:[%s2 + $0x148] sm:$0xff]
  %v864 = vld [vmem:[%s2 + $0x150] sm:$0xff]
  %v865 = vld [vmem:[%s2 + $0x158] sm:$0xff]
  %v866 = vld [vmem:[%s2 + $0x160] sm:$0xff]
  %v867 = vld [vmem:[%s2 + $0x168] sm:$0xff]
  %v868 = vld [vmem:[%s2 + $0x170] sm:$0xff]
  %v869 = vld [vmem:[%s2 + $0x178] sm:$0xff]
  %v870 = vld [vmem:[%s2 + $0x180] sm:$0xff]
  %v871 = vld [vmem:[%s2 + $0x188] sm:$0xff]
  %v872 = vld [vmem:[%s2 + $0x190] sm:$0xff]
  %v873 = vld [vmem:[%s2 + $0x198] sm:$0xff]
  %v874 = vld [vmem:[%s2 + $0x1a0] sm:$0xff]
  %v875 = vld [vmem:[%s2 + $0x1a8] sm:$0xff]
  %v876 = vld [vmem:[%s2 + $0x1b0] sm:$0xff]
  %v877 = vld [vmem:[%s2 + $0x1b8] sm:$0xff]
  %v878 = vld [vmem:[%s2 + $0x1c0] sm:$0xff]
  %v879 = vld [vmem:[%s2 + $0x1c8] sm:$0xff]
  %v880 = vld [vmem:[%s2 + $0x1d0] sm:$0xff]
  %v881 = vld [vmem:[%s2 + $0x1d8] sm:$0xff]
  %v882 = vld [vmem:[%s2 + $0x1e0] sm:$0xff]
  %v883 = vld [vmem:[%s2 + $0x1e8] sm:$0xff]
  %v884 = vld [vmem:[%s2 + $0x1f0] sm:$0xff]
  %v885 = vld [vmem:[%s2 + $0x1f8] sm:$0xff]
  %v886 = vld [vmem:[%s2 + $0x200] sm:$0xff]
  %v887 = vld [vmem:[%s2 + $0x208] sm:$0xff]
  %v888 = vld [vmem:[%s2 + $0x210] sm:$0xff]
  %v889 = vld [vmem:[%s2 + $0x218] sm:$0xff]
  %v890 = vld [vmem:[%s2 + $0x220] sm:$0xff]
  %v891 = vadd.f32 %v568, %v822
  %v892 = vadd.f32 %v571, %v823
  %v893 = vadd.f32 %v576, %v824
  %v894 = vadd.f32 %v579, %v825
  %v895 = vadd.f32 %v584, %v826
  %v896 = vadd.f32 %v587, %v827
  %v897 = vadd.f32 %v592, %v828
  %v898 = vadd.f32 %v595, %v829
  %v899 = vadd.f32 %v600, %v830
  %v900 = vadd.f32 %v603, %v831
  %v901 = vadd.f32 %v608, %v832
  %v902 = vadd.f32 %v611, %v833
  %v903 = vadd.f32 %v616, %v834
  %v904 = vadd.f32 %v619, %v835
  %v905 = vadd.f32 %v624, %v836
  %v906 = vadd.f32 %v627, %v837
  %v907 = vadd.f32 %v632, %v838
  %v908 = vadd.f32 %v635, %v839
  %v909 = vadd.f32 %v640, %v840
  %v910 = vadd.f32 %v643, %v841
  %v911 = vadd.f32 %v648, %v842
  %v912 = vadd.f32 %v651, %v843
  %v913 = vadd.f32 %v656, %v844
  %v914 = vadd.f32 %v659, %v845
  %v915 = vadd.f32 %v664, %v846
  %v916 = vadd.f32 %v667, %v847
  %v917 = vadd.f32 %v672, %v848
  %v918 = vadd.f32 %v675, %v849
  %v919 = vadd.f32 %v680, %v850
  %v920 = vadd.f32 %v683, %v851
  %v921 = vadd.f32 %v688, %v852
  %v922 = vadd.f32 %v691, %v853
  %v923 = vadd.f32 %v696, %v854
  %v924 = vadd.f32 %v699, %v855
  %v925 = vadd.f32 %v704, %v856
  %v926 = vadd.f32 %v707, %v857
  %v927 = vadd.f32 %v712, %v858
  %v928 = vadd.f32 %v715, %v859
  %v929 = vadd.f32 %v720, %v860
  %v930 = vadd.f32 %v723, %v861
  %v931 = vadd.f32 %v728, %v862
  %v932 = vadd.f32 %v731, %v863
  %v933 = vadd.f32 %v736, %v864
  %v934 = vadd.f32 %v739, %v865
  %v935 = vadd.f32 %v744, %v866
  %v936 = vadd.f32 %v747, %v867
  %v937 = vadd.f32 %v752, %v868
  %v938 = vadd.f32 %v755, %v869
  %v939 = vadd.f32 %v760, %v870
  %v940 = vadd.f32 %v763, %v871
  %v941 = vadd.f32 %v768, %v872
  %v942 = vadd.f32 %v771, %v873
  %v943 = vadd.f32 %v776, %v874
  %v944 = vadd.f32 %v779, %v875
  %v945 = vadd.f32 %v784, %v876
  %v946 = vadd.f32 %v787, %v877
  %v947 = vadd.f32 %v792, %v878
  %v948 = vadd.f32 %v795, %v879
  %v949 = vadd.f32 %v800, %v880
  %v950 = vadd.f32 %v803, %v881
  %v951 = vadd.f32 %v808, %v882
  %v952 = vadd.f32 %v811, %v883
  %v953 = vadd.f32 %v816, %v884
  %v954 = vadd.f32 %v819, %v885
  %v955 = vmax.f32 %v891, 0.0
  %v956 = vmax.f32 %v892, 0.0
  %v957 = vmax.f32 %v893, 0.0
  %v958 = vmax.f32 %v894, 0.0
  %v959 = vmax.f32 %v895, 0.0
  %v960 = vmax.f32 %v896, 0.0
  %v961 = vmax.f32 %v897, 0.0
  %v962 = vmax.f32 %v898, 0.0
  %v963 = vmax.f32 %v899, 0.0
  %v964 = vmax.f32 %v900, 0.0
  %v965 = vmax.f32 %v901, 0.0
  %v966 = vmax.f32 %v902, 0.0
  %v967 = vmax.f32 %v903, 0.0
  %v968 = vmax.f32 %v904, 0.0
  %v969 = vmax.f32 %v905, 0.0
  %v970 = vmax.f32 %v906, 0.0
  %v971 = vmax.f32 %v907, 0.0
  %v972 = vmax.f32 %v908, 0.0
  %v973 = vmax.f32 %v909, 0.0
  %v974 = vmax.f32 %v910, 0.0
  %v975 = vmax.f32 %v911, 0.0
  %v976 = vmax.f32 %v912, 0.0
  %v977 = vmax.f32 %v913, 0.0
  %v978 = vmax.f32 %v914, 0.0
  %v979 = vmax.f32 %v915, 0.0
  %v980 = vmax.f32 %v916, 0.0
  %v981 = vmax.f32 %v917, 0.0
  %v982 = vmax.f32 %v918, 0.0
  %v983 = vmax.f32 %v919, 0.0
  %v984 = vmax.f32 %v920, 0.0
  %v985 = vmax.f32 %v921, 0.0
  %v986 = vmax.f32 %v922, 0.0
  %v987 = vmax.f32 %v923, 0.0
  %v988 = vmax.f32 %v924, 0.0
  %v989 = vmax.f32 %v925, 0.0
  %v990 = vmax.f32 %v926, 0.0
  %v991 = vmax.f32 %v927, 0.0
  %v992 = vmax.f32 %v928, 0.0
  %v993 = vmax.f32 %v929, 0.0
  %v994 = vmax.f32 %v930, 0.0
  %v995 = vmax.f32 %v931, 0.0
  %v996 = vmax.f32 %v932, 0.0
  %v997 = vmax.f32 %v933, 0.0
  %v998 = vmax.f32 %v934, 0.0
  %v999 = vmax.f32 %v935, 0.0
  %v1000 = vmax.f32 %v936, 0.0
  %v1001 = vmax.f32 %v937, 0.0
  %v1002 = vmax.f32 %v938, 0.0
  %v1003 = vmax.f32 %v939, 0.0
  %v1004 = vmax.f32 %v940, 0.0
  %v1005 = vmax.f32 %v941, 0.0
  %v1006 = vmax.f32 %v942, 0.0
  %v1007 = vmax.f32 %v943, 0.0
  %v1008 = vmax.f32 %v944, 0.0
  %v1009 = vmax.f32 %v945, 0.0
  %v1010 = vmax.f32 %v946, 0.0
  %v1011 = vmax.f32 %v947, 0.0
  %v1012 = vmax.f32 %v948, 0.0
  %v1013 = vmax.f32 %v949, 0.0
  %v1014 = vmax.f32 %v950, 0.0
  %v1015 = vmax.f32 %v951, 0.0
  %v1016 = vmax.f32 %v952, 0.0
  %v1017 = vmax.f32 %v953, 0.0
  %v1018 = vmax.f32 %v954, 0.0
  %vm1019 = vcmask 261120
  %v1020 = vsel %vm1019, %v955, -inf
  %v1021 = vrot.slane %v1020, 4
  %v1022 = vmax.f32 %v1020, %v1021
  %v1023 = vrot.slane %v1022, 2
  %v1024 = vmax.f32 %v1022, %v1023
  %v1025 = vrot.slane %v1024, 1
  %v1026 = vmax.f32 %v1024, %v1025
  %v1027 = vsel %vm1019, %v956, -inf
  %v1028 = vrot.slane %v1027, 4
  %v1029 = vmax.f32 %v1027, %v1028
  %v1030 = vrot.slane %v1029, 2
  %v1031 = vmax.f32 %v1029, %v1030
  %v1032 = vrot.slane %v1031, 1
  %v1033 = vmax.f32 %v1031, %v1032
  %v1034 = vsel %vm1019, %v957, -inf
  %v1035 = vrot.slane %v1034, 4
  %v1036 = vmax.f32 %v1034, %v1035
  %v1037 = vrot.slane %v1036, 2
  %v1038 = vmax.f32 %v1036, %v1037
  %v1039 = vrot.slane %v1038, 1
  %v1040 = vmax.f32 %v1038, %v1039
  %v1041 = vsel %vm1019, %v958, -inf
  %v1042 = vrot.slane %v1041, 4
  %v1043 = vmax.f32 %v1041, %v1042
  %v1044 = vrot.slane %v1043, 2
  %v1045 = vmax.f32 %v1043, %v1044
  %v1046 = vrot.slane %v1045, 1
  %v1047 = vmax.f32 %v1045, %v1046
  %v1048 = vsel %vm1019, %v959, -inf
  %v1049 = vrot.slane %v1048, 4
  %v1050 = vmax.f32 %v1048, %v1049
  %v1051 = vrot.slane %v1050, 2
  %v1052 = vmax.f32 %v1050, %v1051
  %v1053 = vrot.slane %v1052, 1
  %v1054 = vmax.f32 %v1052, %v1053
  %v1055 = vsel %vm1019, %v960, -inf
  %v1056 = vrot.slane %v1055, 4
  %v1057 = vmax.f32 %v1055, %v1056
  %v1058 = vrot.slane %v1057, 2
  %v1059 = vmax.f32 %v1057, %v1058
  %v1060 = vrot.slane %v1059, 1
  %v1061 = vmax.f32 %v1059, %v1060
  %v1062 = vsel %vm1019, %v961, -inf
  %v1063 = vrot.slane %v1062, 4
  %v1064 = vmax.f32 %v1062, %v1063
  %v1065 = vrot.slane %v1064, 2
  %v1066 = vmax.f32 %v1064, %v1065
  %v1067 = vrot.slane %v1066, 1
  %v1068 = vmax.f32 %v1066, %v1067
  %v1069 = vsel %vm1019, %v962, -inf
  %v1070 = vrot.slane %v1069, 4
  %v1071 = vmax.f32 %v1069, %v1070
  %v1072 = vrot.slane %v1071, 2
  %v1073 = vmax.f32 %v1071, %v1072
  %v1074 = vrot.slane %v1073, 1
  %v1075 = vmax.f32 %v1073, %v1074
  %v1076 = vsel %vm1019, %v963, -inf
  %v1077 = vrot.slane %v1076, 4
  %v1078 = vmax.f32 %v1076, %v1077
  %v1079 = vrot.slane %v1078, 2
  %v1080 = vmax.f32 %v1078, %v1079
  %v1081 = vrot.slane %v1080, 1
  %v1082 = vmax.f32 %v1080, %v1081
  %v1083 = vsel %vm1019, %v964, -inf
  %v1084 = vrot.slane %v1083, 4
  %v1085 = vmax.f32 %v1083, %v1084
  %v1086 = vrot.slane %v1085, 2
  %v1087 = vmax.f32 %v1085, %v1086
  %v1088 = vrot.slane %v1087, 1
  %v1089 = vmax.f32 %v1087, %v1088
  %v1090 = vsel %vm1019, %v965, -inf
  %v1091 = vrot.slane %v1090, 4
  %v1092 = vmax.f32 %v1090, %v1091
  %v1093 = vrot.slane %v1092, 2
  %v1094 = vmax.f32 %v1092, %v1093
  %v1095 = vrot.slane %v1094, 1
  %v1096 = vmax.f32 %v1094, %v1095
  %v1097 = vsel %vm1019, %v966, -inf
  %v1098 = vrot.slane %v1097, 4
  %v1099 = vmax.f32 %v1097, %v1098
  %v1100 = vrot.slane %v1099, 2
  %v1101 = vmax.f32 %v1099, %v1100
  %v1102 = vrot.slane %v1101, 1
  %v1103 = vmax.f32 %v1101, %v1102
  %v1104 = vsel %vm1019, %v967, -inf
  %v1105 = vrot.slane %v1104, 4
  %v1106 = vmax.f32 %v1104, %v1105
  %v1107 = vrot.slane %v1106, 2
  %v1108 = vmax.f32 %v1106, %v1107
  %v1109 = vrot.slane %v1108, 1
  %v1110 = vmax.f32 %v1108, %v1109
  %v1111 = vsel %vm1019, %v968, -inf
  %v1112 = vrot.slane %v1111, 4
  %v1113 = vmax.f32 %v1111, %v1112
  %v1114 = vrot.slane %v1113, 2
  %v1115 = vmax.f32 %v1113, %v1114
  %v1116 = vrot.slane %v1115, 1
  %v1117 = vmax.f32 %v1115, %v1116
  %v1118 = vsel %vm1019, %v969, -inf
  %v1119 = vrot.slane %v1118, 4
  %v1120 = vmax.f32 %v1118, %v1119
  %v1121 = vrot.slane %v1120, 2
  %v1122 = vmax.f32 %v1120, %v1121
  %v1123 = vrot.slane %v1122, 1
  %v1124 = vmax.f32 %v1122, %v1123
  %v1125 = vsel %vm1019, %v970, -inf
  %v1126 = vrot.slane %v1125, 4
  %v1127 = vmax.f32 %v1125, %v1126
  %v1128 = vrot.slane %v1127, 2
  %v1129 = vmax.f32 %v1127, %v1128
  %v1130 = vrot.slane %v1129, 1
  %v1131 = vmax.f32 %v1129, %v1130
  %v1132 = vsel %vm1019, %v971, -inf
  %v1133 = vrot.slane %v1132, 4
  %v1134 = vmax.f32 %v1132, %v1133
  %v1135 = vrot.slane %v1134, 2
  %v1136 = vmax.f32 %v1134, %v1135
  %v1137 = vrot.slane %v1136, 1
  %v1138 = vmax.f32 %v1136, %v1137
  %v1139 = vsel %vm1019, %v972, -inf
  %v1140 = vrot.slane %v1139, 4
  %v1141 = vmax.f32 %v1139, %v1140
  %v1142 = vrot.slane %v1141, 2
  %v1143 = vmax.f32 %v1141, %v1142
  %v1144 = vrot.slane %v1143, 1
  %v1145 = vmax.f32 %v1143, %v1144
  %v1146 = vsel %vm1019, %v973, -inf
  %v1147 = vrot.slane %v1146, 4
  %v1148 = vmax.f32 %v1146, %v1147
  %v1149 = vrot.slane %v1148, 2
  %v1150 = vmax.f32 %v1148, %v1149
  %v1151 = vrot.slane %v1150, 1
  %v1152 = vmax.f32 %v1150, %v1151
  %v1153 = vsel %vm1019, %v974, -inf
  %v1154 = vrot.slane %v1153, 4
  %v1155 = vmax.f32 %v1153, %v1154
  %v1156 = vrot.slane %v1155, 2
  %v1157 = vmax.f32 %v1155, %v1156
  %v1158 = vrot.slane %v1157, 1
  %v1159 = vmax.f32 %v1157, %v1158
  %v1160 = vsel %vm1019, %v975, -inf
  %v1161 = vrot.slane %v1160, 4
  %v1162 = vmax.f32 %v1160, %v1161
  %v1163 = vrot.slane %v1162, 2
  %v1164 = vmax.f32 %v1162, %v1163
  %v1165 = vrot.slane %v1164, 1
  %v1166 = vmax.f32 %v1164, %v1165
  %v1167 = vsel %vm1019, %v976, -inf
  %v1168 = vrot.slane %v1167, 4
  %v1169 = vmax.f32 %v1167, %v1168
  %v1170 = vrot.slane %v1169, 2
  %v1171 = vmax.f32 %v1169, %v1170
  %v1172 = vrot.slane %v1171, 1
  %v1173 = vmax.f32 %v1171, %v1172
  %v1174 = vsel %vm1019, %v977, -inf
  %v1175 = vrot.slane %v1174, 4
  %v1176 = vmax.f32 %v1174, %v1175
  %v1177 = vrot.slane %v1176, 2
  %v1178 = vmax.f32 %v1176, %v1177
  %v1179 = vrot.slane %v1178, 1
  %v1180 = vmax.f32 %v1178, %v1179
  %v1181 = vsel %vm1019, %v978, -inf
  %v1182 = vrot.slane %v1181, 4
  %v1183 = vmax.f32 %v1181, %v1182
  %v1184 = vrot.slane %v1183, 2
  %v1185 = vmax.f32 %v1183, %v1184
  %v1186 = vrot.slane %v1185, 1
  %v1187 = vmax.f32 %v1185, %v1186
  %v1188 = vsel %vm1019, %v979, -inf
  %v1189 = vrot.slane %v1188, 4
  %v1190 = vmax.f32 %v1188, %v1189
  %v1191 = vrot.slane %v1190, 2
  %v1192 = vmax.f32 %v1190, %v1191
  %v1193 = vrot.slane %v1192, 1
  %v1194 = vmax.f32 %v1192, %v1193
  %v1195 = vsel %vm1019, %v980, -inf
  %v1196 = vrot.slane %v1195, 4
  %v1197 = vmax.f32 %v1195, %v1196
  %v1198 = vrot.slane %v1197, 2
  %v1199 = vmax.f32 %v1197, %v1198
  %v1200 = vrot.slane %v1199, 1
  %v1201 = vmax.f32 %v1199, %v1200
  %v1202 = vsel %vm1019, %v981, -inf
  %v1203 = vrot.slane %v1202, 4
  %v1204 = vmax.f32 %v1202, %v1203
  %v1205 = vrot.slane %v1204, 2
  %v1206 = vmax.f32 %v1204, %v1205
  %v1207 = vrot.slane %v1206, 1
  %v1208 = vmax.f32 %v1206, %v1207
  %v1209 = vsel %vm1019, %v982, -inf
  %v1210 = vrot.slane %v1209, 4
  %v1211 = vmax.f32 %v1209, %v1210
  %v1212 = vrot.slane %v1211, 2
  %v1213 = vmax.f32 %v1211, %v1212
  %v1214 = vrot.slane %v1213, 1
  %v1215 = vmax.f32 %v1213, %v1214
  %v1216 = vsel %vm1019, %v983, -inf
  %v1217 = vrot.slane %v1216, 4
  %v1218 = vmax.f32 %v1216, %v1217
  %v1219 = vrot.slane %v1218, 2
  %v1220 = vmax.f32 %v1218, %v1219
  %v1221 = vrot.slane %v1220, 1
  %v1222 = vmax.f32 %v1220, %v1221
  %v1223 = vsel %vm1019, %v984, -inf
  %v1224 = vrot.slane %v1223, 4
  %v1225 = vmax.f32 %v1223, %v1224
  %v1226 = vrot.slane %v1225, 2
  %v1227 = vmax.f32 %v1225, %v1226
  %v1228 = vrot.slane %v1227, 1
  %v1229 = vmax.f32 %v1227, %v1228
  %v1230 = vsel %vm1019, %v985, -inf
  %v1231 = vrot.slane %v1230, 4
  %v1232 = vmax.f32 %v1230, %v1231
  %v1233 = vrot.slane %v1232, 2
  %v1234 = vmax.f32 %v1232, %v1233
  %v1235 = vrot.slane %v1234, 1
  %v1236 = vmax.f32 %v1234, %v1235
  %v1237 = vsel %vm1019, %v986, -inf
  %v1238 = vrot.slane %v1237, 4
  %v1239 = vmax.f32 %v1237, %v1238
  %v1240 = vrot.slane %v1239, 2
  %v1241 = vmax.f32 %v1239, %v1240
  %v1242 = vrot.slane %v1241, 1
  %v1243 = vmax.f32 %v1241, %v1242
  %v1244 = vsel %vm1019, %v987, -inf
  %v1245 = vrot.slane %v1244, 4
  %v1246 = vmax.f32 %v1244, %v1245
  %v1247 = vrot.slane %v1246, 2
  %v1248 = vmax.f32 %v1246, %v1247
  %v1249 = vrot.slane %v1248, 1
  %v1250 = vmax.f32 %v1248, %v1249
  %v1251 = vsel %vm1019, %v988, -inf
  %v1252 = vrot.slane %v1251, 4
  %v1253 = vmax.f32 %v1251, %v1252
  %v1254 = vrot.slane %v1253, 2
  %v1255 = vmax.f32 %v1253, %v1254
  %v1256 = vrot.slane %v1255, 1
  %v1257 = vmax.f32 %v1255, %v1256
  %v1258 = vsel %vm1019, %v989, -inf
  %v1259 = vrot.slane %v1258, 4
  %v1260 = vmax.f32 %v1258, %v1259
  %v1261 = vrot.slane %v1260, 2
  %v1262 = vmax.f32 %v1260, %v1261
  %v1263 = vrot.slane %v1262, 1
  %v1264 = vmax.f32 %v1262, %v1263
  %v1265 = vsel %vm1019, %v990, -inf
  %v1266 = vrot.slane %v1265, 4
  %v1267 = vmax.f32 %v1265, %v1266
  %v1268 = vrot.slane %v1267, 2
  %v1269 = vmax.f32 %v1267, %v1268
  %v1270 = vrot.slane %v1269, 1
  %v1271 = vmax.f32 %v1269, %v1270
  %v1272 = vsel %vm1019, %v991, -inf
  %v1273 = vrot.slane %v1272, 4
  %v1274 = vmax.f32 %v1272, %v1273
  %v1275 = vrot.slane %v1274, 2
  %v1276 = vmax.f32 %v1274, %v1275
  %v1277 = vrot.slane %v1276, 1
  %v1278 = vmax.f32 %v1276, %v1277
  %v1279 = vsel %vm1019, %v992, -inf
  %v1280 = vrot.slane %v1279, 4
  %v1281 = vmax.f32 %v1279, %v1280
  %v1282 = vrot.slane %v1281, 2
  %v1283 = vmax.f32 %v1281, %v1282
  %v1284 = vrot.slane %v1283, 1
  %v1285 = vmax.f32 %v1283, %v1284
  %v1286 = vsel %vm1019, %v993, -inf
  %v1287 = vrot.slane %v1286, 4
  %v1288 = vmax.f32 %v1286, %v1287
  %v1289 = vrot.slane %v1288, 2
  %v1290 = vmax.f32 %v1288, %v1289
  %v1291 = vrot.slane %v1290, 1
  %v1292 = vmax.f32 %v1290, %v1291
  %v1293 = vsel %vm1019, %v994, -inf
  %v1294 = vrot.slane %v1293, 4
  %v1295 = vmax.f32 %v1293, %v1294
  %v1296 = vrot.slane %v1295, 2
  %v1297 = vmax.f32 %v1295, %v1296
  %v1298 = vrot.slane %v1297, 1
  %v1299 = vmax.f32 %v1297, %v1298
  %v1300 = vsel %vm1019, %v995, -inf
  %v1301 = vrot.slane %v1300, 4
  %v1302 = vmax.f32 %v1300, %v1301
  %v1303 = vrot.slane %v1302, 2
  %v1304 = vmax.f32 %v1302, %v1303
  %v1305 = vrot.slane %v1304, 1
  %v1306 = vmax.f32 %v1304, %v1305
  %v1307 = vsel %vm1019, %v996, -inf
  %v1308 = vrot.slane %v1307, 4
  %v1309 = vmax.f32 %v1307, %v1308
  %v1310 = vrot.slane %v1309, 2
  %v1311 = vmax.f32 %v1309, %v1310
  %v1312 = vrot.slane %v1311, 1
  %v1313 = vmax.f32 %v1311, %v1312
  %v1314 = vsel %vm1019, %v997, -inf
  %v1315 = vrot.slane %v1314, 4
  %v1316 = vmax.f32 %v1314, %v1315
  %v1317 = vrot.slane %v1316, 2
  %v1318 = vmax.f32 %v1316, %v1317
  %v1319 = vrot.slane %v1318, 1
  %v1320 = vmax.f32 %v1318, %v1319
  %v1321 = vsel %vm1019, %v998, -inf
  %v1322 = vrot.slane %v1321, 4
  %v1323 = vmax.f32 %v1321, %v1322
  %v1324 = vrot.slane %v1323, 2
  %v1325 = vmax.f32 %v1323, %v1324
  %v1326 = vrot.slane %v1325, 1
  %v1327 = vmax.f32 %v1325, %v1326
  %v1328 = vsel %vm1019, %v999, -inf
  %v1329 = vrot.slane %v1328, 4
  %v1330 = vmax.f32 %v1328, %v1329
  %v1331 = vrot.slane %v1330, 2
  %v1332 = vmax.f32 %v1330, %v1331
  %v1333 = vrot.slane %v1332, 1
  %v1334 = vmax.f32 %v1332, %v1333
  %v1335 = vsel %vm1019, %v1000, -inf
  %v1336 = vrot.slane %v1335, 4
  %v1337 = vmax.f32 %v1335, %v1336
  %v1338 = vrot.slane %v1337, 2
  %v1339 = vmax.f32 %v1337, %v1338
  %v1340 = vrot.slane %v1339, 1
  %v1341 = vmax.f32 %v1339, %v1340
  %v1342 = vsel %vm1019, %v1001, -inf
  %v1343 = vrot.slane %v1342, 4
  %v1344 = vmax.f32 %v1342, %v1343
  %v1345 = vrot.slane %v1344, 2
  %v1346 = vmax.f32 %v1344, %v1345
  %v1347 = vrot.slane %v1346, 1
  %v1348 = vmax.f32 %v1346, %v1347
  %v1349 = vsel %vm1019, %v1002, -inf
  %v1350 = vrot.slane %v1349, 4
  %v1351 = vmax.f32 %v1349, %v1350
  %v1352 = vrot.slane %v1351, 2
  %v1353 = vmax.f32 %v1351, %v1352
  %v1354 = vrot.slane %v1353, 1
  %v1355 = vmax.f32 %v1353, %v1354
  %v1356 = vsel %vm1019, %v1003, -inf
  %v1357 = vrot.slane %v1356, 4
  %v1358 = vmax.f32 %v1356, %v1357
  %v1359 = vrot.slane %v1358, 2
  %v1360 = vmax.f32 %v1358, %v1359
  %v1361 = vrot.slane %v1360, 1
  %v1362 = vmax.f32 %v1360, %v1361
  %v1363 = vsel %vm1019, %v1004, -inf
  %v1364 = vrot.slane %v1363, 4
  %v1365 = vmax.f32 %v1363, %v1364
  %v1366 = vrot.slane %v1365, 2
  %v1367 = vmax.f32 %v1365, %v1366
  %v1368 = vrot.slane %v1367, 1
  %v1369 = vmax.f32 %v1367, %v1368
  %v1370 = vsel %vm1019, %v1005, -inf
  %v1371 = vrot.slane %v1370, 4
  %v1372 = vmax.f32 %v1370, %v1371
  %v1373 = vrot.slane %v1372, 2
  %v1374 = vmax.f32 %v1372, %v1373
  %v1375 = vrot.slane %v1374, 1
  %v1376 = vmax.f32 %v1374, %v1375
  %v1377 = vsel %vm1019, %v1006, -inf
  %v1378 = vrot.slane %v1377, 4
  %v1379 = vmax.f32 %v1377, %v1378
  %v1380 = vrot.slane %v1379, 2
  %v1381 = vmax.f32 %v1379, %v1380
  %v1382 = vrot.slane %v1381, 1
  %v1383 = vmax.f32 %v1381, %v1382
  %v1384 = vsel %vm1019, %v1007, -inf
  %v1385 = vrot.slane %v1384, 4
  %v1386 = vmax.f32 %v1384, %v1385
  %v1387 = vrot.slane %v1386, 2
  %v1388 = vmax.f32 %v1386, %v1387
  %v1389 = vrot.slane %v1388, 1
  %v1390 = vmax.f32 %v1388, %v1389
  %v1391 = vsel %vm1019, %v1008, -inf
  %v1392 = vrot.slane %v1391, 4
  %v1393 = vmax.f32 %v1391, %v1392
  %v1394 = vrot.slane %v1393, 2
  %v1395 = vmax.f32 %v1393, %v1394
  %v1396 = vrot.slane %v1395, 1
  %v1397 = vmax.f32 %v1395, %v1396
  %v1398 = vsel %vm1019, %v1009, -inf
  %v1399 = vrot.slane %v1398, 4
  %v1400 = vmax.f32 %v1398, %v1399
  %v1401 = vrot.slane %v1400, 2
  %v1402 = vmax.f32 %v1400, %v1401
  %v1403 = vrot.slane %v1402, 1
  %v1404 = vmax.f32 %v1402, %v1403
  %v1405 = vsel %vm1019, %v1010, -inf
  %v1406 = vrot.slane %v1405, 4
  %v1407 = vmax.f32 %v1405, %v1406
  %v1408 = vrot.slane %v1407, 2
  %v1409 = vmax.f32 %v1407, %v1408
  %v1410 = vrot.slane %v1409, 1
  %v1411 = vmax.f32 %v1409, %v1410
  %v1412 = vsel %vm1019, %v1011, -inf
  %v1413 = vrot.slane %v1412, 4
  %v1414 = vmax.f32 %v1412, %v1413
  %v1415 = vrot.slane %v1414, 2
  %v1416 = vmax.f32 %v1414, %v1415
  %v1417 = vrot.slane %v1416, 1
  %v1418 = vmax.f32 %v1416, %v1417
  %v1419 = vsel %vm1019, %v1012, -inf
  %v1420 = vrot.slane %v1419, 4
  %v1421 = vmax.f32 %v1419, %v1420
  %v1422 = vrot.slane %v1421, 2
  %v1423 = vmax.f32 %v1421, %v1422
  %v1424 = vrot.slane %v1423, 1
  %v1425 = vmax.f32 %v1423, %v1424
  %v1426 = vsel %vm1019, %v1013, -inf
  %v1427 = vrot.slane %v1426, 4
  %v1428 = vmax.f32 %v1426, %v1427
  %v1429 = vrot.slane %v1428, 2
  %v1430 = vmax.f32 %v1428, %v1429
  %v1431 = vrot.slane %v1430, 1
  %v1432 = vmax.f32 %v1430, %v1431
  %v1433 = vsel %vm1019, %v1014, -inf
  %v1434 = vrot.slane %v1433, 4
  %v1435 = vmax.f32 %v1433, %v1434
  %v1436 = vrot.slane %v1435, 2
  %v1437 = vmax.f32 %v1435, %v1436
  %v1438 = vrot.slane %v1437, 1
  %v1439 = vmax.f32 %v1437, %v1438
  %v1440 = vsel %vm1019, %v1015, -inf
  %v1441 = vrot.slane %v1440, 4
  %v1442 = vmax.f32 %v1440, %v1441
  %v1443 = vrot.slane %v1442, 2
  %v1444 = vmax.f32 %v1442, %v1443
  %v1445 = vrot.slane %v1444, 1
  %v1446 = vmax.f32 %v1444, %v1445
  %v1447 = vsel %vm1019, %v1016, -inf
  %v1448 = vrot.slane %v1447, 4
  %v1449 = vmax.f32 %v1447, %v1448
  %v1450 = vrot.slane %v1449, 2
  %v1451 = vmax.f32 %v1449, %v1450
  %v1452 = vrot.slane %v1451, 1
  %v1453 = vmax.f32 %v1451, %v1452
  %v1454 = vsel %vm1019, %v1017, -inf
  %v1455 = vrot.slane %v1454, 4
  %v1456 = vmax.f32 %v1454, %v1455
  %v1457 = vrot.slane %v1456, 2
  %v1458 = vmax.f32 %v1456, %v1457
  %v1459 = vrot.slane %v1458, 1
  %v1460 = vmax.f32 %v1458, %v1459
  %v1461 = vsel %vm1019, %v1018, -inf
  %v1462 = vrot.slane %v1461, 4
  %v1463 = vmax.f32 %v1461, %v1462
  %v1464 = vrot.slane %v1463, 2
  %v1465 = vmax.f32 %v1463, %v1464
  %v1466 = vrot.slane %v1465, 1
  %v1467 = vmax.f32 %v1465, %v1466
  %vm1532 = vcmask 1041409
  %v1533 = vsel %vm1532, %v1033, %v1026
  %vm1534 = vcmask 1042434
  %v1535 = vsel %vm1534, %v1040, %v1533
  %vm1536 = vcmask 1043459
  %v1537 = vsel %vm1536, %v1047, %v1535
  %vm1538 = vcmask 1044484
  %v1539 = vsel %vm1538, %v1054, %v1537
  %vm1540 = vcmask 1045509
  %v1541 = vsel %vm1540, %v1061, %v1539
  %vm1542 = vcmask 1046534
  %v1543 = vsel %vm1542, %v1068, %v1541
  %vm1544 = vcmask 1047559
  %v1545 = vsel %vm1544, %v1075, %v1543
  %v1546 = vsel %vm1532, %v1089, %v1082
  %v1547 = vsel %vm1534, %v1096, %v1546
  %v1548 = vsel %vm1536, %v1103, %v1547
  %v1549 = vsel %vm1538, %v1110, %v1548
  %v1550 = vsel %vm1540, %v1117, %v1549
  %v1551 = vsel %vm1542, %v1124, %v1550
  %v1552 = vsel %vm1544, %v1131, %v1551
  %v1553 = vsel %vm1532, %v1145, %v1138
  %v1554 = vsel %vm1534, %v1152, %v1553
  %v1555 = vsel %vm1536, %v1159, %v1554
  %v1556 = vsel %vm1538, %v1166, %v1555
  %v1557 = vsel %vm1540, %v1173, %v1556
  %v1558 = vsel %vm1542, %v1180, %v1557
  %v1559 = vsel %vm1544, %v1187, %v1558
  %v1560 = vsel %vm1532, %v1201, %v1194
  %v1561 = vsel %vm1534, %v1208, %v1560
  %v1562 = vsel %vm1536, %v1215, %v1561
  %v1563 = vsel %vm1538, %v1222, %v1562
  %v1564 = vsel %vm1540, %v1229, %v1563
  %v1565 = vsel %vm1542, %v1236, %v1564
  %v1566 = vsel %vm1544, %v1243, %v1565
  %v1567 = vsel %vm1532, %v1257, %v1250
  %v1568 = vsel %vm1534, %v1264, %v1567
  %v1569 = vsel %vm1536, %v1271, %v1568
  %v1570 = vsel %vm1538, %v1278, %v1569
  %v1571 = vsel %vm1540, %v1285, %v1570
  %v1572 = vsel %vm1542, %v1292, %v1571
  %v1573 = vsel %vm1544, %v1299, %v1572
  %v1574 = vsel %vm1532, %v1313, %v1306
  %v1575 = vsel %vm1534, %v1320, %v1574
  %v1576 = vsel %vm1536, %v1327, %v1575
  %v1577 = vsel %vm1538, %v1334, %v1576
  %v1578 = vsel %vm1540, %v1341, %v1577
  %v1579 = vsel %vm1542, %v1348, %v1578
  %v1580 = vsel %vm1544, %v1355, %v1579
  %v1581 = vsel %vm1532, %v1369, %v1362
  %v1582 = vsel %vm1534, %v1376, %v1581
  %v1583 = vsel %vm1536, %v1383, %v1582
  %v1584 = vsel %vm1538, %v1390, %v1583
  %v1585 = vsel %vm1540, %v1397, %v1584
  %v1586 = vsel %vm1542, %v1404, %v1585
  %v1587 = vsel %vm1544, %v1411, %v1586
  %v1588 = vsel %vm1532, %v1425, %v1418
  %v1589 = vsel %vm1534, %v1432, %v1588
  %v1590 = vsel %vm1536, %v1439, %v1589
  %v1591 = vsel %vm1538, %v1446, %v1590
  %v1592 = vsel %vm1540, %v1453, %v1591
  %v1593 = vsel %vm1542, %v1460, %v1592
  %v1594 = vsel %vm1544, %v1467, %v1593
  %v1595 = vsel %vm1019, %v1545, 0
  %v1597 = vsel %vm1019, %v1552, 0
  %v1599 = vsel %vm1019, %v1559, 0
  %v1601 = vsel %vm1019, %v1566, 0
  %v1603 = vsel %vm1019, %v1573, 0
  %v1605 = vsel %vm1019, %v1580, 0
  %v1607 = vsel %vm1019, %v1587, 0
  %v1609 = vsel %vm1019, %v1594, 0
  %1611 = vmatprep.subr.mxu0 0.0
  %1612 = vmatpush1.msra.mxu0 0.0
  %1613 = vmatprep.subr.mxu0 0.0
  %1614 = vmatpush1.msra.mxu0 0.0
  %1615 = vmatprep.subr.mxu0 0.0
  %1616 = vmatpush1.msra.mxu0 0.0
  %1617 = vmatprep.subr.mxu0 0.0
  %1618 = vmatpush1.msra.mxu0 0.0
  %1619 = vmatprep.subr.mxu0 0.0
  %1620 = vmatpush1.msra.mxu0 0.0
  %1621 = vmatprep.subr.mxu0 0.0
  %1622 = vmatpush1.msra.mxu0 0.0
  %1623 = vmatprep.subr.mxu0 0.0
  %1624 = vmatpush1.msra.mxu0 0.0
  %1625 = vmatprep.subr.mxu0 0.0
  %1626 = vmatpush1.msra.mxu0 0.0
  %1627 = vmatprep.subr.mxu0 0.0
  %1628 = vmatpush1.msra.mxu0 0.0
  %1629 = vmatprep.subr.mxu0 0.0
  %1630 = vmatpush1.msra.mxu0 0.0
  %1631 = vmatprep.subr.mxu0 0.0
  %1632 = vmatpush1.msra.mxu0 0.0
  %1633 = vmatprep.subr.mxu0 0.0
  %1634 = vmatpush1.msra.mxu0 0.0
  %1635 = vmatprep.subr.mxu0 0.0
  %1636 = vmatpush1.msra.mxu0 %v889
  %1637 = vmatprep.subr.mxu0 0.0
  %1638 = vmatpush1.msra.mxu0 %v888
  %1639 = vmatprep.subr.mxu0 0.0
  %1640 = vmatpush1.msra.mxu0 %v887
  %1641 = vmatprep.subr.mxu0 0.0
  %1642 = vmatpush1.msra.mxu0 %v886
  %1643 = vmatprep.subr.mxu0 0.0
  %1644 = vmatpush2.msra.mxu0 0.0
  %1645 = vmatprep.subr.mxu0 0.0
  %1646 = vmatpush2.msra.mxu0 0.0
  %1647 = vmatprep.subr.mxu0 0.0
  %1648 = vmatpush2.msra.mxu0 0.0
  %1649 = vmatprep.subr.mxu0 0.0
  %1650 = vmatpush2.msra.mxu0 0.0
  %1651 = vmatprep.subr.mxu0 0.0
  %1652 = vmatpush2.msra.mxu0 0.0
  %1653 = vmatprep.subr.mxu0 0.0
  %1654 = vmatpush2.msra.mxu0 0.0
  %1655 = vmatprep.subr.mxu0 0.0
  %1656 = vmatpush2.msra.mxu0 0.0
  %1657 = vmatprep.subr.mxu0 0.0
  %1658 = vmatpush2.msra.mxu0 0.0
  %1659 = vmatprep.subr.mxu0 0.0
  %1660 = vmatpush2.msra.mxu0 0.0
  %1661 = vmatprep.subr.mxu0 0.0
  %1662 = vmatpush2.msra.mxu0 0.0
  %1663 = vmatprep.subr.mxu0 0.0
  %1664 = vmatpush2.msra.mxu0 0.0
  %1665 = vmatprep.subr.mxu0 0.0
  %1666 = vmatpush2.msra.mxu0 0.0
  %1667 = vmatprep.subr.mxu0 0.0
  %1668 = vmatpush2.msra.mxu0 0.0
  %1669 = vmatprep.subr.mxu0 0.0
  %1670 = vmatpush2.msra.mxu0 0.0
  %1671 = vmatprep.subr.mxu0 0.0
  %1672 = vmatpush2.msra.mxu0 0.0
  %1673 = vmatprep.subr.mxu0 0.0
  %1674 = vmatpush2.msra.mxu0 0.0
  %1675 = vmatprep.mubr.f32.mxu0 0.0
  %1676 = vmatmul.mubr.f32.gmra.mxu0 %v1595
  %v1677 = vpop.f32.mrf.mxu0
  %v1678 = vadd.f32 0.0, %v1677
  %v1679 = vpop.f32.mrf.mxu0
  %1680 = vmatprep.mubr.f32.mxu0 0.0
  %1681 = vmatmul.mubr.f32.gmra.mxu0 %v1597
  %v1682 = vpop.f32.mrf.mxu0
  %v1683 = vadd.f32 0.0, %v1682
  %v1684 = vpop.f32.mrf.mxu0
  %1685 = vmatprep.mubr.f32.mxu0 0.0
  %1686 = vmatmul.mubr.f32.gmra.mxu0 %v1599
  %v1687 = vpop.f32.mrf.mxu0
  %v1688 = vadd.f32 0.0, %v1687
  %v1689 = vpop.f32.mrf.mxu0
  %1690 = vmatprep.mubr.f32.mxu0 0.0
  %1691 = vmatmul.mubr.f32.gmra.mxu0 %v1601
  %v1692 = vpop.f32.mrf.mxu0
  %v1693 = vadd.f32 0.0, %v1692
  %v1694 = vpop.f32.mrf.mxu0
  %1695 = vmatprep.mubr.f32.mxu0 0.0
  %1696 = vmatmul.mubr.f32.gmra.mxu0 %v1603
  %v1697 = vpop.f32.mrf.mxu0
  %v1698 = vadd.f32 0.0, %v1697
  %v1699 = vpop.f32.mrf.mxu0
  %1700 = vmatprep.mubr.f32.mxu0 0.0
  %1701 = vmatmul.mubr.f32.gmra.mxu0 %v1605
  %v1702 = vpop.f32.mrf.mxu0
  %v1703 = vadd.f32 0.0, %v1702
  %v1704 = vpop.f32.mrf.mxu0
  %1705 = vmatprep.mubr.f32.mxu0 0.0
  %1706 = vmatmul.mubr.f32.gmra.mxu0 %v1607
  %v1707 = vpop.f32.mrf.mxu0
  %v1708 = vadd.f32 0.0, %v1707
  %v1709 = vpop.f32.mrf.mxu0
  %1710 = vmatprep.mubr.f32.mxu0 0.0
  %1711 = vmatmul.mubr.f32.gmra.mxu0 %v1609
  %v1712 = vpop.f32.mrf.mxu0
  %v1713 = vadd.f32 0.0, %v1712
  %v1714 = vpop.f32.mrf.mxu0
  %1715 = vdwg.mxu0
  %v1724 = vrot.slane %v1678, 1
  %v1725 = vrot.slane %v1678, 2
  %v1726 = vrot.slane %v1678, 3
  %v1727 = vrot.slane %v1678, 4
  %v1728 = vrot.slane %v1678, 5
  %v1729 = vrot.slane %v1678, 6
  %v1730 = vrot.slane %v1678, 7
  %v1731 = vrot.slane %v1683, 1
  %v1732 = vrot.slane %v1683, 2
  %v1733 = vrot.slane %v1683, 3
  %v1734 = vrot.slane %v1683, 4
  %v1735 = vrot.slane %v1683, 5
  %v1736 = vrot.slane %v1683, 6
  %v1737 = vrot.slane %v1683, 7
  %v1738 = vrot.slane %v1688, 1
  %v1739 = vrot.slane %v1688, 2
  %v1740 = vrot.slane %v1688, 3
  %v1741 = vrot.slane %v1688, 4
  %v1742 = vrot.slane %v1688, 5
  %v1743 = vrot.slane %v1688, 6
  %v1744 = vrot.slane %v1688, 7
  %v1745 = vrot.slane %v1693, 1
  %v1746 = vrot.slane %v1693, 2
  %v1747 = vrot.slane %v1693, 3
  %v1748 = vrot.slane %v1693, 4
  %v1749 = vrot.slane %v1693, 5
  %v1750 = vrot.slane %v1693, 6
  %v1751 = vrot.slane %v1693, 7
  %v1752 = vrot.slane %v1698, 1
  %v1753 = vrot.slane %v1698, 2
  %v1754 = vrot.slane %v1698, 3
  %v1755 = vrot.slane %v1698, 4
  %v1756 = vrot.slane %v1698, 5
  %v1757 = vrot.slane %v1698, 6
  %v1758 = vrot.slane %v1698, 7
  %v1759 = vrot.slane %v1703, 1
  %v1760 = vrot.slane %v1703, 2
  %v1761 = vrot.slane %v1703, 3
  %v1762 = vrot.slane %v1703, 4
  %v1763 = vrot.slane %v1703, 5
  %v1764 = vrot.slane %v1703, 6
  %v1765 = vrot.slane %v1703, 7
  %v1766 = vrot.slane %v1708, 1
  %v1767 = vrot.slane %v1708, 2
  %v1768 = vrot.slane %v1708, 3
  %v1769 = vrot.slane %v1708, 4
  %v1770 = vrot.slane %v1708, 5
  %v1771 = vrot.slane %v1708, 6
  %v1772 = vrot.slane %v1708, 7
  %v1773 = vrot.slane %v1713, 1
  %v1774 = vrot.slane %v1713, 2
  %v1775 = vrot.slane %v1713, 3
  %v1776 = vrot.slane %v1713, 4
  %v1777 = vrot.slane %v1713, 5
  %v1778 = vrot.slane %v1713, 6
  %v1779 = vrot.slane %v1713, 7
  %1780 = vrot.lane.b32.xlu0 %v1678, 32
  %v1781 = vpop.permute.xlu0 %1780
  %1782 = vrot.lane.b32.xlu0 %v1724, 32
  %v1783 = vpop.permute.xlu0 %1782
  %1784 = vrot.lane.b32.xlu0 %v1725, 32
  %v1785 = vpop.permute.xlu0 %1784
  %1786 = vrot.lane.b32.xlu0 %v1726, 32
  %v1787 = vpop.permute.xlu0 %1786
  %1788 = vrot.lane.b32.xlu0 %v1727, 32
  %v1789 = vpop.permute.xlu0 %1788
  %1790 = vrot.lane.b32.xlu0 %v1728, 32
  %v1791 = vpop.permute.xlu0 %1790
  %1792 = vrot.lane.b32.xlu0 %v1729, 32
  %v1793 = vpop.permute.xlu0 %1792
  %1794 = vrot.lane.b32.xlu0 %v1730, 32
  %v1795 = vpop.permute.xlu0 %1794
  %1796 = vrot.lane.b32.xlu0 %v1683, 32
  %v1797 = vpop.permute.xlu0 %1796
  %1798 = vrot.lane.b32.xlu0 %v1731, 32
  %v1799 = vpop.permute.xlu0 %1798
  %1800 = vrot.lane.b32.xlu0 %v1732, 32
  %v1801 = vpop.permute.xlu0 %1800
  %1802 = vrot.lane.b32.xlu0 %v1733, 32
  %v1803 = vpop.permute.xlu0 %1802
  %1804 = vrot.lane.b32.xlu0 %v1734, 32
  %v1805 = vpop.permute.xlu0 %1804
  %1806 = vrot.lane.b32.xlu0 %v1735, 32
  %v1807 = vpop.permute.xlu0 %1806
  %1808 = vrot.lane.b32.xlu0 %v1736, 32
  %v1809 = vpop.permute.xlu0 %1808
  %1810 = vrot.lane.b32.xlu0 %v1737, 32
  %v1811 = vpop.permute.xlu0 %1810
  %1812 = vrot.lane.b32.xlu0 %v1688, 32
  %v1813 = vpop.permute.xlu0 %1812
  %1814 = vrot.lane.b32.xlu0 %v1738, 32
  %v1815 = vpop.permute.xlu0 %1814
  %1816 = vrot.lane.b32.xlu0 %v1739, 32
  %v1817 = vpop.permute.xlu0 %1816
  %1818 = vrot.lane.b32.xlu0 %v1740, 32
  %v1819 = vpop.permute.xlu0 %1818
  %1820 = vrot.lane.b32.xlu0 %v1741, 32
  %v1821 = vpop.permute.xlu0 %1820
  %1822 = vrot.lane.b32.xlu0 %v1742, 32
  %v1823 = vpop.permute.xlu0 %1822
  %1824 = vrot.lane.b32.xlu0 %v1743, 32
  %v1825 = vpop.permute.xlu0 %1824
  %1826 = vrot.lane.b32.xlu0 %v1744, 32
  %v1827 = vpop.permute.xlu0 %1826
  %1828 = vrot.lane.b32.xlu0 %v1693, 32
  %v1829 = vpop.permute.xlu0 %1828
  %1830 = vrot.lane.b32.xlu0 %v1745, 32
  %v1831 = vpop.permute.xlu0 %1830
  %1832 = vrot.lane.b32.xlu0 %v1746, 32
  %v1833 = vpop.permute.xlu0 %1832
  %1834 = vrot.lane.b32.xlu0 %v1747, 32
  %v1835 = vpop.permute.xlu0 %1834
  %1836 = vrot.lane.b32.xlu0 %v1748, 32
  %v1837 = vpop.permute.xlu0 %1836
  %1838 = vrot.lane.b32.xlu0 %v1749, 32
  %v1839 = vpop.permute.xlu0 %1838
  %1840 = vrot.lane.b32.xlu0 %v1750, 32
  %v1841 = vpop.permute.xlu0 %1840
  %1842 = vrot.lane.b32.xlu0 %v1751, 32
  %v1843 = vpop.permute.xlu0 %1842
  %1844 = vrot.lane.b32.xlu0 %v1698, 32
  %v1845 = vpop.permute.xlu0 %1844
  %1846 = vrot.lane.b32.xlu0 %v1752, 32
  %v1847 = vpop.permute.xlu0 %1846
  %1848 = vrot.lane.b32.xlu0 %v1753, 32
  %v1849 = vpop.permute.xlu0 %1848
  %1850 = vrot.lane.b32.xlu0 %v1754, 32
  %v1851 = vpop.permute.xlu0 %1850
  %1852 = vrot.lane.b32.xlu0 %v1755, 32
  %v1853 = vpop.permute.xlu0 %1852
  %1854 = vrot.lane.b32.xlu0 %v1756, 32
  %v1855 = vpop.permute.xlu0 %1854
  %1856 = vrot.lane.b32.xlu0 %v1757, 32
  %v1857 = vpop.permute.xlu0 %1856
  %1858 = vrot.lane.b32.xlu0 %v1758, 32
  %v1859 = vpop.permute.xlu0 %1858
  %1860 = vrot.lane.b32.xlu0 %v1703, 32
  %v1861 = vpop.permute.xlu0 %1860
  %1862 = vrot.lane.b32.xlu0 %v1759, 32
  %v1863 = vpop.permute.xlu0 %1862
  %1864 = vrot.lane.b32.xlu0 %v1760, 32
  %v1865 = vpop.permute.xlu0 %1864
  %1866 = vrot.lane.b32.xlu0 %v1761, 32
  %v1867 = vpop.permute.xlu0 %1866
  %1868 = vrot.lane.b32.xlu0 %v1762, 32
  %v1869 = vpop.permute.xlu0 %1868
  %1870 = vrot.lane.b32.xlu0 %v1763, 32
  %v1871 = vpop.permute.xlu0 %1870
  %1872 = vrot.lane.b32.xlu0 %v1764, 32
  %v1873 = vpop.permute.xlu0 %1872
  %1874 = vrot.lane.b32.xlu0 %v1765, 32
  %v1875 = vpop.permute.xlu0 %1874
  %1876 = vrot.lane.b32.xlu0 %v1708, 32
  %v1877 = vpop.permute.xlu0 %1876
  %1878 = vrot.lane.b32.xlu0 %v1766, 32
  %v1879 = vpop.permute.xlu0 %1878
  %1880 = vrot.lane.b32.xlu0 %v1767, 32
  %v1881 = vpop.permute.xlu0 %1880
  %1882 = vrot.lane.b32.xlu0 %v1768, 32
  %v1883 = vpop.permute.xlu0 %1882
  %1884 = vrot.lane.b32.xlu0 %v1769, 32
  %v1885 = vpop.permute.xlu0 %1884
  %1886 = vrot.lane.b32.xlu0 %v1770, 32
  %v1887 = vpop.permute.xlu0 %1886
  %1888 = vrot.lane.b32.xlu0 %v1771, 32
  %v1889 = vpop.permute.xlu0 %1888
  %1890 = vrot.lane.b32.xlu0 %v1772, 32
  %v1891 = vpop.permute.xlu0 %1890
  %1892 = vrot.lane.b32.xlu0 %v1713, 32
  %v1893 = vpop.permute.xlu0 %1892
  %1894 = vrot.lane.b32.xlu0 %v1773, 32
  %v1895 = vpop.permute.xlu0 %1894
  %1896 = vrot.lane.b32.xlu0 %v1774, 32
  %v1897 = vpop.permute.xlu0 %1896
  %1898 = vrot.lane.b32.xlu0 %v1775, 32
  %v1899 = vpop.permute.xlu0 %1898
  %1900 = vrot.lane.b32.xlu0 %v1776, 32
  %v1901 = vpop.permute.xlu0 %1900
  %1902 = vrot.lane.b32.xlu0 %v1777, 32
  %v1903 = vpop.permute.xlu0 %1902
  %1904 = vrot.lane.b32.xlu0 %v1778, 32
  %v1905 = vpop.permute.xlu0 %1904
  %1906 = vrot.lane.b32.xlu0 %v1779, 32
  %v1907 = vpop.permute.xlu0 %1906
  %v1972 = vadd.f32 %v568, %v1781
  %v1973 = vadd.f32 %v571, %v1783
  %v1974 = vadd.f32 %v576, %v1785
  %v1975 = vadd.f32 %v579, %v1787
  %v1976 = vadd.f32 %v584, %v1789
  %v1977 = vadd.f32 %v587, %v1791
  %v1978 = vadd.f32 %v592, %v1793
  %v1979 = vadd.f32 %v595, %v1795
  %v1980 = vadd.f32 %v600, %v1797
  %v1981 = vadd.f32 %v603, %v1799
  %v1982 = vadd.f32 %v608, %v1801
  %v1983 = vadd.f32 %v611, %v1803
  %v1984 = vadd.f32 %v616, %v1805
  %v1985 = vadd.f32 %v619, %v1807
  %v1986 = vadd.f32 %v624, %v1809
  %v1987 = vadd.f32 %v627, %v1811
  %v1988 = vadd.f32 %v632, %v1813
  %v1989 = vadd.f32 %v635, %v1815
  %v1990 = vadd.f32 %v640, %v1817
  %v1991 = vadd.f32 %v643, %v1819
  %v1992 = vadd.f32 %v648, %v1821
  %v1993 = vadd.f32 %v651, %v1823
  %v1994 = vadd.f32 %v656, %v1825
  %v1995 = vadd.f32 %v659, %v1827
  %v1996 = vadd.f32 %v664, %v1829
  %v1997 = vadd.f32 %v667, %v1831
  %v1998 = vadd.f32 %v672, %v1833
  %v1999 = vadd.f32 %v675, %v1835
  %v2000 = vadd.f32 %v680, %v1837
  %v2001 = vadd.f32 %v683, %v1839
  %v2002 = vadd.f32 %v688, %v1841
  %v2003 = vadd.f32 %v691, %v1843
  %v2004 = vadd.f32 %v696, %v1845
  %v2005 = vadd.f32 %v699, %v1847
  %v2006 = vadd.f32 %v704, %v1849
  %v2007 = vadd.f32 %v707, %v1851
  %v2008 = vadd.f32 %v712, %v1853
  %v2009 = vadd.f32 %v715, %v1855
  %v2010 = vadd.f32 %v720, %v1857
  %v2011 = vadd.f32 %v723, %v1859
  %v2012 = vadd.f32 %v728, %v1861
  %v2013 = vadd.f32 %v731, %v1863
  %v2014 = vadd.f32 %v736, %v1865
  %v2015 = vadd.f32 %v739, %v1867
  %v2016 = vadd.f32 %v744, %v1869
  %v2017 = vadd.f32 %v747, %v1871
  %v2018 = vadd.f32 %v752, %v1873
  %v2019 = vadd.f32 %v755, %v1875
  %v2020 = vadd.f32 %v760, %v1877
  %v2021 = vadd.f32 %v763, %v1879
  %v2022 = vadd.f32 %v768, %v1881
  %v2023 = vadd.f32 %v771, %v1883
  %v2024 = vadd.f32 %v776, %v1885
  %v2025 = vadd.f32 %v779, %v1887
  %v2026 = vadd.f32 %v784, %v1889
  %v2027 = vadd.f32 %v787, %v1891
  %v2028 = vadd.f32 %v792, %v1893
  %v2029 = vadd.f32 %v795, %v1895
  %v2030 = vadd.f32 %v800, %v1897
  %v2031 = vadd.f32 %v803, %v1899
  %v2032 = vadd.f32 %v808, %v1901
  %v2033 = vadd.f32 %v811, %v1903
  %v2034 = vadd.f32 %v816, %v1905
  %v2035 = vadd.f32 %v819, %v1907
  %v2036 = vlaneseq
  %v2037 = vshrl.u32 %v2036, 7
  %v2038 = vsub.s32 0, %v2037
  %v2039 = vrot.slane %v890, %v2038
  %2041 = vrot.lane.b32.xlu0 %v2039, 32
  %v2042 = vpop.permute.xlu0 %2041
  %v2044 = vadd.f32 %v1972, %v2042
  %v2045 = vadd.f32 %v1973, %v2042
  %v2046 = vadd.f32 %v1974, %v2042
  %v2047 = vadd.f32 %v1975, %v2042
  %v2048 = vadd.f32 %v1976, %v2042
  %v2049 = vadd.f32 %v1977, %v2042
  %v2050 = vadd.f32 %v1978, %v2042
  %v2051 = vadd.f32 %v1979, %v2042
  %v2052 = vadd.f32 %v1980, %v2042
  %v2053 = vadd.f32 %v1981, %v2042
  %v2054 = vadd.f32 %v1982, %v2042
  %v2055 = vadd.f32 %v1983, %v2042
  %v2056 = vadd.f32 %v1984, %v2042
  %v2057 = vadd.f32 %v1985, %v2042
  %v2058 = vadd.f32 %v1986, %v2042
  %v2059 = vadd.f32 %v1987, %v2042
  %v2060 = vadd.f32 %v1988, %v2042
  %v2061 = vadd.f32 %v1989, %v2042
  %v2062 = vadd.f32 %v1990, %v2042
  %v2063 = vadd.f32 %v1991, %v2042
  %v2064 = vadd.f32 %v1992, %v2042
  %v2065 = vadd.f32 %v1993, %v2042
  %v2066 = vadd.f32 %v1994, %v2042
  %v2067 = vadd.f32 %v1995, %v2042
  %v2068 = vadd.f32 %v1996, %v2042
  %v2069 = vadd.f32 %v1997, %v2042
  %v2070 = vadd.f32 %v1998, %v2042
  %v2071 = vadd.f32 %v1999, %v2042
  %v2072 = vadd.f32 %v2000, %v2042
  %v2073 = vadd.f32 %v2001, %v2042
  %v2074 = vadd.f32 %v2002, %v2042
  %v2075 = vadd.f32 %v2003, %v2042
  %v2076 = vadd.f32 %v2004, %v2042
  %v2077 = vadd.f32 %v2005, %v2042
  %v2078 = vadd.f32 %v2006, %v2042
  %v2079 = vadd.f32 %v2007, %v2042
  %v2080 = vadd.f32 %v2008, %v2042
  %v2081 = vadd.f32 %v2009, %v2042
  %v2082 = vadd.f32 %v2010, %v2042
  %v2083 = vadd.f32 %v2011, %v2042
  %v2084 = vadd.f32 %v2012, %v2042
  %v2085 = vadd.f32 %v2013, %v2042
  %v2086 = vadd.f32 %v2014, %v2042
  %v2087 = vadd.f32 %v2015, %v2042
  %v2088 = vadd.f32 %v2016, %v2042
  %v2089 = vadd.f32 %v2017, %v2042
  %v2090 = vadd.f32 %v2018, %v2042
  %v2091 = vadd.f32 %v2019, %v2042
  %v2092 = vadd.f32 %v2020, %v2042
  %v2093 = vadd.f32 %v2021, %v2042
  %v2094 = vadd.f32 %v2022, %v2042
  %v2095 = vadd.f32 %v2023, %v2042
  %v2096 = vadd.f32 %v2024, %v2042
  %v2097 = vadd.f32 %v2025, %v2042
  %v2098 = vadd.f32 %v2026, %v2042
  %v2099 = vadd.f32 %v2027, %v2042
  %v2100 = vadd.f32 %v2028, %v2042
  %v2101 = vadd.f32 %v2029, %v2042
  %v2102 = vadd.f32 %v2030, %v2042
  %v2103 = vadd.f32 %v2031, %v2042
  %v2104 = vadd.f32 %v2032, %v2042
  %v2105 = vadd.f32 %v2033, %v2042
  %v2106 = vadd.f32 %v2034, %v2042
  %v2107 = vadd.f32 %v2035, %v2042
  %v2108 = vmax.f32 %v2044, 0.0
  %v2109 = vmax.f32 %v2045, 0.0
  %v2110 = vmax.f32 %v2046, 0.0
  %v2111 = vmax.f32 %v2047, 0.0
  %v2112 = vmax.f32 %v2048, 0.0
  %v2113 = vmax.f32 %v2049, 0.0
  %v2114 = vmax.f32 %v2050, 0.0
  %v2115 = vmax.f32 %v2051, 0.0
  %v2116 = vmax.f32 %v2052, 0.0
  %v2117 = vmax.f32 %v2053, 0.0
  %v2118 = vmax.f32 %v2054, 0.0
  %v2119 = vmax.f32 %v2055, 0.0
  %v2120 = vmax.f32 %v2056, 0.0
  %v2121 = vmax.f32 %v2057, 0.0
  %v2122 = vmax.f32 %v2058, 0.0
  %v2123 = vmax.f32 %v2059, 0.0
  %v2124 = vmax.f32 %v2060, 0.0
  %v2125 = vmax.f32 %v2061, 0.0
  %v2126 = vmax.f32 %v2062, 0.0
  %v2127 = vmax.f32 %v2063, 0.0
  %v2128 = vmax.f32 %v2064, 0.0
  %v2129 = vmax.f32 %v2065, 0.0
  %v2130 = vmax.f32 %v2066, 0.0
  %v2131 = vmax.f32 %v2067, 0.0
  %v2132 = vmax.f32 %v2068, 0.0
  %v2133 = vmax.f32 %v2069, 0.0
  %v2134 = vmax.f32 %v2070, 0.0
  %v2135 = vmax.f32 %v2071, 0.0
  %v2136 = vmax.f32 %v2072, 0.0
  %v2137 = vmax.f32 %v2073, 0.0
  %v2138 = vmax.f32 %v2074, 0.0
  %v2139 = vmax.f32 %v2075, 0.0
  %v2140 = vmax.f32 %v2076, 0.0
  %v2141 = vmax.f32 %v2077, 0.0
  %v2142 = vmax.f32 %v2078, 0.0
  %v2143 = vmax.f32 %v2079, 0.0
  %v2144 = vmax.f32 %v2080, 0.0
  %v2145 = vmax.f32 %v2081, 0.0
  %v2146 = vmax.f32 %v2082, 0.0
  %v2147 = vmax.f32 %v2083, 0.0
  %v2148 = vmax.f32 %v2084, 0.0
  %v2149 = vmax.f32 %v2085, 0.0
  %v2150 = vmax.f32 %v2086, 0.0
  %v2151 = vmax.f32 %v2087, 0.0
  %v2152 = vmax.f32 %v2088, 0.0
  %v2153 = vmax.f32 %v2089, 0.0
  %v2154 = vmax.f32 %v2090, 0.0
  %v2155 = vmax.f32 %v2091, 0.0
  %v2156 = vmax.f32 %v2092, 0.0
  %v2157 = vmax.f32 %v2093, 0.0
  %v2158 = vmax.f32 %v2094, 0.0
  %v2159 = vmax.f32 %v2095, 0.0
  %v2160 = vmax.f32 %v2096, 0.0
  %v2161 = vmax.f32 %v2097, 0.0
  %v2162 = vmax.f32 %v2098, 0.0
  %v2163 = vmax.f32 %v2099, 0.0
  %v2164 = vmax.f32 %v2100, 0.0
  %v2165 = vmax.f32 %v2101, 0.0
  %v2166 = vmax.f32 %v2102, 0.0
  %v2167 = vmax.f32 %v2103, 0.0
  %v2168 = vmax.f32 %v2104, 0.0
  %v2169 = vmax.f32 %v2105, 0.0
  %v2170 = vmax.f32 %v2106, 0.0
  %v2171 = vmax.f32 %v2107, 0.0
  %v2172 = vld [vmem:[%s4] sm:$0x3f]
  %v2173 = vld [vmem:[%s4 + $0x8] sm:$0x3f]
  %v2174 = vld [vmem:[%s4 + $0x10] sm:$0x3f]
  %v2175 = vld [vmem:[%s4 + $0x18] sm:$0x3f]
  %v2176 = vld [vmem:[%s4 + $0x20] sm:$0x3f]
  %v2177 = vld [vmem:[%s4 + $0x28] sm:$0x3f]
  %v2178 = vld [vmem:[%s4 + $0x30] sm:$0x3f]
  %v2179 = vld [vmem:[%s4 + $0x38] sm:$0x3f]
  %v2180 = vld [vmem:[%s4 + $0x40] sm:$0x3f]
  %v2181 = vld [vmem:[%s4 + $0x48] sm:$0x3f]
  %v2182 = vld [vmem:[%s4 + $0x50] sm:$0x3f]
  %v2183 = vld [vmem:[%s4 + $0x58] sm:$0x3f]
  %v2184 = vld [vmem:[%s4 + $0x60] sm:$0x3f]
  %v2185 = vld [vmem:[%s4 + $0x68] sm:$0x3f]
  %v2186 = vld [vmem:[%s4 + $0x70] sm:$0x3f]
  %v2187 = vld [vmem:[%s4 + $0x78] sm:$0x3f]
  %v2188 = vld [vmem:[%s4 + $0x80] sm:$0x3f]
  %v2189 = vld [vmem:[%s4 + $0x88] sm:$0x3f]
  %v2190 = vld [vmem:[%s4 + $0x90] sm:$0x3f]
  %v2191 = vld [vmem:[%s4 + $0x98] sm:$0x3f]
  %v2192 = vld [vmem:[%s4 + $0xa0] sm:$0x3f]
  %v2193 = vld [vmem:[%s4 + $0xa8] sm:$0x3f]
  %v2194 = vld [vmem:[%s4 + $0xb0] sm:$0x3f]
  %v2195 = vld [vmem:[%s4 + $0xb8] sm:$0x3f]
  %v2196 = vld [vmem:[%s4 + $0xc0] sm:$0x3f]
  %v2197 = vld [vmem:[%s4 + $0xc8] sm:$0x3f]
  %v2198 = vld [vmem:[%s4 + $0xd0] sm:$0x3f]
  %v2199 = vld [vmem:[%s4 + $0xd8] sm:$0x3f]
  %v2200 = vld [vmem:[%s4 + $0xe0] sm:$0x3f]
  %v2201 = vld [vmem:[%s4 + $0xe8] sm:$0x3f]
  %v2202 = vld [vmem:[%s4 + $0xf0] sm:$0x3f]
  %v2203 = vld [vmem:[%s4 + $0xf8] sm:$0x3f]
  %v2204 = vld [vmem:[%s4 + $0x100] sm:$0x3f]
  %v2205 = vld [vmem:[%s4 + $0x108] sm:$0x3f]
  %v2206 = vld [vmem:[%s4 + $0x110] sm:$0x3f]
  %v2207 = vld [vmem:[%s4 + $0x118] sm:$0x3f]
  %v2208 = vld [vmem:[%s4 + $0x120] sm:$0x3f]
  %v2209 = vld [vmem:[%s4 + $0x128] sm:$0x3f]
  %v2210 = vld [vmem:[%s4 + $0x130] sm:$0x3f]
  %v2211 = vld [vmem:[%s4 + $0x138] sm:$0x3f]
  %v2212 = vld [vmem:[%s4 + $0x140] sm:$0x3f]
  %v2213 = vld [vmem:[%s4 + $0x148] sm:$0x3f]
  %v2214 = vld [vmem:[%s4 + $0x150] sm:$0x3f]
  %v2215 = vld [vmem:[%s4 + $0x158] sm:$0x3f]
  %v2216 = vld [vmem:[%s4 + $0x160] sm:$0x3f]
  %v2217 = vld [vmem:[%s4 + $0x168] sm:$0x3f]
  %v2218 = vld [vmem:[%s4 + $0x170] sm:$0x3f]
  %v2219 = vld [vmem:[%s4 + $0x178] sm:$0x3f]
  %v2220 = vld [vmem:[%s4 + $0x180] sm:$0x3f]
  %v2221 = vld [vmem:[%s4 + $0x188] sm:$0x3f]
  %v2222 = vld [vmem:[%s4 + $0x190] sm:$0x3f]
  %v2223 = vld [vmem:[%s4 + $0x198] sm:$0x3f]
  %v2224 = vld [vmem:[%s4 + $0x1a0] sm:$0x3f]
  %v2225 = vld [vmem:[%s4 + $0x1a8] sm:$0x3f]
  %v2226 = vld [vmem:[%s4 + $0x1b0] sm:$0x3f]
  %v2227 = vld [vmem:[%s4 + $0x1b8] sm:$0x3f]
  %v2228 = vld [vmem:[%s4 + $0x1c0] sm:$0x3f]
  %v2229 = vld [vmem:[%s4 + $0x1c8] sm:$0x3f]
  %v2230 = vld [vmem:[%s4 + $0x1d0] sm:$0x3f]
  %v2231 = vld [vmem:[%s4 + $0x1d8] sm:$0x3f]
  %v2232 = vld [vmem:[%s4 + $0x1e0] sm:$0x3f]
  %v2233 = vld [vmem:[%s4 + $0x1e8] sm:$0x3f]
  %v2234 = vld [vmem:[%s4 + $0x1f0] sm:$0x3f]
  %v2235 = vld [vmem:[%s4 + $0x1f8] sm:$0x3f]
  %v2236 = vld [vmem:[%s3] sm:$0xff]
  %v2237 = vld [vmem:[%s3 + $0x8] sm:$0xff]
  %v2238 = vld [vmem:[%s3 + $0x10] sm:$0xff]
  %v2239 = vld [vmem:[%s3 + $0x18] sm:$0xff]
  %v2240 = vld [vmem:[%s3 + $0x20] sm:$0xff]
  %v2241 = vld [vmem:[%s3 + $0x28] sm:$0xff]
  %v2242 = vld [vmem:[%s3 + $0x30] sm:$0xff]
  %v2243 = vld [vmem:[%s3 + $0x38] sm:$0xff]
  %v2244 = vlaneseq
  %v2245 = vshrl.u32 %v2244, 7
  %v2246 = vsub.s32 0, %v2245
  %v2247 = vrot.slane %v2108, %v2246
  %v2248 = vlaneseq
  %v2249 = vshrl.u32 %v2248, 7
  %v2250 = vsub.s32 0, %v2249
  %v2251 = vrot.slane %v2109, %v2250
  %v2252 = vlaneseq
  %v2253 = vshrl.u32 %v2252, 7
  %v2254 = vsub.s32 0, %v2253
  %v2255 = vrot.slane %v2110, %v2254
  %v2256 = vlaneseq
  %v2257 = vshrl.u32 %v2256, 7
  %v2258 = vsub.s32 0, %v2257
  %v2259 = vrot.slane %v2111, %v2258
  %v2260 = vlaneseq
  %v2261 = vshrl.u32 %v2260, 7
  %v2262 = vsub.s32 0, %v2261
  %v2263 = vrot.slane %v2112, %v2262
  %v2264 = vlaneseq
  %v2265 = vshrl.u32 %v2264, 7
  %v2266 = vsub.s32 0, %v2265
  %v2267 = vrot.slane %v2113, %v2266
  %v2268 = vlaneseq
  %v2269 = vshrl.u32 %v2268, 7
  %v2270 = vsub.s32 0, %v2269
  %v2271 = vrot.slane %v2114, %v2270
  %v2272 = vlaneseq
  %v2273 = vshrl.u32 %v2272, 7
  %v2274 = vsub.s32 0, %v2273
  %v2275 = vrot.slane %v2115, %v2274
  %v2276 = vlaneseq
  %v2277 = vshrl.u32 %v2276, 7
  %v2278 = vsub.s32 0, %v2277
  %v2279 = vrot.slane %v2116, %v2278
  %v2280 = vlaneseq
  %v2281 = vshrl.u32 %v2280, 7
  %v2282 = vsub.s32 0, %v2281
  %v2283 = vrot.slane %v2117, %v2282
  %v2284 = vlaneseq
  %v2285 = vshrl.u32 %v2284, 7
  %v2286 = vsub.s32 0, %v2285
  %v2287 = vrot.slane %v2118, %v2286
  %v2288 = vlaneseq
  %v2289 = vshrl.u32 %v2288, 7
  %v2290 = vsub.s32 0, %v2289
  %v2291 = vrot.slane %v2119, %v2290
  %v2292 = vlaneseq
  %v2293 = vshrl.u32 %v2292, 7
  %v2294 = vsub.s32 0, %v2293
  %v2295 = vrot.slane %v2120, %v2294
  %v2296 = vlaneseq
  %v2297 = vshrl.u32 %v2296, 7
  %v2298 = vsub.s32 0, %v2297
  %v2299 = vrot.slane %v2121, %v2298
  %v2300 = vlaneseq
  %v2301 = vshrl.u32 %v2300, 7
  %v2302 = vsub.s32 0, %v2301
  %v2303 = vrot.slane %v2122, %v2302
  %v2304 = vlaneseq
  %v2305 = vshrl.u32 %v2304, 7
  %v2306 = vsub.s32 0, %v2305
  %v2307 = vrot.slane %v2123, %v2306
  %v2308 = vlaneseq
  %v2309 = vshrl.u32 %v2308, 7
  %v2310 = vsub.s32 0, %v2309
  %v2311 = vrot.slane %v2124, %v2310
  %v2312 = vlaneseq
  %v2313 = vshrl.u32 %v2312, 7
  %v2314 = vsub.s32 0, %v2313
  %v2315 = vrot.slane %v2125, %v2314
  %v2316 = vlaneseq
  %v2317 = vshrl.u32 %v2316, 7
  %v2318 = vsub.s32 0, %v2317
  %v2319 = vrot.slane %v2126, %v2318
  %v2320 = vlaneseq
  %v2321 = vshrl.u32 %v2320, 7
  %v2322 = vsub.s32 0, %v2321
  %v2323 = vrot.slane %v2127, %v2322
  %v2324 = vlaneseq
  %v2325 = vshrl.u32 %v2324, 7
  %v2326 = vsub.s32 0, %v2325
  %v2327 = vrot.slane %v2128, %v2326
  %v2328 = vlaneseq
  %v2329 = vshrl.u32 %v2328, 7
  %v2330 = vsub.s32 0, %v2329
  %v2331 = vrot.slane %v2129, %v2330
  %v2332 = vlaneseq
  %v2333 = vshrl.u32 %v2332, 7
  %v2334 = vsub.s32 0, %v2333
  %v2335 = vrot.slane %v2130, %v2334
  %v2336 = vlaneseq
  %v2337 = vshrl.u32 %v2336, 7
  %v2338 = vsub.s32 0, %v2337
  %v2339 = vrot.slane %v2131, %v2338
  %v2340 = vlaneseq
  %v2341 = vshrl.u32 %v2340, 7
  %v2342 = vsub.s32 0, %v2341
  %v2343 = vrot.slane %v2132, %v2342
  %v2344 = vlaneseq
  %v2345 = vshrl.u32 %v2344, 7
  %v2346 = vsub.s32 0, %v2345
  %v2347 = vrot.slane %v2133, %v2346
  %v2348 = vlaneseq
  %v2349 = vshrl.u32 %v2348, 7
  %v2350 = vsub.s32 0, %v2349
  %v2351 = vrot.slane %v2134, %v2350
  %v2352 = vlaneseq
  %v2353 = vshrl.u32 %v2352, 7
  %v2354 = vsub.s32 0, %v2353
  %v2355 = vrot.slane %v2135, %v2354
  %v2356 = vlaneseq
  %v2357 = vshrl.u32 %v2356, 7
  %v2358 = vsub.s32 0, %v2357
  %v2359 = vrot.slane %v2136, %v2358
  %v2360 = vlaneseq
  %v2361 = vshrl.u32 %v2360, 7
  %v2362 = vsub.s32 0, %v2361
  %v2363 = vrot.slane %v2137, %v2362
  %v2364 = vlaneseq
  %v2365 = vshrl.u32 %v2364, 7
  %v2366 = vsub.s32 0, %v2365
  %v2367 = vrot.slane %v2138, %v2366
  %v2368 = vlaneseq
  %v2369 = vshrl.u32 %v2368, 7
  %v2370 = vsub.s32 0, %v2369
  %v2371 = vrot.slane %v2139, %v2370
  %v2372 = vlaneseq
  %v2373 = vshrl.u32 %v2372, 7
  %v2374 = vsub.s32 0, %v2373
  %v2375 = vrot.slane %v2140, %v2374
  %v2376 = vlaneseq
  %v2377 = vshrl.u32 %v2376, 7
  %v2378 = vsub.s32 0, %v2377
  %v2379 = vrot.slane %v2141, %v2378
  %v2380 = vlaneseq
  %v2381 = vshrl.u32 %v2380, 7
  %v2382 = vsub.s32 0, %v2381
  %v2383 = vrot.slane %v2142, %v2382
  %v2384 = vlaneseq
  %v2385 = vshrl.u32 %v2384, 7
  %v2386 = vsub.s32 0, %v2385
  %v2387 = vrot.slane %v2143, %v2386
  %v2388 = vlaneseq
  %v2389 = vshrl.u32 %v2388, 7
  %v2390 = vsub.s32 0, %v2389
  %v2391 = vrot.slane %v2144, %v2390
  %v2392 = vlaneseq
  %v2393 = vshrl.u32 %v2392, 7
  %v2394 = vsub.s32 0, %v2393
  %v2395 = vrot.slane %v2145, %v2394
  %v2396 = vlaneseq
  %v2397 = vshrl.u32 %v2396, 7
  %v2398 = vsub.s32 0, %v2397
  %v2399 = vrot.slane %v2146, %v2398
  %v2400 = vlaneseq
  %v2401 = vshrl.u32 %v2400, 7
  %v2402 = vsub.s32 0, %v2401
  %v2403 = vrot.slane %v2147, %v2402
  %v2404 = vlaneseq
  %v2405 = vshrl.u32 %v2404, 7
  %v2406 = vsub.s32 0, %v2405
  %v2407 = vrot.slane %v2148, %v2406
  %v2408 = vlaneseq
  %v2409 = vshrl.u32 %v2408, 7
  %v2410 = vsub.s32 0, %v2409
  %v2411 = vrot.slane %v2149, %v2410
  %v2412 = vlaneseq
  %v2413 = vshrl.u32 %v2412, 7
  %v2414 = vsub.s32 0, %v2413
  %v2415 = vrot.slane %v2150, %v2414
  %v2416 = vlaneseq
  %v2417 = vshrl.u32 %v2416, 7
  %v2418 = vsub.s32 0, %v2417
  %v2419 = vrot.slane %v2151, %v2418
  %v2420 = vlaneseq
  %v2421 = vshrl.u32 %v2420, 7
  %v2422 = vsub.s32 0, %v2421
  %v2423 = vrot.slane %v2152, %v2422
  %v2424 = vlaneseq
  %v2425 = vshrl.u32 %v2424, 7
  %v2426 = vsub.s32 0, %v2425
  %v2427 = vrot.slane %v2153, %v2426
  %v2428 = vlaneseq
  %v2429 = vshrl.u32 %v2428, 7
  %v2430 = vsub.s32 0, %v2429
  %v2431 = vrot.slane %v2154, %v2430
  %v2432 = vlaneseq
  %v2433 = vshrl.u32 %v2432, 7
  %v2434 = vsub.s32 0, %v2433
  %v2435 = vrot.slane %v2155, %v2434
  %v2436 = vlaneseq
  %v2437 = vshrl.u32 %v2436, 7
  %v2438 = vsub.s32 0, %v2437
  %v2439 = vrot.slane %v2156, %v2438
  %v2440 = vlaneseq
  %v2441 = vshrl.u32 %v2440, 7
  %v2442 = vsub.s32 0, %v2441
  %v2443 = vrot.slane %v2157, %v2442
  %v2444 = vlaneseq
  %v2445 = vshrl.u32 %v2444, 7
  %v2446 = vsub.s32 0, %v2445
  %v2447 = vrot.slane %v2158, %v2446
  %v2448 = vlaneseq
  %v2449 = vshrl.u32 %v2448, 7
  %v2450 = vsub.s32 0, %v2449
  %v2451 = vrot.slane %v2159, %v2450
  %v2452 = vlaneseq
  %v2453 = vshrl.u32 %v2452, 7
  %v2454 = vsub.s32 0, %v2453
  %v2455 = vrot.slane %v2160, %v2454
  %v2456 = vlaneseq
  %v2457 = vshrl.u32 %v2456, 7
  %v2458 = vsub.s32 0, %v2457
  %v2459 = vrot.slane %v2161, %v2458
  %v2460 = vlaneseq
  %v2461 = vshrl.u32 %v2460, 7
  %v2462 = vsub.s32 0, %v2461
  %v2463 = vrot.slane %v2162, %v2462
  %v2464 = vlaneseq
  %v2465 = vshrl.u32 %v2464, 7
  %v2466 = vsub.s32 0, %v2465
  %v2467 = vrot.slane %v2163, %v2466
  %v2468 = vlaneseq
  %v2469 = vshrl.u32 %v2468, 7
  %v2470 = vsub.s32 0, %v2469
  %v2471 = vrot.slane %v2164, %v2470
  %v2472 = vlaneseq
  %v2473 = vshrl.u32 %v2472, 7
  %v2474 = vsub.s32 0, %v2473
  %v2475 = vrot.slane %v2165, %v2474
  %v2476 = vlaneseq
  %v2477 = vshrl.u32 %v2476, 7
  %v2478 = vsub.s32 0, %v2477
  %v2479 = vrot.slane %v2166, %v2478
  %v2480 = vlaneseq
  %v2481 = vshrl.u32 %v2480, 7
  %v2482 = vsub.s32 0, %v2481
  %v2483 = vrot.slane %v2167, %v2482
  %v2484 = vlaneseq
  %v2485 = vshrl.u32 %v2484, 7
  %v2486 = vsub.s32 0, %v2485
  %v2487 = vrot.slane %v2168, %v2486
  %v2488 = vlaneseq
  %v2489 = vshrl.u32 %v2488, 7
  %v2490 = vsub.s32 0, %v2489
  %v2491 = vrot.slane %v2169, %v2490
  %v2492 = vlaneseq
  %v2493 = vshrl.u32 %v2492, 7
  %v2494 = vsub.s32 0, %v2493
  %v2495 = vrot.slane %v2170, %v2494
  %v2496 = vlaneseq
  %v2497 = vshrl.u32 %v2496, 7
  %v2498 = vsub.s32 0, %v2497
  %v2499 = vrot.slane %v2171, %v2498
  %2564 = vrot.lane.b32.xlu0 %v2247, 96
  %v2565 = vpop.permute.xlu0 %2564
  %2566 = vrot.lane.b32.xlu0 %v2251, 96
  %v2567 = vpop.permute.xlu0 %2566
  %2568 = vrot.lane.b32.xlu0 %v2255, 96
  %v2569 = vpop.permute.xlu0 %2568
  %2570 = vrot.lane.b32.xlu0 %v2259, 96
  %v2571 = vpop.permute.xlu0 %2570
  %2572 = vrot.lane.b32.xlu0 %v2263, 96
  %v2573 = vpop.permute.xlu0 %2572
  %2574 = vrot.lane.b32.xlu0 %v2267, 96
  %v2575 = vpop.permute.xlu0 %2574
  %2576 = vrot.lane.b32.xlu0 %v2271, 96
  %v2577 = vpop.permute.xlu0 %2576
  %2578 = vrot.lane.b32.xlu0 %v2275, 96
  %v2579 = vpop.permute.xlu0 %2578
  %2580 = vrot.lane.b32.xlu0 %v2279, 96
  %v2581 = vpop.permute.xlu0 %2580
  %2582 = vrot.lane.b32.xlu0 %v2283, 96
  %v2583 = vpop.permute.xlu0 %2582
  %2584 = vrot.lane.b32.xlu0 %v2287, 96
  %v2585 = vpop.permute.xlu0 %2584
  %2586 = vrot.lane.b32.xlu0 %v2291, 96
  %v2587 = vpop.permute.xlu0 %2586
  %2588 = vrot.lane.b32.xlu0 %v2295, 96
  %v2589 = vpop.permute.xlu0 %2588
  %2590 = vrot.lane.b32.xlu0 %v2299, 96
  %v2591 = vpop.permute.xlu0 %2590
  %2592 = vrot.lane.b32.xlu0 %v2303, 96
  %v2593 = vpop.permute.xlu0 %2592
  %2594 = vrot.lane.b32.xlu0 %v2307, 96
  %v2595 = vpop.permute.xlu0 %2594
  %2596 = vrot.lane.b32.xlu0 %v2311, 96
  %v2597 = vpop.permute.xlu0 %2596
  %2598 = vrot.lane.b32.xlu0 %v2315, 96
  %v2599 = vpop.permute.xlu0 %2598
  %2600 = vrot.lane.b32.xlu0 %v2319, 96
  %v2601 = vpop.permute.xlu0 %2600
  %2602 = vrot.lane.b32.xlu0 %v2323, 96
  %v2603 = vpop.permute.xlu0 %2602
  %2604 = vrot.lane.b32.xlu0 %v2327, 96
  %v2605 = vpop.permute.xlu0 %2604
  %2606 = vrot.lane.b32.xlu0 %v2331, 96
  %v2607 = vpop.permute.xlu0 %2606
  %2608 = vrot.lane.b32.xlu0 %v2335, 96
  %v2609 = vpop.permute.xlu0 %2608
  %2610 = vrot.lane.b32.xlu0 %v2339, 96
  %v2611 = vpop.permute.xlu0 %2610
  %2612 = vrot.lane.b32.xlu0 %v2343, 96
  %v2613 = vpop.permute.xlu0 %2612
  %2614 = vrot.lane.b32.xlu0 %v2347, 96
  %v2615 = vpop.permute.xlu0 %2614
  %2616 = vrot.lane.b32.xlu0 %v2351, 96
  %v2617 = vpop.permute.xlu0 %2616
  %2618 = vrot.lane.b32.xlu0 %v2355, 96
  %v2619 = vpop.permute.xlu0 %2618
  %2620 = vrot.lane.b32.xlu0 %v2359, 96
  %v2621 = vpop.permute.xlu0 %2620
  %2622 = vrot.lane.b32.xlu0 %v2363, 96
  %v2623 = vpop.permute.xlu0 %2622
  %2624 = vrot.lane.b32.xlu0 %v2367, 96
  %v2625 = vpop.permute.xlu0 %2624
  %2626 = vrot.lane.b32.xlu0 %v2371, 96
  %v2627 = vpop.permute.xlu0 %2626
  %2628 = vrot.lane.b32.xlu0 %v2375, 96
  %v2629 = vpop.permute.xlu0 %2628
  %2630 = vrot.lane.b32.xlu0 %v2379, 96
  %v2631 = vpop.permute.xlu0 %2630
  %2632 = vrot.lane.b32.xlu0 %v2383, 96
  %v2633 = vpop.permute.xlu0 %2632
  %2634 = vrot.lane.b32.xlu0 %v2387, 96
  %v2635 = vpop.permute.xlu0 %2634
  %2636 = vrot.lane.b32.xlu0 %v2391, 96
  %v2637 = vpop.permute.xlu0 %2636
  %2638 = vrot.lane.b32.xlu0 %v2395, 96
  %v2639 = vpop.permute.xlu0 %2638
  %2640 = vrot.lane.b32.xlu0 %v2399, 96
  %v2641 = vpop.permute.xlu0 %2640
  %2642 = vrot.lane.b32.xlu0 %v2403, 96
  %v2643 = vpop.permute.xlu0 %2642
  %2644 = vrot.lane.b32.xlu0 %v2407, 96
  %v2645 = vpop.permute.xlu0 %2644
  %2646 = vrot.lane.b32.xlu0 %v2411, 96
  %v2647 = vpop.permute.xlu0 %2646
  %2648 = vrot.lane.b32.xlu0 %v2415, 96
  %v2649 = vpop.permute.xlu0 %2648
  %2650 = vrot.lane.b32.xlu0 %v2419, 96
  %v2651 = vpop.permute.xlu0 %2650
  %2652 = vrot.lane.b32.xlu0 %v2423, 96
  %v2653 = vpop.permute.xlu0 %2652
  %2654 = vrot.lane.b32.xlu0 %v2427, 96
  %v2655 = vpop.permute.xlu0 %2654
  %2656 = vrot.lane.b32.xlu0 %v2431, 96
  %v2657 = vpop.permute.xlu0 %2656
  %2658 = vrot.lane.b32.xlu0 %v2435, 96
  %v2659 = vpop.permute.xlu0 %2658
  %2660 = vrot.lane.b32.xlu0 %v2439, 96
  %v2661 = vpop.permute.xlu0 %2660
  %2662 = vrot.lane.b32.xlu0 %v2443, 96
  %v2663 = vpop.permute.xlu0 %2662
  %2664 = vrot.lane.b32.xlu0 %v2447, 96
  %v2665 = vpop.permute.xlu0 %2664
  %2666 = vrot.lane.b32.xlu0 %v2451, 96
  %v2667 = vpop.permute.xlu0 %2666
  %2668 = vrot.lane.b32.xlu0 %v2455, 96
  %v2669 = vpop.permute.xlu0 %2668
  %2670 = vrot.lane.b32.xlu0 %v2459, 96
  %v2671 = vpop.permute.xlu0 %2670
  %2672 = vrot.lane.b32.xlu0 %v2463, 96
  %v2673 = vpop.permute.xlu0 %2672
  %2674 = vrot.lane.b32.xlu0 %v2467, 96
  %v2675 = vpop.permute.xlu0 %2674
  %2676 = vrot.lane.b32.xlu0 %v2471, 96
  %v2677 = vpop.permute.xlu0 %2676
  %2678 = vrot.lane.b32.xlu0 %v2475, 96
  %v2679 = vpop.permute.xlu0 %2678
  %2680 = vrot.lane.b32.xlu0 %v2479, 96
  %v2681 = vpop.permute.xlu0 %2680
  %2682 = vrot.lane.b32.xlu0 %v2483, 96
  %v2683 = vpop.permute.xlu0 %2682
  %2684 = vrot.lane.b32.xlu0 %v2487, 96
  %v2685 = vpop.permute.xlu0 %2684
  %2686 = vrot.lane.b32.xlu0 %v2491, 96
  %v2687 = vpop.permute.xlu0 %2686
  %2688 = vrot.lane.b32.xlu0 %v2495, 96
  %v2689 = vpop.permute.xlu0 %2688
  %2690 = vrot.lane.b32.xlu0 %v2499, 96
  %v2691 = vpop.permute.xlu0 %2690
  %v2756 = vmul.f32 %v2172, %v2565
  %v2757 = vmul.f32 %v2173, %v2567
  %v2758 = vmul.f32 %v2174, %v2569
  %v2759 = vmul.f32 %v2175, %v2571
  %v2760 = vmul.f32 %v2176, %v2573
  %v2761 = vmul.f32 %v2177, %v2575
  %v2762 = vmul.f32 %v2178, %v2577
  %v2763 = vmul.f32 %v2179, %v2579
  %v2764 = vmul.f32 %v2180, %v2581
  %v2765 = vmul.f32 %v2181, %v2583
  %v2766 = vmul.f32 %v2182, %v2585
  %v2767 = vmul.f32 %v2183, %v2587
  %v2768 = vmul.f32 %v2184, %v2589
  %v2769 = vmul.f32 %v2185, %v2591
  %v2770 = vmul.f32 %v2186, %v2593
  %v2771 = vmul.f32 %v2187, %v2595
  %v2772 = vmul.f32 %v2188, %v2597
  %v2773 = vmul.f32 %v2189, %v2599
  %v2774 = vmul.f32 %v2190, %v2601
  %v2775 = vmul.f32 %v2191, %v2603
  %v2776 = vmul.f32 %v2192, %v2605
  %v2777 = vmul.f32 %v2193, %v2607
  %v2778 = vmul.f32 %v2194, %v2609
  %v2779 = vmul.f32 %v2195, %v2611
  %v2780 = vmul.f32 %v2196, %v2613
  %v2781 = vmul.f32 %v2197, %v2615
  %v2782 = vmul.f32 %v2198, %v2617
  %v2783 = vmul.f32 %v2199, %v2619
  %v2784 = vmul.f32 %v2200, %v2621
  %v2785 = vmul.f32 %v2201, %v2623
  %v2786 = vmul.f32 %v2202, %v2625
  %v2787 = vmul.f32 %v2203, %v2627
  %v2788 = vmul.f32 %v2204, %v2629
  %v2789 = vmul.f32 %v2205, %v2631
  %v2790 = vmul.f32 %v2206, %v2633
  %v2791 = vmul.f32 %v2207, %v2635
  %v2792 = vmul.f32 %v2208, %v2637
  %v2793 = vmul.f32 %v2209, %v2639
  %v2794 = vmul.f32 %v2210, %v2641
  %v2795 = vmul.f32 %v2211, %v2643
  %v2796 = vmul.f32 %v2212, %v2645
  %v2797 = vmul.f32 %v2213, %v2647
  %v2798 = vmul.f32 %v2214, %v2649
  %v2799 = vmul.f32 %v2215, %v2651
  %v2800 = vmul.f32 %v2216, %v2653
  %v2801 = vmul.f32 %v2217, %v2655
  %v2802 = vmul.f32 %v2218, %v2657
  %v2803 = vmul.f32 %v2219, %v2659
  %v2804 = vmul.f32 %v2220, %v2661
  %v2805 = vmul.f32 %v2221, %v2663
  %v2806 = vmul.f32 %v2222, %v2665
  %v2807 = vmul.f32 %v2223, %v2667
  %v2808 = vmul.f32 %v2224, %v2669
  %v2809 = vmul.f32 %v2225, %v2671
  %v2810 = vmul.f32 %v2226, %v2673
  %v2811 = vmul.f32 %v2227, %v2675
  %v2812 = vmul.f32 %v2228, %v2677
  %v2813 = vmul.f32 %v2229, %v2679
  %v2814 = vmul.f32 %v2230, %v2681
  %v2815 = vmul.f32 %v2231, %v2683
  %v2816 = vmul.f32 %v2232, %v2685
  %v2817 = vmul.f32 %v2233, %v2687
  %v2818 = vmul.f32 %v2234, %v2689
  %v2819 = vmul.f32 %v2235, %v2691
  %v2828 = vcombine.high %v2236, %v2236
  %v2830 = vunpack.c.l.s4 1966171168
  %v2831 = vunpack.c.0.s8 %v2830
  %v2832 = vlaneseq
  %v2833 = vshrl.u32 %v2832, 7
  %v2834 = vsub.s32 %v2831, %v2833
  %v2835 = vrot.slane %v2236, %v2834
  %v2837 = vunpack.c.l.s4 1966171168
  %v2838 = vunpack.c.0.s8 %v2837
  %v2839 = vlaneseq
  %v2840 = vshrl.u32 %v2839, 7
  %v2841 = vsub.s32 %v2838, %v2840
  %v2842 = vrot.slane %v2828, %v2841
  %v2843 = vcombine.high %v2835, %v2835
  %v2844 = vcombine.high %v2842, %v2842
  %v2846 = vunpack.c.l.s4 1966171168
  %v2847 = vunpack.c.0.s8 %v2846
  %v2848 = vlaneseq
  %v2849 = vshrl.u32 %v2848, 7
  %v2850 = vsub.s32 %v2847, %v2849
  %v2851 = vrot.slane %v2835, %v2850
  %v2853 = vunpack.c.l.s4 1966171168
  %v2854 = vunpack.c.0.s8 %v2853
  %v2855 = vlaneseq
  %v2856 = vshrl.u32 %v2855, 7
  %v2857 = vsub.s32 %v2854, %v2856
  %v2858 = vrot.slane %v2842, %v2857
  %v2860 = vunpack.c.l.s4 1966171168
  %v2861 = vunpack.c.0.s8 %v2860
  %v2862 = vlaneseq
  %v2863 = vshrl.u32 %v2862, 7
  %v2864 = vsub.s32 %v2861, %v2863
  %v2865 = vrot.slane %v2843, %v2864
  %v2867 = vunpack.c.l.s4 1966171168
  %v2868 = vunpack.c.0.s8 %v2867
  %v2869 = vlaneseq
  %v2870 = vshrl.u32 %v2869, 7
  %v2871 = vsub.s32 %v2868, %v2870
  %v2872 = vrot.slane %v2844, %v2871
  %v2873 = vcombine.high %v2851, %v2851
  %v2874 = vcombine.high %v2858, %v2858
  %v2875 = vcombine.high %v2865, %v2865
  %v2876 = vcombine.high %v2872, %v2872
  %v2877 = vcombine.high %v2237, %v2237
  %v2879 = vunpack.c.l.s4 1966171168
  %v2880 = vunpack.c.0.s8 %v2879
  %v2881 = vlaneseq
  %v2882 = vshrl.u32 %v2881, 7
  %v2883 = vsub.s32 %v2880, %v2882
  %v2884 = vrot.slane %v2237, %v2883
  %v2886 = vunpack.c.l.s4 1966171168
  %v2887 = vunpack.c.0.s8 %v2886
  %v2888 = vlaneseq
  %v2889 = vshrl.u32 %v2888, 7
  %v2890 = vsub.s32 %v2887, %v2889
  %v2891 = vrot.slane %v2877, %v2890
  %v2892 = vcombine.high %v2884, %v2884
  %v2893 = vcombine.high %v2891, %v2891
  %v2895 = vunpack.c.l.s4 1966171168
  %v2896 = vunpack.c.0.s8 %v2895
  %v2897 = vlaneseq
  %v2898 = vshrl.u32 %v2897, 7
  %v2899 = vsub.s32 %v2896, %v2898
  %v2900 = vrot.slane %v2884, %v2899
  %v2902 = vunpack.c.l.s4 1966171168
  %v2903 = vunpack.c.0.s8 %v2902
  %v2904 = vlaneseq
  %v2905 = vshrl.u32 %v2904, 7
  %v2906 = vsub.s32 %v2903, %v2905
  %v2907 = vrot.slane %v2891, %v2906
  %v2909 = vunpack.c.l.s4 1966171168
  %v2910 = vunpack.c.0.s8 %v2909
  %v2911 = vlaneseq
  %v2912 = vshrl.u32 %v2911, 7
  %v2913 = vsub.s32 %v2910, %v2912
  %v2914 = vrot.slane %v2892, %v2913
  %v2916 = vunpack.c.l.s4 1966171168
  %v2917 = vunpack.c.0.s8 %v2916
  %v2918 = vlaneseq
  %v2919 = vshrl.u32 %v2918, 7
  %v2920 = vsub.s32 %v2917, %v2919
  %v2921 = vrot.slane %v2893, %v2920
  %v2922 = vcombine.high %v2900, %v2900
  %v2923 = vcombine.high %v2907, %v2907
  %v2924 = vcombine.high %v2914, %v2914
  %v2925 = vcombine.high %v2921, %v2921
  %v2926 = vcombine.high %v2238, %v2238
  %v2928 = vunpack.c.l.s4 1966171168
  %v2929 = vunpack.c.0.s8 %v2928
  %v2930 = vlaneseq
  %v2931 = vshrl.u32 %v2930, 7
  %v2932 = vsub.s32 %v2929, %v2931
  %v2933 = vrot.slane %v2238, %v2932
  %v2935 = vunpack.c.l.s4 1966171168
  %v2936 = vunpack.c.0.s8 %v2935
  %v2937 = vlaneseq
  %v2938 = vshrl.u32 %v2937, 7
  %v2939 = vsub.s32 %v2936, %v2938
  %v2940 = vrot.slane %v2926, %v2939
  %v2941 = vcombine.high %v2933, %v2933
  %v2942 = vcombine.high %v2940, %v2940
  %v2944 = vunpack.c.l.s4 1966171168
  %v2945 = vunpack.c.0.s8 %v2944
  %v2946 = vlaneseq
  %v2947 = vshrl.u32 %v2946, 7
  %v2948 = vsub.s32 %v2945, %v2947
  %v2949 = vrot.slane %v2933, %v2948
  %v2951 = vunpack.c.l.s4 1966171168
  %v2952 = vunpack.c.0.s8 %v2951
  %v2953 = vlaneseq
  %v2954 = vshrl.u32 %v2953, 7
  %v2955 = vsub.s32 %v2952, %v2954
  %v2956 = vrot.slane %v2940, %v2955
  %v2958 = vunpack.c.l.s4 1966171168
  %v2959 = vunpack.c.0.s8 %v2958
  %v2960 = vlaneseq
  %v2961 = vshrl.u32 %v2960, 7
  %v2962 = vsub.s32 %v2959, %v2961
  %v2963 = vrot.slane %v2941, %v2962
  %v2965 = vunpack.c.l.s4 1966171168
  %v2966 = vunpack.c.0.s8 %v2965
  %v2967 = vlaneseq
  %v2968 = vshrl.u32 %v2967, 7
  %v2969 = vsub.s32 %v2966, %v2968
  %v2970 = vrot.slane %v2942, %v2969
  %v2971 = vcombine.high %v2949, %v2949
  %v2972 = vcombine.high %v2956, %v2956
  %v2973 = vcombine.high %v2963, %v2963
  %v2974 = vcombine.high %v2970, %v2970
  %v2975 = vcombine.high %v2239, %v2239
  %v2977 = vunpack.c.l.s4 1966171168
  %v2978 = vunpack.c.0.s8 %v2977
  %v2979 = vlaneseq
  %v2980 = vshrl.u32 %v2979, 7
  %v2981 = vsub.s32 %v2978, %v2980
  %v2982 = vrot.slane %v2239, %v2981
  %v2984 = vunpack.c.l.s4 1966171168
  %v2985 = vunpack.c.0.s8 %v2984
  %v2986 = vlaneseq
  %v2987 = vshrl.u32 %v2986, 7
  %v2988 = vsub.s32 %v2985, %v2987
  %v2989 = vrot.slane %v2975, %v2988
  %v2990 = vcombine.high %v2982, %v2982
  %v2991 = vcombine.high %v2989, %v2989
  %v2993 = vunpack.c.l.s4 1966171168
  %v2994 = vunpack.c.0.s8 %v2993
  %v2995 = vlaneseq
  %v2996 = vshrl.u32 %v2995, 7
  %v2997 = vsub.s32 %v2994, %v2996
  %v2998 = vrot.slane %v2982, %v2997
  %v3000 = vunpack.c.l.s4 1966171168
  %v3001 = vunpack.c.0.s8 %v3000
  %v3002 = vlaneseq
  %v3003 = vshrl.u32 %v3002, 7
  %v3004 = vsub.s32 %v3001, %v3003
  %v3005 = vrot.slane %v2989, %v3004
  %v3007 = vunpack.c.l.s4 1966171168
  %v3008 = vunpack.c.0.s8 %v3007
  %v3009 = vlaneseq
  %v3010 = vshrl.u32 %v3009, 7
  %v3011 = vsub.s32 %v3008, %v3010
  %v3012 = vrot.slane %v2990, %v3011
  %v3014 = vunpack.c.l.s4 1966171168
  %v3015 = vunpack.c.0.s8 %v3014
  %v3016 = vlaneseq
  %v3017 = vshrl.u32 %v3016, 7
  %v3018 = vsub.s32 %v3015, %v3017
  %v3019 = vrot.slane %v2991, %v3018
  %v3020 = vcombine.high %v2998, %v2998
  %v3021 = vcombine.high %v3005, %v3005
  %v3022 = vcombine.high %v3012, %v3012
  %v3023 = vcombine.high %v3019, %v3019
  %v3024 = vcombine.high %v2240, %v2240
  %v3026 = vunpack.c.l.s4 1966171168
  %v3027 = vunpack.c.0.s8 %v3026
  %v3028 = vlaneseq
  %v3029 = vshrl.u32 %v3028, 7
  %v3030 = vsub.s32 %v3027, %v3029
  %v3031 = vrot.slane %v2240, %v3030
  %v3033 = vunpack.c.l.s4 1966171168
  %v3034 = vunpack.c.0.s8 %v3033
  %v3035 = vlaneseq
  %v3036 = vshrl.u32 %v3035, 7
  %v3037 = vsub.s32 %v3034, %v3036
  %v3038 = vrot.slane %v3024, %v3037
  %v3039 = vcombine.high %v3031, %v3031
  %v3040 = vcombine.high %v3038, %v3038
  %v3042 = vunpack.c.l.s4 1966171168
  %v3043 = vunpack.c.0.s8 %v3042
  %v3044 = vlaneseq
  %v3045 = vshrl.u32 %v3044, 7
  %v3046 = vsub.s32 %v3043, %v3045
  %v3047 = vrot.slane %v3031, %v3046
  %v3049 = vunpack.c.l.s4 1966171168
  %v3050 = vunpack.c.0.s8 %v3049
  %v3051 = vlaneseq
  %v3052 = vshrl.u32 %v3051, 7
  %v3053 = vsub.s32 %v3050, %v3052
  %v3054 = vrot.slane %v3038, %v3053
  %v3056 = vunpack.c.l.s4 1966171168
  %v3057 = vunpack.c.0.s8 %v3056
  %v3058 = vlaneseq
  %v3059 = vshrl.u32 %v3058, 7
  %v3060 = vsub.s32 %v3057, %v3059
  %v3061 = vrot.slane %v3039, %v3060
  %v3063 = vunpack.c.l.s4 1966171168
  %v3064 = vunpack.c.0.s8 %v3063
  %v3065 = vlaneseq
  %v3066 = vshrl.u32 %v3065, 7
  %v3067 = vsub.s32 %v3064, %v3066
  %v3068 = vrot.slane %v3040, %v3067
  %v3069 = vcombine.high %v3047, %v3047
  %v3070 = vcombine.high %v3054, %v3054
  %v3071 = vcombine.high %v3061, %v3061
  %v3072 = vcombine.high %v3068, %v3068
  %v3073 = vcombine.high %v2241, %v2241
  %v3075 = vunpack.c.l.s4 1966171168
  %v3076 = vunpack.c.0.s8 %v3075
  %v3077 = vlaneseq
  %v3078 = vshrl.u32 %v3077, 7
  %v3079 = vsub.s32 %v3076, %v3078
  %v3080 = vrot.slane %v2241, %v3079
  %v3082 = vunpack.c.l.s4 1966171168
  %v3083 = vunpack.c.0.s8 %v3082
  %v3084 = vlaneseq
  %v3085 = vshrl.u32 %v3084, 7
  %v3086 = vsub.s32 %v3083, %v3085
  %v3087 = vrot.slane %v3073, %v3086
  %v3088 = vcombine.high %v3080, %v3080
  %v3089 = vcombine.high %v3087, %v3087
  %v3091 = vunpack.c.l.s4 1966171168
  %v3092 = vunpack.c.0.s8 %v3091
  %v3093 = vlaneseq
  %v3094 = vshrl.u32 %v3093, 7
  %v3095 = vsub.s32 %v3092, %v3094
  %v3096 = vrot.slane %v3080, %v3095
  %v3098 = vunpack.c.l.s4 1966171168
  %v3099 = vunpack.c.0.s8 %v3098
  %v3100 = vlaneseq
  %v3101 = vshrl.u32 %v3100, 7
  %v3102 = vsub.s32 %v3099, %v3101
  %v3103 = vrot.slane %v3087, %v3102
  %v3105 = vunpack.c.l.s4 1966171168
  %v3106 = vunpack.c.0.s8 %v3105
  %v3107 = vlaneseq
  %v3108 = vshrl.u32 %v3107, 7
  %v3109 = vsub.s32 %v3106, %v3108
  %v3110 = vrot.slane %v3088, %v3109
  %v3112 = vunpack.c.l.s4 1966171168
  %v3113 = vunpack.c.0.s8 %v3112
  %v3114 = vlaneseq
  %v3115 = vshrl.u32 %v3114, 7
  %v3116 = vsub.s32 %v3113, %v3115
  %v3117 = vrot.slane %v3089, %v3116
  %v3118 = vcombine.high %v3096, %v3096
  %v3119 = vcombine.high %v3103, %v3103
  %v3120 = vcombine.high %v3110, %v3110
  %v3121 = vcombine.high %v3117, %v3117
  %v3122 = vcombine.high %v2242, %v2242
  %v3124 = vunpack.c.l.s4 1966171168
  %v3125 = vunpack.c.0.s8 %v3124
  %v3126 = vlaneseq
  %v3127 = vshrl.u32 %v3126, 7
  %v3128 = vsub.s32 %v3125, %v3127
  %v3129 = vrot.slane %v2242, %v3128
  %v3131 = vunpack.c.l.s4 1966171168
  %v3132 = vunpack.c.0.s8 %v3131
  %v3133 = vlaneseq
  %v3134 = vshrl.u32 %v3133, 7
  %v3135 = vsub.s32 %v3132, %v3134
  %v3136 = vrot.slane %v3122, %v3135
  %v3137 = vcombine.high %v3129, %v3129
  %v3138 = vcombine.high %v3136, %v3136
  %v3140 = vunpack.c.l.s4 1966171168
  %v3141 = vunpack.c.0.s8 %v3140
  %v3142 = vlaneseq
  %v3143 = vshrl.u32 %v3142, 7
  %v3144 = vsub.s32 %v3141, %v3143
  %v3145 = vrot.slane %v3129, %v3144
  %v3147 = vunpack.c.l.s4 1966171168
  %v3148 = vunpack.c.0.s8 %v3147
  %v3149 = vlaneseq
  %v3150 = vshrl.u32 %v3149, 7
  %v3151 = vsub.s32 %v3148, %v3150
  %v3152 = vrot.slane %v3136, %v3151
  %v3154 = vunpack.c.l.s4 1966171168
  %v3155 = vunpack.c.0.s8 %v3154
  %v3156 = vlaneseq
  %v3157 = vshrl.u32 %v3156, 7
  %v3158 = vsub.s32 %v3155, %v3157
  %v3159 = vrot.slane %v3137, %v3158
  %v3161 = vunpack.c.l.s4 1966171168
  %v3162 = vunpack.c.0.s8 %v3161
  %v3163 = vlaneseq
  %v3164 = vshrl.u32 %v3163, 7
  %v3165 = vsub.s32 %v3162, %v3164
  %v3166 = vrot.slane %v3138, %v3165
  %v3167 = vcombine.high %v3145, %v3145
  %v3168 = vcombine.high %v3152, %v3152
  %v3169 = vcombine.high %v3159, %v3159
  %v3170 = vcombine.high %v3166, %v3166
  %v3171 = vcombine.high %v2243, %v2243
  %v3173 = vunpack.c.l.s4 1966171168
  %v3174 = vunpack.c.0.s8 %v3173
  %v3175 = vlaneseq
  %v3176 = vshrl.u32 %v3175, 7
  %v3177 = vsub.s32 %v3174, %v3176
  %v3178 = vrot.slane %v2243, %v3177
  %v3180 = vunpack.c.l.s4 1966171168
  %v3181 = vunpack.c.0.s8 %v3180
  %v3182 = vlaneseq
  %v3183 = vshrl.u32 %v3182, 7
  %v3184 = vsub.s32 %v3181, %v3183
  %v3185 = vrot.slane %v3171, %v3184
  %v3186 = vcombine.high %v3178, %v3178
  %v3187 = vcombine.high %v3185, %v3185
  %v3189 = vunpack.c.l.s4 1966171168
  %v3190 = vunpack.c.0.s8 %v3189
  %v3191 = vlaneseq
  %v3192 = vshrl.u32 %v3191, 7
  %v3193 = vsub.s32 %v3190, %v3192
  %v3194 = vrot.slane %v3178, %v3193
  %v3196 = vunpack.c.l.s4 1966171168
  %v3197 = vunpack.c.0.s8 %v3196
  %v3198 = vlaneseq
  %v3199 = vshrl.u32 %v3198, 7
  %v3200 = vsub.s32 %v3197, %v3199
  %v3201 = vrot.slane %v3185, %v3200
  %v3203 = vunpack.c.l.s4 1966171168
  %v3204 = vunpack.c.0.s8 %v3203
  %v3205 = vlaneseq
  %v3206 = vshrl.u32 %v3205, 7
  %v3207 = vsub.s32 %v3204, %v3206
  %v3208 = vrot.slane %v3186, %v3207
  %v3210 = vunpack.c.l.s4 1966171168
  %v3211 = vunpack.c.0.s8 %v3210
  %v3212 = vlaneseq
  %v3213 = vshrl.u32 %v3212, 7
  %v3214 = vsub.s32 %v3211, %v3213
  %v3215 = vrot.slane %v3187, %v3214
  %v3216 = vcombine.high %v3194, %v3194
  %v3217 = vcombine.high %v3201, %v3201
  %v3218 = vcombine.high %v3208, %v3208
  %v3219 = vcombine.high %v3215, %v3215
  %v3220 = vlaneseq
  %v3221 = vshrl.u32 %v3220, 7
  %v3222 = vsub.s32 0, %v3221
  %v3223 = vrot.slane %v2851, %v3222
  %v3224 = vlaneseq
  %v3225 = vshrl.u32 %v3224, 7
  %v3226 = vsub.s32 0, %v3225
  %v3227 = vrot.slane %v2865, %v3226
  %v3228 = vlaneseq
  %v3229 = vshrl.u32 %v3228, 7
  %v3230 = vsub.s32 0, %v3229
  %v3231 = vrot.slane %v2873, %v3230
  %v3232 = vlaneseq
  %v3233 = vshrl.u32 %v3232, 7
  %v3234 = vsub.s32 0, %v3233
  %v3235 = vrot.slane %v2875, %v3234
  %v3236 = vlaneseq
  %v3237 = vshrl.u32 %v3236, 7
  %v3238 = vsub.s32 0, %v3237
  %v3239 = vrot.slane %v2858, %v3238
  %v3240 = vlaneseq
  %v3241 = vshrl.u32 %v3240, 7
  %v3242 = vsub.s32 0, %v3241
  %v3243 = vrot.slane %v2872, %v3242
  %v3244 = vlaneseq
  %v3245 = vshrl.u32 %v3244, 7
  %v3246 = vsub.s32 0, %v3245
  %v3247 = vrot.slane %v2874, %v3246
  %v3248 = vlaneseq
  %v3249 = vshrl.u32 %v3248, 7
  %v3250 = vsub.s32 0, %v3249
  %v3251 = vrot.slane %v2876, %v3250
  %v3252 = vlaneseq
  %v3253 = vshrl.u32 %v3252, 7
  %v3254 = vsub.s32 0, %v3253
  %v3255 = vrot.slane %v2900, %v3254
  %v3256 = vlaneseq
  %v3257 = vshrl.u32 %v3256, 7
  %v3258 = vsub.s32 0, %v3257
  %v3259 = vrot.slane %v2914, %v3258
  %v3260 = vlaneseq
  %v3261 = vshrl.u32 %v3260, 7
  %v3262 = vsub.s32 0, %v3261
  %v3263 = vrot.slane %v2922, %v3262
  %v3264 = vlaneseq
  %v3265 = vshrl.u32 %v3264, 7
  %v3266 = vsub.s32 0, %v3265
  %v3267 = vrot.slane %v2924, %v3266
  %v3268 = vlaneseq
  %v3269 = vshrl.u32 %v3268, 7
  %v3270 = vsub.s32 0, %v3269
  %v3271 = vrot.slane %v2907, %v3270
  %v3272 = vlaneseq
  %v3273 = vshrl.u32 %v3272, 7
  %v3274 = vsub.s32 0, %v3273
  %v3275 = vrot.slane %v2921, %v3274
  %v3276 = vlaneseq
  %v3277 = vshrl.u32 %v3276, 7
  %v3278 = vsub.s32 0, %v3277
  %v3279 = vrot.slane %v2923, %v3278
  %v3280 = vlaneseq
  %v3281 = vshrl.u32 %v3280, 7
  %v3282 = vsub.s32 0, %v3281
  %v3283 = vrot.slane %v2925, %v3282
  %v3284 = vlaneseq
  %v3285 = vshrl.u32 %v3284, 7
  %v3286 = vsub.s32 0, %v3285
  %v3287 = vrot.slane %v2949, %v3286
  %v3288 = vlaneseq
  %v3289 = vshrl.u32 %v3288, 7
  %v3290 = vsub.s32 0, %v3289
  %v3291 = vrot.slane %v2963, %v3290
  %v3292 = vlaneseq
  %v3293 = vshrl.u32 %v3292, 7
  %v3294 = vsub.s32 0, %v3293
  %v3295 = vrot.slane %v2971, %v3294
  %v3296 = vlaneseq
  %v3297 = vshrl.u32 %v3296, 7
  %v3298 = vsub.s32 0, %v3297
  %v3299 = vrot.slane %v2973, %v3298
  %v3300 = vlaneseq
  %v3301 = vshrl.u32 %v3300, 7
  %v3302 = vsub.s32 0, %v3301
  %v3303 = vrot.slane %v2956, %v3302
  %v3304 = vlaneseq
  %v3305 = vshrl.u32 %v3304, 7
  %v3306 = vsub.s32 0, %v3305
  %v3307 = vrot.slane %v2970, %v3306
  %v3308 = vlaneseq
  %v3309 = vshrl.u32 %v3308, 7
  %v3310 = vsub.s32 0, %v3309
  %v3311 = vrot.slane %v2972, %v3310
  %v3312 = vlaneseq
  %v3313 = vshrl.u32 %v3312, 7
  %v3314 = vsub.s32 0, %v3313
  %v3315 = vrot.slane %v2974, %v3314
  %v3316 = vlaneseq
  %v3317 = vshrl.u32 %v3316, 7
  %v3318 = vsub.s32 0, %v3317
  %v3319 = vrot.slane %v2998, %v3318
  %v3320 = vlaneseq
  %v3321 = vshrl.u32 %v3320, 7
  %v3322 = vsub.s32 0, %v3321
  %v3323 = vrot.slane %v3012, %v3322
  %v3324 = vlaneseq
  %v3325 = vshrl.u32 %v3324, 7
  %v3326 = vsub.s32 0, %v3325
  %v3327 = vrot.slane %v3020, %v3326
  %v3328 = vlaneseq
  %v3329 = vshrl.u32 %v3328, 7
  %v3330 = vsub.s32 0, %v3329
  %v3331 = vrot.slane %v3022, %v3330
  %v3332 = vlaneseq
  %v3333 = vshrl.u32 %v3332, 7
  %v3334 = vsub.s32 0, %v3333
  %v3335 = vrot.slane %v3005, %v3334
  %v3336 = vlaneseq
  %v3337 = vshrl.u32 %v3336, 7
  %v3338 = vsub.s32 0, %v3337
  %v3339 = vrot.slane %v3019, %v3338
  %v3340 = vlaneseq
  %v3341 = vshrl.u32 %v3340, 7
  %v3342 = vsub.s32 0, %v3341
  %v3343 = vrot.slane %v3021, %v3342
  %v3344 = vlaneseq
  %v3345 = vshrl.u32 %v3344, 7
  %v3346 = vsub.s32 0, %v3345
  %v3347 = vrot.slane %v3023, %v3346
  %v3348 = vlaneseq
  %v3349 = vshrl.u32 %v3348, 7
  %v3350 = vsub.s32 0, %v3349
  %v3351 = vrot.slane %v3047, %v3350
  %v3352 = vlaneseq
  %v3353 = vshrl.u32 %v3352, 7
  %v3354 = vsub.s32 0, %v3353
  %v3355 = vrot.slane %v3061, %v3354
  %v3356 = vlaneseq
  %v3357 = vshrl.u32 %v3356, 7
  %v3358 = vsub.s32 0, %v3357
  %v3359 = vrot.slane %v3069, %v3358
  %v3360 = vlaneseq
  %v3361 = vshrl.u32 %v3360, 7
  %v3362 = vsub.s32 0, %v3361
  %v3363 = vrot.slane %v3071, %v3362
  %v3364 = vlaneseq
  %v3365 = vshrl.u32 %v3364, 7
  %v3366 = vsub.s32 0, %v3365
  %v3367 = vrot.slane %v3054, %v3366
  %v3368 = vlaneseq
  %v3369 = vshrl.u32 %v3368, 7
  %v3370 = vsub.s32 0, %v3369
  %v3371 = vrot.slane %v3068, %v3370
  %v3372 = vlaneseq
  %v3373 = vshrl.u32 %v3372, 7
  %v3374 = vsub.s32 0, %v3373
  %v3375 = vrot.slane %v3070, %v3374
  %v3376 = vlaneseq
  %v3377 = vshrl.u32 %v3376, 7
  %v3378 = vsub.s32 0, %v3377
  %v3379 = vrot.slane %v3072, %v3378
  %v3380 = vlaneseq
  %v3381 = vshrl.u32 %v3380, 7
  %v3382 = vsub.s32 0, %v3381
  %v3383 = vrot.slane %v3096, %v3382
  %v3384 = vlaneseq
  %v3385 = vshrl.u32 %v3384, 7
  %v3386 = vsub.s32 0, %v3385
  %v3387 = vrot.slane %v3110, %v3386
  %v3388 = vlaneseq
  %v3389 = vshrl.u32 %v3388, 7
  %v3390 = vsub.s32 0, %v3389
  %v3391 = vrot.slane %v3118, %v3390
  %v3392 = vlaneseq
  %v3393 = vshrl.u32 %v3392, 7
  %v3394 = vsub.s32 0, %v3393
  %v3395 = vrot.slane %v3120, %v3394
  %v3396 = vlaneseq
  %v3397 = vshrl.u32 %v3396, 7
  %v3398 = vsub.s32 0, %v3397
  %v3399 = vrot.slane %v3103, %v3398
  %v3400 = vlaneseq
  %v3401 = vshrl.u32 %v3400, 7
  %v3402 = vsub.s32 0, %v3401
  %v3403 = vrot.slane %v3117, %v3402
  %v3404 = vlaneseq
  %v3405 = vshrl.u32 %v3404, 7
  %v3406 = vsub.s32 0, %v3405
  %v3407 = vrot.slane %v3119, %v3406
  %v3408 = vlaneseq
  %v3409 = vshrl.u32 %v3408, 7
  %v3410 = vsub.s32 0, %v3409
  %v3411 = vrot.slane %v3121, %v3410
  %v3412 = vlaneseq
  %v3413 = vshrl.u32 %v3412, 7
  %v3414 = vsub.s32 0, %v3413
  %v3415 = vrot.slane %v3145, %v3414
  %v3416 = vlaneseq
  %v3417 = vshrl.u32 %v3416, 7
  %v3418 = vsub.s32 0, %v3417
  %v3419 = vrot.slane %v3159, %v3418
  %v3420 = vlaneseq
  %v3421 = vshrl.u32 %v3420, 7
  %v3422 = vsub.s32 0, %v3421
  %v3423 = vrot.slane %v3167, %v3422
  %v3424 = vlaneseq
  %v3425 = vshrl.u32 %v3424, 7
  %v3426 = vsub.s32 0, %v3425
  %v3427 = vrot.slane %v3169, %v3426
  %v3428 = vlaneseq
  %v3429 = vshrl.u32 %v3428, 7
  %v3430 = vsub.s32 0, %v3429
  %v3431 = vrot.slane %v3152, %v3430
  %v3432 = vlaneseq
  %v3433 = vshrl.u32 %v3432, 7
  %v3434 = vsub.s32 0, %v3433
  %v3435 = vrot.slane %v3166, %v3434
  %v3436 = vlaneseq
  %v3437 = vshrl.u32 %v3436, 7
  %v3438 = vsub.s32 0, %v3437
  %v3439 = vrot.slane %v3168, %v3438
  %v3440 = vlaneseq
  %v3441 = vshrl.u32 %v3440, 7
  %v3442 = vsub.s32 0, %v3441
  %v3443 = vrot.slane %v3170, %v3442
  %v3444 = vlaneseq
  %v3445 = vshrl.u32 %v3444, 7
  %v3446 = vsub.s32 0, %v3445
  %v3447 = vrot.slane %v3194, %v3446
  %v3448 = vlaneseq
  %v3449 = vshrl.u32 %v3448, 7
  %v3450 = vsub.s32 0, %v3449
  %v3451 = vrot.slane %v3208, %v3450
  %v3452 = vlaneseq
  %v3453 = vshrl.u32 %v3452, 7
  %v3454 = vsub.s32 0, %v3453
  %v3455 = vrot.slane %v3216, %v3454
  %v3456 = vlaneseq
  %v3457 = vshrl.u32 %v3456, 7
  %v3458 = vsub.s32 0, %v3457
  %v3459 = vrot.slane %v3218, %v3458
  %v3460 = vlaneseq
  %v3461 = vshrl.u32 %v3460, 7
  %v3462 = vsub.s32 0, %v3461
  %v3463 = vrot.slane %v3201, %v3462
  %v3464 = vlaneseq
  %v3465 = vshrl.u32 %v3464, 7
  %v3466 = vsub.s32 0, %v3465
  %v3467 = vrot.slane %v3215, %v3466
  %v3468 = vlaneseq
  %v3469 = vshrl.u32 %v3468, 7
  %v3470 = vsub.s32 0, %v3469
  %v3471 = vrot.slane %v3217, %v3470
  %v3472 = vlaneseq
  %v3473 = vshrl.u32 %v3472, 7
  %v3474 = vsub.s32 0, %v3473
  %v3475 = vrot.slane %v3219, %v3474
  %3476 = vrot.lane.b32.xlu0 %v3223, 32
  %v3477 = vpop.permute.xlu0 %3476
  %3478 = vrot.lane.b32.xlu0 %v3227, 32
  %v3479 = vpop.permute.xlu0 %3478
  %3480 = vrot.lane.b32.xlu0 %v3231, 32
  %v3481 = vpop.permute.xlu0 %3480
  %3482 = vrot.lane.b32.xlu0 %v3235, 32
  %v3483 = vpop.permute.xlu0 %3482
  %3484 = vrot.lane.b32.xlu0 %v3239, 32
  %v3485 = vpop.permute.xlu0 %3484
  %3486 = vrot.lane.b32.xlu0 %v3243, 32
  %v3487 = vpop.permute.xlu0 %3486
  %3488 = vrot.lane.b32.xlu0 %v3247, 32
  %v3489 = vpop.permute.xlu0 %3488
  %3490 = vrot.lane.b32.xlu0 %v3251, 32
  %v3491 = vpop.permute.xlu0 %3490
  %3492 = vrot.lane.b32.xlu0 %v3255, 32
  %v3493 = vpop.permute.xlu0 %3492
  %3494 = vrot.lane.b32.xlu0 %v3259, 32
  %v3495 = vpop.permute.xlu0 %3494
  %3496 = vrot.lane.b32.xlu0 %v3263, 32
  %v3497 = vpop.permute.xlu0 %3496
  %3498 = vrot.lane.b32.xlu0 %v3267, 32
  %v3499 = vpop.permute.xlu0 %3498
  %3500 = vrot.lane.b32.xlu0 %v3271, 32
  %v3501 = vpop.permute.xlu0 %3500
  %3502 = vrot.lane.b32.xlu0 %v3275, 32
  %v3503 = vpop.permute.xlu0 %3502
  %3504 = vrot.lane.b32.xlu0 %v3279, 32
  %v3505 = vpop.permute.xlu0 %3504
  %3506 = vrot.lane.b32.xlu0 %v3283, 32
  %v3507 = vpop.permute.xlu0 %3506
  %3508 = vrot.lane.b32.xlu0 %v3287, 32
  %v3509 = vpop.permute.xlu0 %3508
  %3510 = vrot.lane.b32.xlu0 %v3291, 32
  %v3511 = vpop.permute.xlu0 %3510
  %3512 = vrot.lane.b32.xlu0 %v3295, 32
  %v3513 = vpop.permute.xlu0 %3512
  %3514 = vrot.lane.b32.xlu0 %v3299, 32
  %v3515 = vpop.permute.xlu0 %3514
  %3516 = vrot.lane.b32.xlu0 %v3303, 32
  %v3517 = vpop.permute.xlu0 %3516
  %3518 = vrot.lane.b32.xlu0 %v3307, 32
  %v3519 = vpop.permute.xlu0 %3518
  %3520 = vrot.lane.b32.xlu0 %v3311, 32
  %v3521 = vpop.permute.xlu0 %3520
  %3522 = vrot.lane.b32.xlu0 %v3315, 32
  %v3523 = vpop.permute.xlu0 %3522
  %3524 = vrot.lane.b32.xlu0 %v3319, 32
  %v3525 = vpop.permute.xlu0 %3524
  %3526 = vrot.lane.b32.xlu0 %v3323, 32
  %v3527 = vpop.permute.xlu0 %3526
  %3528 = vrot.lane.b32.xlu0 %v3327, 32
  %v3529 = vpop.permute.xlu0 %3528
  %3530 = vrot.lane.b32.xlu0 %v3331, 32
  %v3531 = vpop.permute.xlu0 %3530
  %3532 = vrot.lane.b32.xlu0 %v3335, 32
  %v3533 = vpop.permute.xlu0 %3532
  %3534 = vrot.lane.b32.xlu0 %v3339, 32
  %v3535 = vpop.permute.xlu0 %3534
  %3536 = vrot.lane.b32.xlu0 %v3343, 32
  %v3537 = vpop.permute.xlu0 %3536
  %3538 = vrot.lane.b32.xlu0 %v3347, 32
  %v3539 = vpop.permute.xlu0 %3538
  %3540 = vrot.lane.b32.xlu0 %v3351, 32
  %v3541 = vpop.permute.xlu0 %3540
  %3542 = vrot.lane.b32.xlu0 %v3355, 32
  %v3543 = vpop.permute.xlu0 %3542
  %3544 = vrot.lane.b32.xlu0 %v3359, 32
  %v3545 = vpop.permute.xlu0 %3544
  %3546 = vrot.lane.b32.xlu0 %v3363, 32
  %v3547 = vpop.permute.xlu0 %3546
  %3548 = vrot.lane.b32.xlu0 %v3367, 32
  %v3549 = vpop.permute.xlu0 %3548
  %3550 = vrot.lane.b32.xlu0 %v3371, 32
  %v3551 = vpop.permute.xlu0 %3550
  %3552 = vrot.lane.b32.xlu0 %v3375, 32
  %v3553 = vpop.permute.xlu0 %3552
  %3554 = vrot.lane.b32.xlu0 %v3379, 32
  %v3555 = vpop.permute.xlu0 %3554
  %3556 = vrot.lane.b32.xlu0 %v3383, 32
  %v3557 = vpop.permute.xlu0 %3556
  %3558 = vrot.lane.b32.xlu0 %v3387, 32
  %v3559 = vpop.permute.xlu0 %3558
  %3560 = vrot.lane.b32.xlu0 %v3391, 32
  %v3561 = vpop.permute.xlu0 %3560
  %3562 = vrot.lane.b32.xlu0 %v3395, 32
  %v3563 = vpop.permute.xlu0 %3562
  %3564 = vrot.lane.b32.xlu0 %v3399, 32
  %v3565 = vpop.permute.xlu0 %3564
  %3566 = vrot.lane.b32.xlu0 %v3403, 32
  %v3567 = vpop.permute.xlu0 %3566
  %3568 = vrot.lane.b32.xlu0 %v3407, 32
  %v3569 = vpop.permute.xlu0 %3568
  %3570 = vrot.lane.b32.xlu0 %v3411, 32
  %v3571 = vpop.permute.xlu0 %3570
  %3572 = vrot.lane.b32.xlu0 %v3415, 32
  %v3573 = vpop.permute.xlu0 %3572
  %3574 = vrot.lane.b32.xlu0 %v3419, 32
  %v3575 = vpop.permute.xlu0 %3574
  %3576 = vrot.lane.b32.xlu0 %v3423, 32
  %v3577 = vpop.permute.xlu0 %3576
  %3578 = vrot.lane.b32.xlu0 %v3427, 32
  %v3579 = vpop.permute.xlu0 %3578
  %3580 = vrot.lane.b32.xlu0 %v3431, 32
  %v3581 = vpop.permute.xlu0 %3580
  %3582 = vrot.lane.b32.xlu0 %v3435, 32
  %v3583 = vpop.permute.xlu0 %3582
  %3584 = vrot.lane.b32.xlu0 %v3439, 32
  %v3585 = vpop.permute.xlu0 %3584
  %3586 = vrot.lane.b32.xlu0 %v3443, 32
  %v3587 = vpop.permute.xlu0 %3586
  %3588 = vrot.lane.b32.xlu0 %v3447, 32
  %v3589 = vpop.permute.xlu0 %3588
  %3590 = vrot.lane.b32.xlu0 %v3451, 32
  %v3591 = vpop.permute.xlu0 %3590
  %3592 = vrot.lane.b32.xlu0 %v3455, 32
  %v3593 = vpop.permute.xlu0 %3592
  %3594 = vrot.lane.b32.xlu0 %v3459, 32
  %v3595 = vpop.permute.xlu0 %3594
  %3596 = vrot.lane.b32.xlu0 %v3463, 32
  %v3597 = vpop.permute.xlu0 %3596
  %3598 = vrot.lane.b32.xlu0 %v3467, 32
  %v3599 = vpop.permute.xlu0 %3598
  %3600 = vrot.lane.b32.xlu0 %v3471, 32
  %v3601 = vpop.permute.xlu0 %3600
  %3602 = vrot.lane.b32.xlu0 %v3475, 32
  %v3603 = vpop.permute.xlu0 %3602
  %v3668 = vmul.f32 %v2172, %v3477
  %v3669 = vmul.f32 %v2173, %v3479
  %v3670 = vmul.f32 %v2174, %v3481
  %v3671 = vmul.f32 %v2175, %v3483
  %v3672 = vmul.f32 %v2176, %v3485
  %v3673 = vmul.f32 %v2177, %v3487
  %v3674 = vmul.f32 %v2178, %v3489
  %v3675 = vmul.f32 %v2179, %v3491
  %v3676 = vmul.f32 %v2180, %v3493
  %v3677 = vmul.f32 %v2181, %v3495
  %v3678 = vmul.f32 %v2182, %v3497
  %v3679 = vmul.f32 %v2183, %v3499
  %v3680 = vmul.f32 %v2184, %v3501
  %v3681 = vmul.f32 %v2185, %v3503
  %v3682 = vmul.f32 %v2186, %v3505
  %v3683 = vmul.f32 %v2187, %v3507
  %v3684 = vmul.f32 %v2188, %v3509
  %v3685 = vmul.f32 %v2189, %v3511
  %v3686 = vmul.f32 %v2190, %v3513
  %v3687 = vmul.f32 %v2191, %v3515
  %v3688 = vmul.f32 %v2192, %v3517
  %v3689 = vmul.f32 %v2193, %v3519
  %v3690 = vmul.f32 %v2194, %v3521
  %v3691 = vmul.f32 %v2195, %v3523
  %v3692 = vmul.f32 %v2196, %v3525
  %v3693 = vmul.f32 %v2197, %v3527
  %v3694 = vmul.f32 %v2198, %v3529
  %v3695 = vmul.f32 %v2199, %v3531
  %v3696 = vmul.f32 %v2200, %v3533
  %v3697 = vmul.f32 %v2201, %v3535
  %v3698 = vmul.f32 %v2202, %v3537
  %v3699 = vmul.f32 %v2203, %v3539
  %v3700 = vmul.f32 %v2204, %v3541
  %v3701 = vmul.f32 %v2205, %v3543
  %v3702 = vmul.f32 %v2206, %v3545
  %v3703 = vmul.f32 %v2207, %v3547
  %v3704 = vmul.f32 %v2208, %v3549
  %v3705 = vmul.f32 %v2209, %v3551
  %v3706 = vmul.f32 %v2210, %v3553
  %v3707 = vmul.f32 %v2211, %v3555
  %v3708 = vmul.f32 %v2212, %v3557
  %v3709 = vmul.f32 %v2213, %v3559
  %v3710 = vmul.f32 %v2214, %v3561
  %v3711 = vmul.f32 %v2215, %v3563
  %v3712 = vmul.f32 %v2216, %v3565
  %v3713 = vmul.f32 %v2217, %v3567
  %v3714 = vmul.f32 %v2218, %v3569
  %v3715 = vmul.f32 %v2219, %v3571
  %v3716 = vmul.f32 %v2220, %v3573
  %v3717 = vmul.f32 %v2221, %v3575
  %v3718 = vmul.f32 %v2222, %v3577
  %v3719 = vmul.f32 %v2223, %v3579
  %v3720 = vmul.f32 %v2224, %v3581
  %v3721 = vmul.f32 %v2225, %v3583
  %v3722 = vmul.f32 %v2226, %v3585
  %v3723 = vmul.f32 %v2227, %v3587
  %v3724 = vmul.f32 %v2228, %v3589
  %v3725 = vmul.f32 %v2229, %v3591
  %v3726 = vmul.f32 %v2230, %v3593
  %v3727 = vmul.f32 %v2231, %v3595
  %v3728 = vmul.f32 %v2232, %v3597
  %v3729 = vmul.f32 %v2233, %v3599
  %v3730 = vmul.f32 %v2234, %v3601
  %v3731 = vmul.f32 %v2235, %v3603
  %3796 = vrot.lane.b32.xlu0 %v3668, 96
  %v3797 = vpop.permute.xlu0 %3796
  %3798 = vrot.lane.b32.xlu0 %v3669, 96
  %v3799 = vpop.permute.xlu0 %3798
  %3800 = vrot.lane.b32.xlu0 %v3670, 96
  %v3801 = vpop.permute.xlu0 %3800
  %3802 = vrot.lane.b32.xlu0 %v3671, 96
  %v3803 = vpop.permute.xlu0 %3802
  %3804 = vrot.lane.b32.xlu0 %v3672, 96
  %v3805 = vpop.permute.xlu0 %3804
  %3806 = vrot.lane.b32.xlu0 %v3673, 96
  %v3807 = vpop.permute.xlu0 %3806
  %3808 = vrot.lane.b32.xlu0 %v3674, 96
  %v3809 = vpop.permute.xlu0 %3808
  %3810 = vrot.lane.b32.xlu0 %v3675, 96
  %v3811 = vpop.permute.xlu0 %3810
  %3812 = vrot.lane.b32.xlu0 %v3676, 96
  %v3813 = vpop.permute.xlu0 %3812
  %3814 = vrot.lane.b32.xlu0 %v3677, 96
  %v3815 = vpop.permute.xlu0 %3814
  %3816 = vrot.lane.b32.xlu0 %v3678, 96
  %v3817 = vpop.permute.xlu0 %3816
  %3818 = vrot.lane.b32.xlu0 %v3679, 96
  %v3819 = vpop.permute.xlu0 %3818
  %3820 = vrot.lane.b32.xlu0 %v3680, 96
  %v3821 = vpop.permute.xlu0 %3820
  %3822 = vrot.lane.b32.xlu0 %v3681, 96
  %v3823 = vpop.permute.xlu0 %3822
  %3824 = vrot.lane.b32.xlu0 %v3682, 96
  %v3825 = vpop.permute.xlu0 %3824
  %3826 = vrot.lane.b32.xlu0 %v3683, 96
  %v3827 = vpop.permute.xlu0 %3826
  %3828 = vrot.lane.b32.xlu0 %v3684, 96
  %v3829 = vpop.permute.xlu0 %3828
  %3830 = vrot.lane.b32.xlu0 %v3685, 96
  %v3831 = vpop.permute.xlu0 %3830
  %3832 = vrot.lane.b32.xlu0 %v3686, 96
  %v3833 = vpop.permute.xlu0 %3832
  %3834 = vrot.lane.b32.xlu0 %v3687, 96
  %v3835 = vpop.permute.xlu0 %3834
  %3836 = vrot.lane.b32.xlu0 %v3688, 96
  %v3837 = vpop.permute.xlu0 %3836
  %3838 = vrot.lane.b32.xlu0 %v3689, 96
  %v3839 = vpop.permute.xlu0 %3838
  %3840 = vrot.lane.b32.xlu0 %v3690, 96
  %v3841 = vpop.permute.xlu0 %3840
  %3842 = vrot.lane.b32.xlu0 %v3691, 96
  %v3843 = vpop.permute.xlu0 %3842
  %3844 = vrot.lane.b32.xlu0 %v3692, 96
  %v3845 = vpop.permute.xlu0 %3844
  %3846 = vrot.lane.b32.xlu0 %v3693, 96
  %v3847 = vpop.permute.xlu0 %3846
  %3848 = vrot.lane.b32.xlu0 %v3694, 96
  %v3849 = vpop.permute.xlu0 %3848
  %3850 = vrot.lane.b32.xlu0 %v3695, 96
  %v3851 = vpop.permute.xlu0 %3850
  %3852 = vrot.lane.b32.xlu0 %v3696, 96
  %v3853 = vpop.permute.xlu0 %3852
  %3854 = vrot.lane.b32.xlu0 %v3697, 96
  %v3855 = vpop.permute.xlu0 %3854
  %3856 = vrot.lane.b32.xlu0 %v3698, 96
  %v3857 = vpop.permute.xlu0 %3856
  %3858 = vrot.lane.b32.xlu0 %v3699, 96
  %v3859 = vpop.permute.xlu0 %3858
  %3860 = vrot.lane.b32.xlu0 %v3700, 96
  %v3861 = vpop.permute.xlu0 %3860
  %3862 = vrot.lane.b32.xlu0 %v3701, 96
  %v3863 = vpop.permute.xlu0 %3862
  %3864 = vrot.lane.b32.xlu0 %v3702, 96
  %v3865 = vpop.permute.xlu0 %3864
  %3866 = vrot.lane.b32.xlu0 %v3703, 96
  %v3867 = vpop.permute.xlu0 %3866
  %3868 = vrot.lane.b32.xlu0 %v3704, 96
  %v3869 = vpop.permute.xlu0 %3868
  %3870 = vrot.lane.b32.xlu0 %v3705, 96
  %v3871 = vpop.permute.xlu0 %3870
  %3872 = vrot.lane.b32.xlu0 %v3706, 96
  %v3873 = vpop.permute.xlu0 %3872
  %3874 = vrot.lane.b32.xlu0 %v3707, 96
  %v3875 = vpop.permute.xlu0 %3874
  %3876 = vrot.lane.b32.xlu0 %v3708, 96
  %v3877 = vpop.permute.xlu0 %3876
  %3878 = vrot.lane.b32.xlu0 %v3709, 96
  %v3879 = vpop.permute.xlu0 %3878
  %3880 = vrot.lane.b32.xlu0 %v3710, 96
  %v3881 = vpop.permute.xlu0 %3880
  %3882 = vrot.lane.b32.xlu0 %v3711, 96
  %v3883 = vpop.permute.xlu0 %3882
  %3884 = vrot.lane.b32.xlu0 %v3712, 96
  %v3885 = vpop.permute.xlu0 %3884
  %3886 = vrot.lane.b32.xlu0 %v3713, 96
  %v3887 = vpop.permute.xlu0 %3886
  %3888 = vrot.lane.b32.xlu0 %v3714, 96
  %v3889 = vpop.permute.xlu0 %3888
  %3890 = vrot.lane.b32.xlu0 %v3715, 96
  %v3891 = vpop.permute.xlu0 %3890
  %3892 = vrot.lane.b32.xlu0 %v3716, 96
  %v3893 = vpop.permute.xlu0 %3892
  %3894 = vrot.lane.b32.xlu0 %v3717, 96
  %v3895 = vpop.permute.xlu0 %3894
  %3896 = vrot.lane.b32.xlu0 %v3718, 96
  %v3897 = vpop.permute.xlu0 %3896
  %3898 = vrot.lane.b32.xlu0 %v3719, 96
  %v3899 = vpop.permute.xlu0 %3898
  %3900 = vrot.lane.b32.xlu0 %v3720, 96
  %v3901 = vpop.permute.xlu0 %3900
  %3902 = vrot.lane.b32.xlu0 %v3721, 96
  %v3903 = vpop.permute.xlu0 %3902
  %3904 = vrot.lane.b32.xlu0 %v3722, 96
  %v3905 = vpop.permute.xlu0 %3904
  %3906 = vrot.lane.b32.xlu0 %v3723, 96
  %v3907 = vpop.permute.xlu0 %3906
  %3908 = vrot.lane.b32.xlu0 %v3724, 96
  %v3909 = vpop.permute.xlu0 %3908
  %3910 = vrot.lane.b32.xlu0 %v3725, 96
  %v3911 = vpop.permute.xlu0 %3910
  %3912 = vrot.lane.b32.xlu0 %v3726, 96
  %v3913 = vpop.permute.xlu0 %3912
  %3914 = vrot.lane.b32.xlu0 %v3727, 96
  %v3915 = vpop.permute.xlu0 %3914
  %3916 = vrot.lane.b32.xlu0 %v3728, 96
  %v3917 = vpop.permute.xlu0 %3916
  %3918 = vrot.lane.b32.xlu0 %v3729, 96
  %v3919 = vpop.permute.xlu0 %3918
  %3920 = vrot.lane.b32.xlu0 %v3730, 96
  %v3921 = vpop.permute.xlu0 %3920
  %3922 = vrot.lane.b32.xlu0 %v3731, 96
  %v3923 = vpop.permute.xlu0 %3922
  %v3988 = vadd.f32 %v2756, %v3797
  %v3989 = vadd.f32 %v2757, %v3799
  %v3990 = vadd.f32 %v2758, %v3801
  %v3991 = vadd.f32 %v2759, %v3803
  %v3992 = vadd.f32 %v2760, %v3805
  %v3993 = vadd.f32 %v2761, %v3807
  %v3994 = vadd.f32 %v2762, %v3809
  %v3995 = vadd.f32 %v2763, %v3811
  %v3996 = vadd.f32 %v2764, %v3813
  %v3997 = vadd.f32 %v2765, %v3815
  %v3998 = vadd.f32 %v2766, %v3817
  %v3999 = vadd.f32 %v2767, %v3819
  %v4000 = vadd.f32 %v2768, %v3821
  %v4001 = vadd.f32 %v2769, %v3823
  %v4002 = vadd.f32 %v2770, %v3825
  %v4003 = vadd.f32 %v2771, %v3827
  %v4004 = vadd.f32 %v2772, %v3829
  %v4005 = vadd.f32 %v2773, %v3831
  %v4006 = vadd.f32 %v2774, %v3833
  %v4007 = vadd.f32 %v2775, %v3835
  %v4008 = vadd.f32 %v2776, %v3837
  %v4009 = vadd.f32 %v2777, %v3839
  %v4010 = vadd.f32 %v2778, %v3841
  %v4011 = vadd.f32 %v2779, %v3843
  %v4012 = vadd.f32 %v2780, %v3845
  %v4013 = vadd.f32 %v2781, %v3847
  %v4014 = vadd.f32 %v2782, %v3849
  %v4015 = vadd.f32 %v2783, %v3851
  %v4016 = vadd.f32 %v2784, %v3853
  %v4017 = vadd.f32 %v2785, %v3855
  %v4018 = vadd.f32 %v2786, %v3857
  %v4019 = vadd.f32 %v2787, %v3859
  %v4020 = vadd.f32 %v2788, %v3861
  %v4021 = vadd.f32 %v2789, %v3863
  %v4022 = vadd.f32 %v2790, %v3865
  %v4023 = vadd.f32 %v2791, %v3867
  %v4024 = vadd.f32 %v2792, %v3869
  %v4025 = vadd.f32 %v2793, %v3871
  %v4026 = vadd.f32 %v2794, %v3873
  %v4027 = vadd.f32 %v2795, %v3875
  %v4028 = vadd.f32 %v2796, %v3877
  %v4029 = vadd.f32 %v2797, %v3879
  %v4030 = vadd.f32 %v2798, %v3881
  %v4031 = vadd.f32 %v2799, %v3883
  %v4032 = vadd.f32 %v2800, %v3885
  %v4033 = vadd.f32 %v2801, %v3887
  %v4034 = vadd.f32 %v2802, %v3889
  %v4035 = vadd.f32 %v2803, %v3891
  %v4036 = vadd.f32 %v2804, %v3893
  %v4037 = vadd.f32 %v2805, %v3895
  %v4038 = vadd.f32 %v2806, %v3897
  %v4039 = vadd.f32 %v2807, %v3899
  %v4040 = vadd.f32 %v2808, %v3901
  %v4041 = vadd.f32 %v2809, %v3903
  %v4042 = vadd.f32 %v2810, %v3905
  %v4043 = vadd.f32 %v2811, %v3907
  %v4044 = vadd.f32 %v2812, %v3909
  %v4045 = vadd.f32 %v2813, %v3911
  %v4046 = vadd.f32 %v2814, %v3913
  %v4047 = vadd.f32 %v2815, %v3915
  %v4048 = vadd.f32 %v2816, %v3917
  %v4049 = vadd.f32 %v2817, %v3919
  %v4050 = vadd.f32 %v2818, %v3921
  %v4051 = vadd.f32 %v2819, %v3923
  %vm4052 = vcmask 259072
  %v4053 = vsel %vm4052, %v3988, 0.0
  %4054 = vadd.xlane.f32.xlu0 %v4053
  %v4055 = vpop.xlane.xlu0 %4054
  %v4056 = vsel %vm4052, %v3989, 0.0
  %4057 = vadd.xlane.f32.xlu0 %v4056
  %v4058 = vpop.xlane.xlu0 %4057
  %v4059 = vsel %vm4052, %v3990, 0.0
  %4060 = vadd.xlane.f32.xlu0 %v4059
  %v4061 = vpop.xlane.xlu0 %4060
  %v4062 = vsel %vm4052, %v3991, 0.0
  %4063 = vadd.xlane.f32.xlu0 %v4062
  %v4064 = vpop.xlane.xlu0 %4063
  %v4065 = vsel %vm4052, %v3992, 0.0
  %4066 = vadd.xlane.f32.xlu0 %v4065
  %v4067 = vpop.xlane.xlu0 %4066
  %v4068 = vsel %vm4052, %v3993, 0.0
  %4069 = vadd.xlane.f32.xlu0 %v4068
  %v4070 = vpop.xlane.xlu0 %4069
  %v4071 = vsel %vm4052, %v3994, 0.0
  %4072 = vadd.xlane.f32.xlu0 %v4071
  %v4073 = vpop.xlane.xlu0 %4072
  %v4074 = vsel %vm4052, %v3995, 0.0
  %4075 = vadd.xlane.f32.xlu0 %v4074
  %v4076 = vpop.xlane.xlu0 %4075
  %v4077 = vsel %vm4052, %v3996, 0.0
  %4078 = vadd.xlane.f32.xlu0 %v4077
  %v4079 = vpop.xlane.xlu0 %4078
  %v4080 = vsel %vm4052, %v3997, 0.0
  %4081 = vadd.xlane.f32.xlu0 %v4080
  %v4082 = vpop.xlane.xlu0 %4081
  %v4083 = vsel %vm4052, %v3998, 0.0
  %4084 = vadd.xlane.f32.xlu0 %v4083
  %v4085 = vpop.xlane.xlu0 %4084
  %v4086 = vsel %vm4052, %v3999, 0.0
  %4087 = vadd.xlane.f32.xlu0 %v4086
  %v4088 = vpop.xlane.xlu0 %4087
  %v4089 = vsel %vm4052, %v4000, 0.0
  %4090 = vadd.xlane.f32.xlu0 %v4089
  %v4091 = vpop.xlane.xlu0 %4090
  %v4092 = vsel %vm4052, %v4001, 0.0
  %4093 = vadd.xlane.f32.xlu0 %v4092
  %v4094 = vpop.xlane.xlu0 %4093
  %v4095 = vsel %vm4052, %v4002, 0.0
  %4096 = vadd.xlane.f32.xlu0 %v4095
  %v4097 = vpop.xlane.xlu0 %4096
  %v4098 = vsel %vm4052, %v4003, 0.0
  %4099 = vadd.xlane.f32.xlu0 %v4098
  %v4100 = vpop.xlane.xlu0 %4099
  %v4101 = vsel %vm4052, %v4004, 0.0
  %4102 = vadd.xlane.f32.xlu0 %v4101
  %v4103 = vpop.xlane.xlu0 %4102
  %v4104 = vsel %vm4052, %v4005, 0.0
  %4105 = vadd.xlane.f32.xlu0 %v4104
  %v4106 = vpop.xlane.xlu0 %4105
  %v4107 = vsel %vm4052, %v4006, 0.0
  %4108 = vadd.xlane.f32.xlu0 %v4107
  %v4109 = vpop.xlane.xlu0 %4108
  %v4110 = vsel %vm4052, %v4007, 0.0
  %4111 = vadd.xlane.f32.xlu0 %v4110
  %v4112 = vpop.xlane.xlu0 %4111
  %v4113 = vsel %vm4052, %v4008, 0.0
  %4114 = vadd.xlane.f32.xlu0 %v4113
  %v4115 = vpop.xlane.xlu0 %4114
  %v4116 = vsel %vm4052, %v4009, 0.0
  %4117 = vadd.xlane.f32.xlu0 %v4116
  %v4118 = vpop.xlane.xlu0 %4117
  %v4119 = vsel %vm4052, %v4010, 0.0
  %4120 = vadd.xlane.f32.xlu0 %v4119
  %v4121 = vpop.xlane.xlu0 %4120
  %v4122 = vsel %vm4052, %v4011, 0.0
  %4123 = vadd.xlane.f32.xlu0 %v4122
  %v4124 = vpop.xlane.xlu0 %4123
  %v4125 = vsel %vm4052, %v4012, 0.0
  %4126 = vadd.xlane.f32.xlu0 %v4125
  %v4127 = vpop.xlane.xlu0 %4126
  %v4128 = vsel %vm4052, %v4013, 0.0
  %4129 = vadd.xlane.f32.xlu0 %v4128
  %v4130 = vpop.xlane.xlu0 %4129
  %v4131 = vsel %vm4052, %v4014, 0.0
  %4132 = vadd.xlane.f32.xlu0 %v4131
  %v4133 = vpop.xlane.xlu0 %4132
  %v4134 = vsel %vm4052, %v4015, 0.0
  %4135 = vadd.xlane.f32.xlu0 %v4134
  %v4136 = vpop.xlane.xlu0 %4135
  %v4137 = vsel %vm4052, %v4016, 0.0
  %4138 = vadd.xlane.f32.xlu0 %v4137
  %v4139 = vpop.xlane.xlu0 %4138
  %v4140 = vsel %vm4052, %v4017, 0.0
  %4141 = vadd.xlane.f32.xlu0 %v4140
  %v4142 = vpop.xlane.xlu0 %4141
  %v4143 = vsel %vm4052, %v4018, 0.0
  %4144 = vadd.xlane.f32.xlu0 %v4143
  %v4145 = vpop.xlane.xlu0 %4144
  %v4146 = vsel %vm4052, %v4019, 0.0
  %4147 = vadd.xlane.f32.xlu0 %v4146
  %v4148 = vpop.xlane.xlu0 %4147
  %v4149 = vsel %vm4052, %v4020, 0.0
  %4150 = vadd.xlane.f32.xlu0 %v4149
  %v4151 = vpop.xlane.xlu0 %4150
  %v4152 = vsel %vm4052, %v4021, 0.0
  %4153 = vadd.xlane.f32.xlu0 %v4152
  %v4154 = vpop.xlane.xlu0 %4153
  %v4155 = vsel %vm4052, %v4022, 0.0
  %4156 = vadd.xlane.f32.xlu0 %v4155
  %v4157 = vpop.xlane.xlu0 %4156
  %v4158 = vsel %vm4052, %v4023, 0.0
  %4159 = vadd.xlane.f32.xlu0 %v4158
  %v4160 = vpop.xlane.xlu0 %4159
  %v4161 = vsel %vm4052, %v4024, 0.0
  %4162 = vadd.xlane.f32.xlu0 %v4161
  %v4163 = vpop.xlane.xlu0 %4162
  %v4164 = vsel %vm4052, %v4025, 0.0
  %4165 = vadd.xlane.f32.xlu0 %v4164
  %v4166 = vpop.xlane.xlu0 %4165
  %v4167 = vsel %vm4052, %v4026, 0.0
  %4168 = vadd.xlane.f32.xlu0 %v4167
  %v4169 = vpop.xlane.xlu0 %4168
  %v4170 = vsel %vm4052, %v4027, 0.0
  %4171 = vadd.xlane.f32.xlu0 %v4170
  %v4172 = vpop.xlane.xlu0 %4171
  %v4173 = vsel %vm4052, %v4028, 0.0
  %4174 = vadd.xlane.f32.xlu0 %v4173
  %v4175 = vpop.xlane.xlu0 %4174
  %v4176 = vsel %vm4052, %v4029, 0.0
  %4177 = vadd.xlane.f32.xlu0 %v4176
  %v4178 = vpop.xlane.xlu0 %4177
  %v4179 = vsel %vm4052, %v4030, 0.0
  %4180 = vadd.xlane.f32.xlu0 %v4179
  %v4181 = vpop.xlane.xlu0 %4180
  %v4182 = vsel %vm4052, %v4031, 0.0
  %4183 = vadd.xlane.f32.xlu0 %v4182
  %v4184 = vpop.xlane.xlu0 %4183
  %v4185 = vsel %vm4052, %v4032, 0.0
  %4186 = vadd.xlane.f32.xlu0 %v4185
  %v4187 = vpop.xlane.xlu0 %4186
  %v4188 = vsel %vm4052, %v4033, 0.0
  %4189 = vadd.xlane.f32.xlu0 %v4188
  %v4190 = vpop.xlane.xlu0 %4189
  %v4191 = vsel %vm4052, %v4034, 0.0
  %4192 = vadd.xlane.f32.xlu0 %v4191
  %v4193 = vpop.xlane.xlu0 %4192
  %v4194 = vsel %vm4052, %v4035, 0.0
  %4195 = vadd.xlane.f32.xlu0 %v4194
  %v4196 = vpop.xlane.xlu0 %4195
  %v4197 = vsel %vm4052, %v4036, 0.0
  %4198 = vadd.xlane.f32.xlu0 %v4197
  %v4199 = vpop.xlane.xlu0 %4198
  %v4200 = vsel %vm4052, %v4037, 0.0
  %4201 = vadd.xlane.f32.xlu0 %v4200
  %v4202 = vpop.xlane.xlu0 %4201
  %v4203 = vsel %vm4052, %v4038, 0.0
  %4204 = vadd.xlane.f32.xlu0 %v4203
  %v4205 = vpop.xlane.xlu0 %4204
  %v4206 = vsel %vm4052, %v4039, 0.0
  %4207 = vadd.xlane.f32.xlu0 %v4206
  %v4208 = vpop.xlane.xlu0 %4207
  %v4209 = vsel %vm4052, %v4040, 0.0
  %4210 = vadd.xlane.f32.xlu0 %v4209
  %v4211 = vpop.xlane.xlu0 %4210
  %v4212 = vsel %vm4052, %v4041, 0.0
  %4213 = vadd.xlane.f32.xlu0 %v4212
  %v4214 = vpop.xlane.xlu0 %4213
  %v4215 = vsel %vm4052, %v4042, 0.0
  %4216 = vadd.xlane.f32.xlu0 %v4215
  %v4217 = vpop.xlane.xlu0 %4216
  %v4218 = vsel %vm4052, %v4043, 0.0
  %4219 = vadd.xlane.f32.xlu0 %v4218
  %v4220 = vpop.xlane.xlu0 %4219
  %v4221 = vsel %vm4052, %v4044, 0.0
  %4222 = vadd.xlane.f32.xlu0 %v4221
  %v4223 = vpop.xlane.xlu0 %4222
  %v4224 = vsel %vm4052, %v4045, 0.0
  %4225 = vadd.xlane.f32.xlu0 %v4224
  %v4226 = vpop.xlane.xlu0 %4225
  %v4227 = vsel %vm4052, %v4046, 0.0
  %4228 = vadd.xlane.f32.xlu0 %v4227
  %v4229 = vpop.xlane.xlu0 %4228
  %v4230 = vsel %vm4052, %v4047, 0.0
  %4231 = vadd.xlane.f32.xlu0 %v4230
  %v4232 = vpop.xlane.xlu0 %4231
  %v4233 = vsel %vm4052, %v4048, 0.0
  %4234 = vadd.xlane.f32.xlu0 %v4233
  %v4235 = vpop.xlane.xlu0 %4234
  %v4236 = vsel %vm4052, %v4049, 0.0
  %4237 = vadd.xlane.f32.xlu0 %v4236
  %v4238 = vpop.xlane.xlu0 %4237
  %v4239 = vsel %vm4052, %v4050, 0.0
  %4240 = vadd.xlane.f32.xlu0 %v4239
  %v4241 = vpop.xlane.xlu0 %4240
  %v4242 = vsel %vm4052, %v4051, 0.0
  %4243 = vadd.xlane.f32.xlu0 %v4242
  %v4244 = vpop.xlane.xlu0 %4243
  %v4245 = vadd.f32 %v4055, %v2172
  %v4246 = vadd.f32 %v4058, %v2173
  %v4247 = vadd.f32 %v4061, %v2174
  %v4248 = vadd.f32 %v4064, %v2175
  %v4249 = vadd.f32 %v4067, %v2176
  %v4250 = vadd.f32 %v4070, %v2177
  %v4251 = vadd.f32 %v4073, %v2178
  %v4252 = vadd.f32 %v4076, %v2179
  %v4253 = vadd.f32 %v4079, %v2180
  %v4254 = vadd.f32 %v4082, %v2181
  %v4255 = vadd.f32 %v4085, %v2182
  %v4256 = vadd.f32 %v4088, %v2183
  %v4257 = vadd.f32 %v4091, %v2184
  %v4258 = vadd.f32 %v4094, %v2185
  %v4259 = vadd.f32 %v4097, %v2186
  %v4260 = vadd.f32 %v4100, %v2187
  %v4261 = vadd.f32 %v4103, %v2188
  %v4262 = vadd.f32 %v4106, %v2189
  %v4263 = vadd.f32 %v4109, %v2190
  %v4264 = vadd.f32 %v4112, %v2191
  %v4265 = vadd.f32 %v4115, %v2192
  %v4266 = vadd.f32 %v4118, %v2193
  %v4267 = vadd.f32 %v4121, %v2194
  %v4268 = vadd.f32 %v4124, %v2195
  %v4269 = vadd.f32 %v4127, %v2196
  %v4270 = vadd.f32 %v4130, %v2197
  %v4271 = vadd.f32 %v4133, %v2198
  %v4272 = vadd.f32 %v4136, %v2199
  %v4273 = vadd.f32 %v4139, %v2200
  %v4274 = vadd.f32 %v4142, %v2201
  %v4275 = vadd.f32 %v4145, %v2202
  %v4276 = vadd.f32 %v4148, %v2203
  %v4277 = vadd.f32 %v4151, %v2204
  %v4278 = vadd.f32 %v4154, %v2205
  %v4279 = vadd.f32 %v4157, %v2206
  %v4280 = vadd.f32 %v4160, %v2207
  %v4281 = vadd.f32 %v4163, %v2208
  %v4282 = vadd.f32 %v4166, %v2209
  %v4283 = vadd.f32 %v4169, %v2210
  %v4284 = vadd.f32 %v4172, %v2211
  %v4285 = vadd.f32 %v4175, %v2212
  %v4286 = vadd.f32 %v4178, %v2213
  %v4287 = vadd.f32 %v4181, %v2214
  %v4288 = vadd.f32 %v4184, %v2215
  %v4289 = vadd.f32 %v4187, %v2216
  %v4290 = vadd.f32 %v4190, %v2217
  %v4291 = vadd.f32 %v4193, %v2218
  %v4292 = vadd.f32 %v4196, %v2219
  %v4293 = vadd.f32 %v4199, %v2220
  %v4294 = vadd.f32 %v4202, %v2221
  %v4295 = vadd.f32 %v4205, %v2222
  %v4296 = vadd.f32 %v4208, %v2223
  %v4297 = vadd.f32 %v4211, %v2224
  %v4298 = vadd.f32 %v4214, %v2225
  %v4299 = vadd.f32 %v4217, %v2226
  %v4300 = vadd.f32 %v4220, %v2227
  %v4301 = vadd.f32 %v4223, %v2228
  %v4302 = vadd.f32 %v4226, %v2229
  %v4303 = vadd.f32 %v4229, %v2230
  %v4304 = vadd.f32 %v4232, %v2231
  %v4305 = vadd.f32 %v4235, %v2232
  %v4306 = vadd.f32 %v4238, %v2233
  %v4307 = vadd.f32 %v4241, %v2234
  %v4308 = vadd.f32 %v4244, %v2235
  %v4309 = vsub.f32 0.0, %v4245
  %v4310 = vsub.f32 0.0, %v4246
  %v4311 = vsub.f32 0.0, %v4247
  %v4312 = vsub.f32 0.0, %v4248
  %v4313 = vsub.f32 0.0, %v4249
  %v4314 = vsub.f32 0.0, %v4250
  %v4315 = vsub.f32 0.0, %v4251
  %v4316 = vsub.f32 0.0, %v4252
  %v4317 = vsub.f32 0.0, %v4253
  %v4318 = vsub.f32 0.0, %v4254
  %v4319 = vsub.f32 0.0, %v4255
  %v4320 = vsub.f32 0.0, %v4256
  %v4321 = vsub.f32 0.0, %v4257
  %v4322 = vsub.f32 0.0, %v4258
  %v4323 = vsub.f32 0.0, %v4259
  %v4324 = vsub.f32 0.0, %v4260
  %v4325 = vsub.f32 0.0, %v4261
  %v4326 = vsub.f32 0.0, %v4262
  %v4327 = vsub.f32 0.0, %v4263
  %v4328 = vsub.f32 0.0, %v4264
  %v4329 = vsub.f32 0.0, %v4265
  %v4330 = vsub.f32 0.0, %v4266
  %v4331 = vsub.f32 0.0, %v4267
  %v4332 = vsub.f32 0.0, %v4268
  %v4333 = vsub.f32 0.0, %v4269
  %v4334 = vsub.f32 0.0, %v4270
  %v4335 = vsub.f32 0.0, %v4271
  %v4336 = vsub.f32 0.0, %v4272
  %v4337 = vsub.f32 0.0, %v4273
  %v4338 = vsub.f32 0.0, %v4274
  %v4339 = vsub.f32 0.0, %v4275
  %v4340 = vsub.f32 0.0, %v4276
  %v4341 = vsub.f32 0.0, %v4277
  %v4342 = vsub.f32 0.0, %v4278
  %v4343 = vsub.f32 0.0, %v4279
  %v4344 = vsub.f32 0.0, %v4280
  %v4345 = vsub.f32 0.0, %v4281
  %v4346 = vsub.f32 0.0, %v4282
  %v4347 = vsub.f32 0.0, %v4283
  %v4348 = vsub.f32 0.0, %v4284
  %v4349 = vsub.f32 0.0, %v4285
  %v4350 = vsub.f32 0.0, %v4286
  %v4351 = vsub.f32 0.0, %v4287
  %v4352 = vsub.f32 0.0, %v4288
  %v4353 = vsub.f32 0.0, %v4289
  %v4354 = vsub.f32 0.0, %v4290
  %v4355 = vsub.f32 0.0, %v4291
  %v4356 = vsub.f32 0.0, %v4292
  %v4357 = vsub.f32 0.0, %v4293
  %v4358 = vsub.f32 0.0, %v4294
  %v4359 = vsub.f32 0.0, %v4295
  %v4360 = vsub.f32 0.0, %v4296
  %v4361 = vsub.f32 0.0, %v4297
  %v4362 = vsub.f32 0.0, %v4298
  %v4363 = vsub.f32 0.0, %v4299
  %v4364 = vsub.f32 0.0, %v4300
  %v4365 = vsub.f32 0.0, %v4301
  %v4366 = vsub.f32 0.0, %v4302
  %v4367 = vsub.f32 0.0, %v4303
  %v4368 = vsub.f32 0.0, %v4304
  %v4369 = vsub.f32 0.0, %v4305
  %v4370 = vsub.f32 0.0, %v4306
  %v4371 = vsub.f32 0.0, %v4307
  %v4372 = vsub.f32 0.0, %v4308
  %v4373 = vmul.f32 %v4309, 1.442695
  %v4374 = vpow.pop %v4373
  %v4375 = vmul.f32 %v4310, 1.442695
  %v4376 = vpow.pop %v4375
  %v4377 = vmul.f32 %v4311, 1.442695
  %v4378 = vpow.pop %v4377
  %v4379 = vmul.f32 %v4312, 1.442695
  %v4380 = vpow.pop %v4379
  %v4381 = vmul.f32 %v4313, 1.442695
  %v4382 = vpow.pop %v4381
  %v4383 = vmul.f32 %v4314, 1.442695
  %v4384 = vpow.pop %v4383
  %v4385 = vmul.f32 %v4315, 1.442695
  %v4386 = vpow.pop %v4385
  %v4387 = vmul.f32 %v4316, 1.442695
  %v4388 = vpow.pop %v4387
  %v4389 = vmul.f32 %v4317, 1.442695
  %v4390 = vpow.pop %v4389
  %v4391 = vmul.f32 %v4318, 1.442695
  %v4392 = vpow.pop %v4391
  %v4393 = vmul.f32 %v4319, 1.442695
  %v4394 = vpow.pop %v4393
  %v4395 = vmul.f32 %v4320, 1.442695
  %v4396 = vpow.pop %v4395
  %v4397 = vmul.f32 %v4321, 1.442695
  %v4398 = vpow.pop %v4397
  %v4399 = vmul.f32 %v4322, 1.442695
  %v4400 = vpow.pop %v4399
  %v4401 = vmul.f32 %v4323, 1.442695
  %v4402 = vpow.pop %v4401
  %v4403 = vmul.f32 %v4324, 1.442695
  %v4404 = vpow.pop %v4403
  %v4405 = vmul.f32 %v4325, 1.442695
  %v4406 = vpow.pop %v4405
  %v4407 = vmul.f32 %v4326, 1.442695
  %v4408 = vpow.pop %v4407
  %v4409 = vmul.f32 %v4327, 1.442695
  %v4410 = vpow.pop %v4409
  %v4411 = vmul.f32 %v4328, 1.442695
  %v4412 = vpow.pop %v4411
  %v4413 = vmul.f32 %v4329, 1.442695
  %v4414 = vpow.pop %v4413
  %v4415 = vmul.f32 %v4330, 1.442695
  %v4416 = vpow.pop %v4415
  %v4417 = vmul.f32 %v4331, 1.442695
  %v4418 = vpow.pop %v4417
  %v4419 = vmul.f32 %v4332, 1.442695
  %v4420 = vpow.pop %v4419
  %v4421 = vmul.f32 %v4333, 1.442695
  %v4422 = vpow.pop %v4421
  %v4423 = vmul.f32 %v4334, 1.442695
  %v4424 = vpow.pop %v4423
  %v4425 = vmul.f32 %v4335, 1.442695
  %v4426 = vpow.pop %v4425
  %v4427 = vmul.f32 %v4336, 1.442695
  %v4428 = vpow.pop %v4427
  %v4429 = vmul.f32 %v4337, 1.442695
  %v4430 = vpow.pop %v4429
  %v4431 = vmul.f32 %v4338, 1.442695
  %v4432 = vpow.pop %v4431
  %v4433 = vmul.f32 %v4339, 1.442695
  %v4434 = vpow.pop %v4433
  %v4435 = vmul.f32 %v4340, 1.442695
  %v4436 = vpow.pop %v4435
  %v4437 = vmul.f32 %v4341, 1.442695
  %v4438 = vpow.pop %v4437
  %v4439 = vmul.f32 %v4342, 1.442695
  %v4440 = vpow.pop %v4439
  %v4441 = vmul.f32 %v4343, 1.442695
  %v4442 = vpow.pop %v4441
  %v4443 = vmul.f32 %v4344, 1.442695
  %v4444 = vpow.pop %v4443
  %v4445 = vmul.f32 %v4345, 1.442695
  %v4446 = vpow.pop %v4445
  %v4447 = vmul.f32 %v4346, 1.442695
  %v4448 = vpow.pop %v4447
  %v4449 = vmul.f32 %v4347, 1.442695
  %v4450 = vpow.pop %v4449
  %v4451 = vmul.f32 %v4348, 1.442695
  %v4452 = vpow.pop %v4451
  %v4453 = vmul.f32 %v4349, 1.442695
  %v4454 = vpow.pop %v4453
  %v4455 = vmul.f32 %v4350, 1.442695
  %v4456 = vpow.pop %v4455
  %v4457 = vmul.f32 %v4351, 1.442695
  %v4458 = vpow.pop %v4457
  %v4459 = vmul.f32 %v4352, 1.442695
  %v4460 = vpow.pop %v4459
  %v4461 = vmul.f32 %v4353, 1.442695
  %v4462 = vpow.pop %v4461
  %v4463 = vmul.f32 %v4354, 1.442695
  %v4464 = vpow.pop %v4463
  %v4465 = vmul.f32 %v4355, 1.442695
  %v4466 = vpow.pop %v4465
  %v4467 = vmul.f32 %v4356, 1.442695
  %v4468 = vpow.pop %v4467
  %v4469 = vmul.f32 %v4357, 1.442695
  %v4470 = vpow.pop %v4469
  %v4471 = vmul.f32 %v4358, 1.442695
  %v4472 = vpow.pop %v4471
  %v4473 = vmul.f32 %v4359, 1.442695
  %v4474 = vpow.pop %v4473
  %v4475 = vmul.f32 %v4360, 1.442695
  %v4476 = vpow.pop %v4475
  %v4477 = vmul.f32 %v4361, 1.442695
  %v4478 = vpow.pop %v4477
  %v4479 = vmul.f32 %v4362, 1.442695
  %v4480 = vpow.pop %v4479
  %v4481 = vmul.f32 %v4363, 1.442695
  %v4482 = vpow.pop %v4481
  %v4483 = vmul.f32 %v4364, 1.442695
  %v4484 = vpow.pop %v4483
  %v4485 = vmul.f32 %v4365, 1.442695
  %v4486 = vpow.pop %v4485
  %v4487 = vmul.f32 %v4366, 1.442695
  %v4488 = vpow.pop %v4487
  %v4489 = vmul.f32 %v4367, 1.442695
  %v4490 = vpow.pop %v4489
  %v4491 = vmul.f32 %v4368, 1.442695
  %v4492 = vpow.pop %v4491
  %v4493 = vmul.f32 %v4369, 1.442695
  %v4494 = vpow.pop %v4493
  %v4495 = vmul.f32 %v4370, 1.442695
  %v4496 = vpow.pop %v4495
  %v4497 = vmul.f32 %v4371, 1.442695
  %v4498 = vpow.pop %v4497
  %v4499 = vmul.f32 %v4372, 1.442695
  %v4500 = vpow.pop %v4499
  %v4501 = vadd.f32 %v4374, 1.0
  %v4502 = vadd.f32 %v4376, 1.0
  %v4503 = vadd.f32 %v4378, 1.0
  %v4504 = vadd.f32 %v4380, 1.0
  %v4505 = vadd.f32 %v4382, 1.0
  %v4506 = vadd.f32 %v4384, 1.0
  %v4507 = vadd.f32 %v4386, 1.0
  %v4508 = vadd.f32 %v4388, 1.0
  %v4509 = vadd.f32 %v4390, 1.0
  %v4510 = vadd.f32 %v4392, 1.0
  %v4511 = vadd.f32 %v4394, 1.0
  %v4512 = vadd.f32 %v4396, 1.0
  %v4513 = vadd.f32 %v4398, 1.0
  %v4514 = vadd.f32 %v4400, 1.0
  %v4515 = vadd.f32 %v4402, 1.0
  %v4516 = vadd.f32 %v4404, 1.0
  %v4517 = vadd.f32 %v4406, 1.0
  %v4518 = vadd.f32 %v4408, 1.0
  %v4519 = vadd.f32 %v4410, 1.0
  %v4520 = vadd.f32 %v4412, 1.0
  %v4521 = vadd.f32 %v4414, 1.0
  %v4522 = vadd.f32 %v4416, 1.0
  %v4523 = vadd.f32 %v4418, 1.0
  %v4524 = vadd.f32 %v4420, 1.0
  %v4525 = vadd.f32 %v4422, 1.0
  %v4526 = vadd.f32 %v4424, 1.0
  %v4527 = vadd.f32 %v4426, 1.0
  %v4528 = vadd.f32 %v4428, 1.0
  %v4529 = vadd.f32 %v4430, 1.0
  %v4530 = vadd.f32 %v4432, 1.0
  %v4531 = vadd.f32 %v4434, 1.0
  %v4532 = vadd.f32 %v4436, 1.0
  %v4533 = vadd.f32 %v4438, 1.0
  %v4534 = vadd.f32 %v4440, 1.0
  %v4535 = vadd.f32 %v4442, 1.0
  %v4536 = vadd.f32 %v4444, 1.0
  %v4537 = vadd.f32 %v4446, 1.0
  %v4538 = vadd.f32 %v4448, 1.0
  %v4539 = vadd.f32 %v4450, 1.0
  %v4540 = vadd.f32 %v4452, 1.0
  %v4541 = vadd.f32 %v4454, 1.0
  %v4542 = vadd.f32 %v4456, 1.0
  %v4543 = vadd.f32 %v4458, 1.0
  %v4544 = vadd.f32 %v4460, 1.0
  %v4545 = vadd.f32 %v4462, 1.0
  %v4546 = vadd.f32 %v4464, 1.0
  %v4547 = vadd.f32 %v4466, 1.0
  %v4548 = vadd.f32 %v4468, 1.0
  %v4549 = vadd.f32 %v4470, 1.0
  %v4550 = vadd.f32 %v4472, 1.0
  %v4551 = vadd.f32 %v4474, 1.0
  %v4552 = vadd.f32 %v4476, 1.0
  %v4553 = vadd.f32 %v4478, 1.0
  %v4554 = vadd.f32 %v4480, 1.0
  %v4555 = vadd.f32 %v4482, 1.0
  %v4556 = vadd.f32 %v4484, 1.0
  %v4557 = vadd.f32 %v4486, 1.0
  %v4558 = vadd.f32 %v4488, 1.0
  %v4559 = vadd.f32 %v4490, 1.0
  %v4560 = vadd.f32 %v4492, 1.0
  %v4561 = vadd.f32 %v4494, 1.0
  %v4562 = vadd.f32 %v4496, 1.0
  %v4563 = vadd.f32 %v4498, 1.0
  %v4564 = vadd.f32 %v4500, 1.0
  %v4565 = vrcp.pop %v4501
  %v4566 = vmul.f32 1.0, %v4565
  %v4567 = vrcp.pop %v4502
  %v4568 = vmul.f32 1.0, %v4567
  %v4569 = vrcp.pop %v4503
  %v4570 = vmul.f32 1.0, %v4569
  %v4571 = vrcp.pop %v4504
  %v4572 = vmul.f32 1.0, %v4571
  %v4573 = vrcp.pop %v4505
  %v4574 = vmul.f32 1.0, %v4573
  %v4575 = vrcp.pop %v4506
  %v4576 = vmul.f32 1.0, %v4575
  %v4577 = vrcp.pop %v4507
  %v4578 = vmul.f32 1.0, %v4577
  %v4579 = vrcp.pop %v4508
  %v4580 = vmul.f32 1.0, %v4579
  %v4581 = vrcp.pop %v4509
  %v4582 = vmul.f32 1.0, %v4581
  %v4583 = vrcp.pop %v4510
  %v4584 = vmul.f32 1.0, %v4583
  %v4585 = vrcp.pop %v4511
  %v4586 = vmul.f32 1.0, %v4585
  %v4587 = vrcp.pop %v4512
  %v4588 = vmul.f32 1.0, %v4587
  %v4589 = vrcp.pop %v4513
  %v4590 = vmul.f32 1.0, %v4589
  %v4591 = vrcp.pop %v4514
  %v4592 = vmul.f32 1.0, %v4591
  %v4593 = vrcp.pop %v4515
  %v4594 = vmul.f32 1.0, %v4593
  %v4595 = vrcp.pop %v4516
  %v4596 = vmul.f32 1.0, %v4595
  %v4597 = vrcp.pop %v4517
  %v4598 = vmul.f32 1.0, %v4597
  %v4599 = vrcp.pop %v4518
  %v4600 = vmul.f32 1.0, %v4599
  %v4601 = vrcp.pop %v4519
  %v4602 = vmul.f32 1.0, %v4601
  %v4603 = vrcp.pop %v4520
  %v4604 = vmul.f32 1.0, %v4603
  %v4605 = vrcp.pop %v4521
  %v4606 = vmul.f32 1.0, %v4605
  %v4607 = vrcp.pop %v4522
  %v4608 = vmul.f32 1.0, %v4607
  %v4609 = vrcp.pop %v4523
  %v4610 = vmul.f32 1.0, %v4609
  %v4611 = vrcp.pop %v4524
  %v4612 = vmul.f32 1.0, %v4611
  %v4613 = vrcp.pop %v4525
  %v4614 = vmul.f32 1.0, %v4613
  %v4615 = vrcp.pop %v4526
  %v4616 = vmul.f32 1.0, %v4615
  %v4617 = vrcp.pop %v4527
  %v4618 = vmul.f32 1.0, %v4617
  %v4619 = vrcp.pop %v4528
  %v4620 = vmul.f32 1.0, %v4619
  %v4621 = vrcp.pop %v4529
  %v4622 = vmul.f32 1.0, %v4621
  %v4623 = vrcp.pop %v4530
  %v4624 = vmul.f32 1.0, %v4623
  %v4625 = vrcp.pop %v4531
  %v4626 = vmul.f32 1.0, %v4625
  %v4627 = vrcp.pop %v4532
  %v4628 = vmul.f32 1.0, %v4627
  %v4629 = vrcp.pop %v4533
  %v4630 = vmul.f32 1.0, %v4629
  %v4631 = vrcp.pop %v4534
  %v4632 = vmul.f32 1.0, %v4631
  %v4633 = vrcp.pop %v4535
  %v4634 = vmul.f32 1.0, %v4633
  %v4635 = vrcp.pop %v4536
  %v4636 = vmul.f32 1.0, %v4635
  %v4637 = vrcp.pop %v4537
  %v4638 = vmul.f32 1.0, %v4637
  %v4639 = vrcp.pop %v4538
  %v4640 = vmul.f32 1.0, %v4639
  %v4641 = vrcp.pop %v4539
  %v4642 = vmul.f32 1.0, %v4641
  %v4643 = vrcp.pop %v4540
  %v4644 = vmul.f32 1.0, %v4643
  %v4645 = vrcp.pop %v4541
  %v4646 = vmul.f32 1.0, %v4645
  %v4647 = vrcp.pop %v4542
  %v4648 = vmul.f32 1.0, %v4647
  %v4649 = vrcp.pop %v4543
  %v4650 = vmul.f32 1.0, %v4649
  %v4651 = vrcp.pop %v4544
  %v4652 = vmul.f32 1.0, %v4651
  %v4653 = vrcp.pop %v4545
  %v4654 = vmul.f32 1.0, %v4653
  %v4655 = vrcp.pop %v4546
  %v4656 = vmul.f32 1.0, %v4655
  %v4657 = vrcp.pop %v4547
  %v4658 = vmul.f32 1.0, %v4657
  %v4659 = vrcp.pop %v4548
  %v4660 = vmul.f32 1.0, %v4659
  %v4661 = vrcp.pop %v4549
  %v4662 = vmul.f32 1.0, %v4661
  %v4663 = vrcp.pop %v4550
  %v4664 = vmul.f32 1.0, %v4663
  %v4665 = vrcp.pop %v4551
  %v4666 = vmul.f32 1.0, %v4665
  %v4667 = vrcp.pop %v4552
  %v4668 = vmul.f32 1.0, %v4667
  %v4669 = vrcp.pop %v4553
  %v4670 = vmul.f32 1.0, %v4669
  %v4671 = vrcp.pop %v4554
  %v4672 = vmul.f32 1.0, %v4671
  %v4673 = vrcp.pop %v4555
  %v4674 = vmul.f32 1.0, %v4673
  %v4675 = vrcp.pop %v4556
  %v4676 = vmul.f32 1.0, %v4675
  %v4677 = vrcp.pop %v4557
  %v4678 = vmul.f32 1.0, %v4677
  %v4679 = vrcp.pop %v4558
  %v4680 = vmul.f32 1.0, %v4679
  %v4681 = vrcp.pop %v4559
  %v4682 = vmul.f32 1.0, %v4681
  %v4683 = vrcp.pop %v4560
  %v4684 = vmul.f32 1.0, %v4683
  %v4685 = vrcp.pop %v4561
  %v4686 = vmul.f32 1.0, %v4685
  %v4687 = vrcp.pop %v4562
  %v4688 = vmul.f32 1.0, %v4687
  %v4689 = vrcp.pop %v4563
  %v4690 = vmul.f32 1.0, %v4689
  %v4691 = vrcp.pop %v4564
  %v4692 = vmul.f32 1.0, %v4691
  %4757 = vset.pattern.permute.xlu0 64
  %4758 = vperm.xlu0 %4757, %v4566
  %v4759 = vpop.permute.xlu0 %4758
  %4760 = vset.pattern.permute.xlu0 64
  %4761 = vperm.xlu0 %4760, %v4568
  %v4762 = vpop.permute.xlu0 %4761
  %4763 = vset.pattern.permute.xlu0 64
  %4764 = vperm.xlu0 %4763, %v4570
  %v4765 = vpop.permute.xlu0 %4764
  %4766 = vset.pattern.permute.xlu0 64
  %4767 = vperm.xlu0 %4766, %v4572
  %v4768 = vpop.permute.xlu0 %4767
  %4769 = vset.pattern.permute.xlu0 64
  %4770 = vperm.xlu0 %4769, %v4574
  %v4771 = vpop.permute.xlu0 %4770
  %4772 = vset.pattern.permute.xlu0 64
  %4773 = vperm.xlu0 %4772, %v4576
  %v4774 = vpop.permute.xlu0 %4773
  %4775 = vset.pattern.permute.xlu0 64
  %4776 = vperm.xlu0 %4775, %v4578
  %v4777 = vpop.permute.xlu0 %4776
  %4778 = vset.pattern.permute.xlu0 64
  %4779 = vperm.xlu0 %4778, %v4580
  %v4780 = vpop.permute.xlu0 %4779
  %4781 = vset.pattern.permute.xlu0 64
  %4782 = vperm.xlu0 %4781, %v4582
  %v4783 = vpop.permute.xlu0 %4782
  %4784 = vset.pattern.permute.xlu0 64
  %4785 = vperm.xlu0 %4784, %v4584
  %v4786 = vpop.permute.xlu0 %4785
  %4787 = vset.pattern.permute.xlu0 64
  %4788 = vperm.xlu0 %4787, %v4586
  %v4789 = vpop.permute.xlu0 %4788
  %4790 = vset.pattern.permute.xlu0 64
  %4791 = vperm.xlu0 %4790, %v4588
  %v4792 = vpop.permute.xlu0 %4791
  %4793 = vset.pattern.permute.xlu0 64
  %4794 = vperm.xlu0 %4793, %v4590
  %v4795 = vpop.permute.xlu0 %4794
  %4796 = vset.pattern.permute.xlu0 64
  %4797 = vperm.xlu0 %4796, %v4592
  %v4798 = vpop.permute.xlu0 %4797
  %4799 = vset.pattern.permute.xlu0 64
  %4800 = vperm.xlu0 %4799, %v4594
  %v4801 = vpop.permute.xlu0 %4800
  %4802 = vset.pattern.permute.xlu0 64
  %4803 = vperm.xlu0 %4802, %v4596
  %v4804 = vpop.permute.xlu0 %4803
  %4805 = vset.pattern.permute.xlu0 64
  %4806 = vperm.xlu0 %4805, %v4598
  %v4807 = vpop.permute.xlu0 %4806
  %4808 = vset.pattern.permute.xlu0 64
  %4809 = vperm.xlu0 %4808, %v4600
  %v4810 = vpop.permute.xlu0 %4809
  %4811 = vset.pattern.permute.xlu0 64
  %4812 = vperm.xlu0 %4811, %v4602
  %v4813 = vpop.permute.xlu0 %4812
  %4814 = vset.pattern.permute.xlu0 64
  %4815 = vperm.xlu0 %4814, %v4604
  %v4816 = vpop.permute.xlu0 %4815
  %4817 = vset.pattern.permute.xlu0 64
  %4818 = vperm.xlu0 %4817, %v4606
  %v4819 = vpop.permute.xlu0 %4818
  %4820 = vset.pattern.permute.xlu0 64
  %4821 = vperm.xlu0 %4820, %v4608
  %v4822 = vpop.permute.xlu0 %4821
  %4823 = vset.pattern.permute.xlu0 64
  %4824 = vperm.xlu0 %4823, %v4610
  %v4825 = vpop.permute.xlu0 %4824
  %4826 = vset.pattern.permute.xlu0 64
  %4827 = vperm.xlu0 %4826, %v4612
  %v4828 = vpop.permute.xlu0 %4827
  %4829 = vset.pattern.permute.xlu0 64
  %4830 = vperm.xlu0 %4829, %v4614
  %v4831 = vpop.permute.xlu0 %4830
  %4832 = vset.pattern.permute.xlu0 64
  %4833 = vperm.xlu0 %4832, %v4616
  %v4834 = vpop.permute.xlu0 %4833
  %4835 = vset.pattern.permute.xlu0 64
  %4836 = vperm.xlu0 %4835, %v4618
  %v4837 = vpop.permute.xlu0 %4836
  %4838 = vset.pattern.permute.xlu0 64
  %4839 = vperm.xlu0 %4838, %v4620
  %v4840 = vpop.permute.xlu0 %4839
  %4841 = vset.pattern.permute.xlu0 64
  %4842 = vperm.xlu0 %4841, %v4622
  %v4843 = vpop.permute.xlu0 %4842
  %4844 = vset.pattern.permute.xlu0 64
  %4845 = vperm.xlu0 %4844, %v4624
  %v4846 = vpop.permute.xlu0 %4845
  %4847 = vset.pattern.permute.xlu0 64
  %4848 = vperm.xlu0 %4847, %v4626
  %v4849 = vpop.permute.xlu0 %4848
  %4850 = vset.pattern.permute.xlu0 64
  %4851 = vperm.xlu0 %4850, %v4628
  %v4852 = vpop.permute.xlu0 %4851
  %4853 = vset.pattern.permute.xlu0 64
  %4854 = vperm.xlu0 %4853, %v4630
  %v4855 = vpop.permute.xlu0 %4854
  %4856 = vset.pattern.permute.xlu0 64
  %4857 = vperm.xlu0 %4856, %v4632
  %v4858 = vpop.permute.xlu0 %4857
  %4859 = vset.pattern.permute.xlu0 64
  %4860 = vperm.xlu0 %4859, %v4634
  %v4861 = vpop.permute.xlu0 %4860
  %4862 = vset.pattern.permute.xlu0 64
  %4863 = vperm.xlu0 %4862, %v4636
  %v4864 = vpop.permute.xlu0 %4863
  %4865 = vset.pattern.permute.xlu0 64
  %4866 = vperm.xlu0 %4865, %v4638
  %v4867 = vpop.permute.xlu0 %4866
  %4868 = vset.pattern.permute.xlu0 64
  %4869 = vperm.xlu0 %4868, %v4640
  %v4870 = vpop.permute.xlu0 %4869
  %4871 = vset.pattern.permute.xlu0 64
  %4872 = vperm.xlu0 %4871, %v4642
  %v4873 = vpop.permute.xlu0 %4872
  %4874 = vset.pattern.permute.xlu0 64
  %4875 = vperm.xlu0 %4874, %v4644
  %v4876 = vpop.permute.xlu0 %4875
  %4877 = vset.pattern.permute.xlu0 64
  %4878 = vperm.xlu0 %4877, %v4646
  %v4879 = vpop.permute.xlu0 %4878
  %4880 = vset.pattern.permute.xlu0 64
  %4881 = vperm.xlu0 %4880, %v4648
  %v4882 = vpop.permute.xlu0 %4881
  %4883 = vset.pattern.permute.xlu0 64
  %4884 = vperm.xlu0 %4883, %v4650
  %v4885 = vpop.permute.xlu0 %4884
  %4886 = vset.pattern.permute.xlu0 64
  %4887 = vperm.xlu0 %4886, %v4652
  %v4888 = vpop.permute.xlu0 %4887
  %4889 = vset.pattern.permute.xlu0 64
  %4890 = vperm.xlu0 %4889, %v4654
  %v4891 = vpop.permute.xlu0 %4890
  %4892 = vset.pattern.permute.xlu0 64
  %4893 = vperm.xlu0 %4892, %v4656
  %v4894 = vpop.permute.xlu0 %4893
  %4895 = vset.pattern.permute.xlu0 64
  %4896 = vperm.xlu0 %4895, %v4658
  %v4897 = vpop.permute.xlu0 %4896
  %4898 = vset.pattern.permute.xlu0 64
  %4899 = vperm.xlu0 %4898, %v4660
  %v4900 = vpop.permute.xlu0 %4899
  %4901 = vset.pattern.permute.xlu0 64
  %4902 = vperm.xlu0 %4901, %v4662
  %v4903 = vpop.permute.xlu0 %4902
  %4904 = vset.pattern.permute.xlu0 64
  %4905 = vperm.xlu0 %4904, %v4664
  %v4906 = vpop.permute.xlu0 %4905
  %4907 = vset.pattern.permute.xlu0 64
  %4908 = vperm.xlu0 %4907, %v4666
  %v4909 = vpop.permute.xlu0 %4908
  %4910 = vset.pattern.permute.xlu0 64
  %4911 = vperm.xlu0 %4910, %v4668
  %v4912 = vpop.permute.xlu0 %4911
  %4913 = vset.pattern.permute.xlu0 64
  %4914 = vperm.xlu0 %4913, %v4670
  %v4915 = vpop.permute.xlu0 %4914
  %4916 = vset.pattern.permute.xlu0 64
  %4917 = vperm.xlu0 %4916, %v4672
  %v4918 = vpop.permute.xlu0 %4917
  %4919 = vset.pattern.permute.xlu0 64
  %4920 = vperm.xlu0 %4919, %v4674
  %v4921 = vpop.permute.xlu0 %4920
  %4922 = vset.pattern.permute.xlu0 64
  %4923 = vperm.xlu0 %4922, %v4676
  %v4924 = vpop.permute.xlu0 %4923
  %4925 = vset.pattern.permute.xlu0 64
  %4926 = vperm.xlu0 %4925, %v4678
  %v4927 = vpop.permute.xlu0 %4926
  %4928 = vset.pattern.permute.xlu0 64
  %4929 = vperm.xlu0 %4928, %v4680
  %v4930 = vpop.permute.xlu0 %4929
  %4931 = vset.pattern.permute.xlu0 64
  %4932 = vperm.xlu0 %4931, %v4682
  %v4933 = vpop.permute.xlu0 %4932
  %4934 = vset.pattern.permute.xlu0 64
  %4935 = vperm.xlu0 %4934, %v4684
  %v4936 = vpop.permute.xlu0 %4935
  %4937 = vset.pattern.permute.xlu0 64
  %4938 = vperm.xlu0 %4937, %v4686
  %v4939 = vpop.permute.xlu0 %4938
  %4940 = vset.pattern.permute.xlu0 64
  %4941 = vperm.xlu0 %4940, %v4688
  %v4942 = vpop.permute.xlu0 %4941
  %4943 = vset.pattern.permute.xlu0 64
  %4944 = vperm.xlu0 %4943, %v4690
  %v4945 = vpop.permute.xlu0 %4944
  %4946 = vset.pattern.permute.xlu0 64
  %4947 = vperm.xlu0 %4946, %v4692
  %v4948 = vpop.permute.xlu0 %4947
  %v4949 = vlaneseq
  %v4950 = vand.u32 %v4949, 127
  %v4951 = vlaneseq
  %v4952 = vshrl.u32 %v4951, 7
  %v4953 = vsub.s32 %v4950, %v4952
  %v4954 = vrot.slane %v4759, %v4953
  %v4955 = vlaneseq
  %v4956 = vshrl.u32 %v4955, 7
  %v4957 = vsub.s32 %v4950, %v4956
  %v4958 = vrot.slane %v4762, %v4957
  %v4959 = vlaneseq
  %v4960 = vshrl.u32 %v4959, 7
  %v4961 = vsub.s32 %v4950, %v4960
  %v4962 = vrot.slane %v4765, %v4961
  %v4963 = vlaneseq
  %v4964 = vshrl.u32 %v4963, 7
  %v4965 = vsub.s32 %v4950, %v4964
  %v4966 = vrot.slane %v4768, %v4965
  %v4967 = vlaneseq
  %v4968 = vshrl.u32 %v4967, 7
  %v4969 = vsub.s32 %v4950, %v4968
  %v4970 = vrot.slane %v4771, %v4969
  %v4971 = vlaneseq
  %v4972 = vshrl.u32 %v4971, 7
  %v4973 = vsub.s32 %v4950, %v4972
  %v4974 = vrot.slane %v4774, %v4973
  %v4975 = vlaneseq
  %v4976 = vshrl.u32 %v4975, 7
  %v4977 = vsub.s32 %v4950, %v4976
  %v4978 = vrot.slane %v4777, %v4977
  %v4979 = vlaneseq
  %v4980 = vshrl.u32 %v4979, 7
  %v4981 = vsub.s32 %v4950, %v4980
  %v4982 = vrot.slane %v4780, %v4981
  %v4983 = vlaneseq
  %v4984 = vshrl.u32 %v4983, 7
  %v4985 = vsub.s32 %v4950, %v4984
  %v4986 = vrot.slane %v4783, %v4985
  %v4987 = vlaneseq
  %v4988 = vshrl.u32 %v4987, 7
  %v4989 = vsub.s32 %v4950, %v4988
  %v4990 = vrot.slane %v4786, %v4989
  %v4991 = vlaneseq
  %v4992 = vshrl.u32 %v4991, 7
  %v4993 = vsub.s32 %v4950, %v4992
  %v4994 = vrot.slane %v4789, %v4993
  %v4995 = vlaneseq
  %v4996 = vshrl.u32 %v4995, 7
  %v4997 = vsub.s32 %v4950, %v4996
  %v4998 = vrot.slane %v4792, %v4997
  %v4999 = vlaneseq
  %v5000 = vshrl.u32 %v4999, 7
  %v5001 = vsub.s32 %v4950, %v5000
  %v5002 = vrot.slane %v4795, %v5001
  %v5003 = vlaneseq
  %v5004 = vshrl.u32 %v5003, 7
  %v5005 = vsub.s32 %v4950, %v5004
  %v5006 = vrot.slane %v4798, %v5005
  %v5007 = vlaneseq
  %v5008 = vshrl.u32 %v5007, 7
  %v5009 = vsub.s32 %v4950, %v5008
  %v5010 = vrot.slane %v4801, %v5009
  %v5011 = vlaneseq
  %v5012 = vshrl.u32 %v5011, 7
  %v5013 = vsub.s32 %v4950, %v5012
  %v5014 = vrot.slane %v4804, %v5013
  %v5015 = vlaneseq
  %v5016 = vshrl.u32 %v5015, 7
  %v5017 = vsub.s32 %v4950, %v5016
  %v5018 = vrot.slane %v4807, %v5017
  %v5019 = vlaneseq
  %v5020 = vshrl.u32 %v5019, 7
  %v5021 = vsub.s32 %v4950, %v5020
  %v5022 = vrot.slane %v4810, %v5021
  %v5023 = vlaneseq
  %v5024 = vshrl.u32 %v5023, 7
  %v5025 = vsub.s32 %v4950, %v5024
  %v5026 = vrot.slane %v4813, %v5025
  %v5027 = vlaneseq
  %v5028 = vshrl.u32 %v5027, 7
  %v5029 = vsub.s32 %v4950, %v5028
  %v5030 = vrot.slane %v4816, %v5029
  %v5031 = vlaneseq
  %v5032 = vshrl.u32 %v5031, 7
  %v5033 = vsub.s32 %v4950, %v5032
  %v5034 = vrot.slane %v4819, %v5033
  %v5035 = vlaneseq
  %v5036 = vshrl.u32 %v5035, 7
  %v5037 = vsub.s32 %v4950, %v5036
  %v5038 = vrot.slane %v4822, %v5037
  %v5039 = vlaneseq
  %v5040 = vshrl.u32 %v5039, 7
  %v5041 = vsub.s32 %v4950, %v5040
  %v5042 = vrot.slane %v4825, %v5041
  %v5043 = vlaneseq
  %v5044 = vshrl.u32 %v5043, 7
  %v5045 = vsub.s32 %v4950, %v5044
  %v5046 = vrot.slane %v4828, %v5045
  %v5047 = vlaneseq
  %v5048 = vshrl.u32 %v5047, 7
  %v5049 = vsub.s32 %v4950, %v5048
  %v5050 = vrot.slane %v4831, %v5049
  %v5051 = vlaneseq
  %v5052 = vshrl.u32 %v5051, 7
  %v5053 = vsub.s32 %v4950, %v5052
  %v5054 = vrot.slane %v4834, %v5053
  %v5055 = vlaneseq
  %v5056 = vshrl.u32 %v5055, 7
  %v5057 = vsub.s32 %v4950, %v5056
  %v5058 = vrot.slane %v4837, %v5057
  %v5059 = vlaneseq
  %v5060 = vshrl.u32 %v5059, 7
  %v5061 = vsub.s32 %v4950, %v5060
  %v5062 = vrot.slane %v4840, %v5061
  %v5063 = vlaneseq
  %v5064 = vshrl.u32 %v5063, 7
  %v5065 = vsub.s32 %v4950, %v5064
  %v5066 = vrot.slane %v4843, %v5065
  %v5067 = vlaneseq
  %v5068 = vshrl.u32 %v5067, 7
  %v5069 = vsub.s32 %v4950, %v5068
  %v5070 = vrot.slane %v4846, %v5069
  %v5071 = vlaneseq
  %v5072 = vshrl.u32 %v5071, 7
  %v5073 = vsub.s32 %v4950, %v5072
  %v5074 = vrot.slane %v4849, %v5073
  %v5075 = vlaneseq
  %v5076 = vshrl.u32 %v5075, 7
  %v5077 = vsub.s32 %v4950, %v5076
  %v5078 = vrot.slane %v4852, %v5077
  %v5079 = vlaneseq
  %v5080 = vshrl.u32 %v5079, 7
  %v5081 = vsub.s32 %v4950, %v5080
  %v5082 = vrot.slane %v4855, %v5081
  %v5083 = vlaneseq
  %v5084 = vshrl.u32 %v5083, 7
  %v5085 = vsub.s32 %v4950, %v5084
  %v5086 = vrot.slane %v4858, %v5085
  %v5087 = vlaneseq
  %v5088 = vshrl.u32 %v5087, 7
  %v5089 = vsub.s32 %v4950, %v5088
  %v5090 = vrot.slane %v4861, %v5089
  %v5091 = vlaneseq
  %v5092 = vshrl.u32 %v5091, 7
  %v5093 = vsub.s32 %v4950, %v5092
  %v5094 = vrot.slane %v4864, %v5093
  %v5095 = vlaneseq
  %v5096 = vshrl.u32 %v5095, 7
  %v5097 = vsub.s32 %v4950, %v5096
  %v5098 = vrot.slane %v4867, %v5097
  %v5099 = vlaneseq
  %v5100 = vshrl.u32 %v5099, 7
  %v5101 = vsub.s32 %v4950, %v5100
  %v5102 = vrot.slane %v4870, %v5101
  %v5103 = vlaneseq
  %v5104 = vshrl.u32 %v5103, 7
  %v5105 = vsub.s32 %v4950, %v5104
  %v5106 = vrot.slane %v4873, %v5105
  %v5107 = vlaneseq
  %v5108 = vshrl.u32 %v5107, 7
  %v5109 = vsub.s32 %v4950, %v5108
  %v5110 = vrot.slane %v4876, %v5109
  %v5111 = vlaneseq
  %v5112 = vshrl.u32 %v5111, 7
  %v5113 = vsub.s32 %v4950, %v5112
  %v5114 = vrot.slane %v4879, %v5113
  %v5115 = vlaneseq
  %v5116 = vshrl.u32 %v5115, 7
  %v5117 = vsub.s32 %v4950, %v5116
  %v5118 = vrot.slane %v4882, %v5117
  %v5119 = vlaneseq
  %v5120 = vshrl.u32 %v5119, 7
  %v5121 = vsub.s32 %v4950, %v5120
  %v5122 = vrot.slane %v4885, %v5121
  %v5123 = vlaneseq
  %v5124 = vshrl.u32 %v5123, 7
  %v5125 = vsub.s32 %v4950, %v5124
  %v5126 = vrot.slane %v4888, %v5125
  %v5127 = vlaneseq
  %v5128 = vshrl.u32 %v5127, 7
  %v5129 = vsub.s32 %v4950, %v5128
  %v5130 = vrot.slane %v4891, %v5129
  %v5131 = vlaneseq
  %v5132 = vshrl.u32 %v5131, 7
  %v5133 = vsub.s32 %v4950, %v5132
  %v5134 = vrot.slane %v4894, %v5133
  %v5135 = vlaneseq
  %v5136 = vshrl.u32 %v5135, 7
  %v5137 = vsub.s32 %v4950, %v5136
  %v5138 = vrot.slane %v4897, %v5137
  %v5139 = vlaneseq
  %v5140 = vshrl.u32 %v5139, 7
  %v5141 = vsub.s32 %v4950, %v5140
  %v5142 = vrot.slane %v4900, %v5141
  %v5143 = vlaneseq
  %v5144 = vshrl.u32 %v5143, 7
  %v5145 = vsub.s32 %v4950, %v5144
  %v5146 = vrot.slane %v4903, %v5145
  %v5147 = vlaneseq
  %v5148 = vshrl.u32 %v5147, 7
  %v5149 = vsub.s32 %v4950, %v5148
  %v5150 = vrot.slane %v4906, %v5149
  %v5151 = vlaneseq
  %v5152 = vshrl.u32 %v5151, 7
  %v5153 = vsub.s32 %v4950, %v5152
  %v5154 = vrot.slane %v4909, %v5153
  %v5155 = vlaneseq
  %v5156 = vshrl.u32 %v5155, 7
  %v5157 = vsub.s32 %v4950, %v5156
  %v5158 = vrot.slane %v4912, %v5157
  %v5159 = vlaneseq
  %v5160 = vshrl.u32 %v5159, 7
  %v5161 = vsub.s32 %v4950, %v5160
  %v5162 = vrot.slane %v4915, %v5161
  %v5163 = vlaneseq
  %v5164 = vshrl.u32 %v5163, 7
  %v5165 = vsub.s32 %v4950, %v5164
  %v5166 = vrot.slane %v4918, %v5165
  %v5167 = vlaneseq
  %v5168 = vshrl.u32 %v5167, 7
  %v5169 = vsub.s32 %v4950, %v5168
  %v5170 = vrot.slane %v4921, %v5169
  %v5171 = vlaneseq
  %v5172 = vshrl.u32 %v5171, 7
  %v5173 = vsub.s32 %v4950, %v5172
  %v5174 = vrot.slane %v4924, %v5173
  %v5175 = vlaneseq
  %v5176 = vshrl.u32 %v5175, 7
  %v5177 = vsub.s32 %v4950, %v5176
  %v5178 = vrot.slane %v4927, %v5177
  %v5179 = vlaneseq
  %v5180 = vshrl.u32 %v5179, 7
  %v5181 = vsub.s32 %v4950, %v5180
  %v5182 = vrot.slane %v4930, %v5181
  %v5183 = vlaneseq
  %v5184 = vshrl.u32 %v5183, 7
  %v5185 = vsub.s32 %v4950, %v5184
  %v5186 = vrot.slane %v4933, %v5185
  %v5187 = vlaneseq
  %v5188 = vshrl.u32 %v5187, 7
  %v5189 = vsub.s32 %v4950, %v5188
  %v5190 = vrot.slane %v4936, %v5189
  %v5191 = vlaneseq
  %v5192 = vshrl.u32 %v5191, 7
  %v5193 = vsub.s32 %v4950, %v5192
  %v5194 = vrot.slane %v4939, %v5193
  %v5195 = vlaneseq
  %v5196 = vshrl.u32 %v5195, 7
  %v5197 = vsub.s32 %v4950, %v5196
  %v5198 = vrot.slane %v4942, %v5197
  %v5199 = vlaneseq
  %v5200 = vshrl.u32 %v5199, 7
  %v5201 = vsub.s32 %v4950, %v5200
  %v5202 = vrot.slane %v4945, %v5201
  %v5203 = vlaneseq
  %v5204 = vshrl.u32 %v5203, 7
  %v5205 = vsub.s32 %v4950, %v5204
  %v5206 = vrot.slane %v4948, %v5205
  %v5207 = vsel %vm1532, %v4958, %v4954
  %v5208 = vsel %vm1534, %v4962, %v5207
  %v5209 = vsel %vm1536, %v4966, %v5208
  %v5210 = vsel %vm1538, %v4970, %v5209
  %v5211 = vsel %vm1540, %v4974, %v5210
  %v5212 = vsel %vm1542, %v4978, %v5211
  %v5213 = vsel %vm1544, %v4982, %v5212
  %v5214 = vsel %vm1532, %v4990, %v4986
  %v5215 = vsel %vm1534, %v4994, %v5214
  %v5216 = vsel %vm1536, %v4998, %v5215
  %v5217 = vsel %vm1538, %v5002, %v5216
  %v5218 = vsel %vm1540, %v5006, %v5217
  %v5219 = vsel %vm1542, %v5010, %v5218
  %v5220 = vsel %vm1544, %v5014, %v5219
  %v5221 = vsel %vm1532, %v5022, %v5018
  %v5222 = vsel %vm1534, %v5026, %v5221
  %v5223 = vsel %vm1536, %v5030, %v5222
  %v5224 = vsel %vm1538, %v5034, %v5223
  %v5225 = vsel %vm1540, %v5038, %v5224
  %v5226 = vsel %vm1542, %v5042, %v5225
  %v5227 = vsel %vm1544, %v5046, %v5226
  %v5228 = vsel %vm1532, %v5054, %v5050
  %v5229 = vsel %vm1534, %v5058, %v5228
  %v5230 = vsel %vm1536, %v5062, %v5229
  %v5231 = vsel %vm1538, %v5066, %v5230
  %v5232 = vsel %vm1540, %v5070, %v5231
  %v5233 = vsel %vm1542, %v5074, %v5232
  %v5234 = vsel %vm1544, %v5078, %v5233
  %v5235 = vsel %vm1532, %v5086, %v5082
  %v5236 = vsel %vm1534, %v5090, %v5235
  %v5237 = vsel %vm1536, %v5094, %v5236
  %v5238 = vsel %vm1538, %v5098, %v5237
  %v5239 = vsel %vm1540, %v5102, %v5238
  %v5240 = vsel %vm1542, %v5106, %v5239
  %v5241 = vsel %vm1544, %v5110, %v5240
  %v5242 = vsel %vm1532, %v5118, %v5114
  %v5243 = vsel %vm1534, %v5122, %v5242
  %v5244 = vsel %vm1536, %v5126, %v5243
  %v5245 = vsel %vm1538, %v5130, %v5244
  %v5246 = vsel %vm1540, %v5134, %v5245
  %v5247 = vsel %vm1542, %v5138, %v5246
  %v5248 = vsel %vm1544, %v5142, %v5247
  %v5249 = vsel %vm1532, %v5150, %v5146
  %v5250 = vsel %vm1534, %v5154, %v5249
  %v5251 = vsel %vm1536, %v5158, %v5250
  %v5252 = vsel %vm1538, %v5162, %v5251
  %v5253 = vsel %vm1540, %v5166, %v5252
  %v5254 = vsel %vm1542, %v5170, %v5253
  %v5255 = vsel %vm1544, %v5174, %v5254
  %v5256 = vsel %vm1532, %v5182, %v5178
  %v5257 = vsel %vm1534, %v5186, %v5256
  %v5258 = vsel %vm1536, %v5190, %v5257
  %v5259 = vsel %vm1538, %v5194, %v5258
  %v5260 = vsel %vm1540, %v5198, %v5259
  %v5261 = vsel %vm1542, %v5202, %v5260
  %v5262 = vsel %vm1544, %v5206, %v5261
  %vm5271 = vcmask 48128
  %v5272 = vsel %vm5271, %v5213, 0.0
  %v5273 = vsel %vm5271, %v5220, 0.0
  %v5274 = vsel %vm5271, %v5227, 0.0
  %v5275 = vsel %vm5271, %v5234, 0.0
  %v5276 = vsel %vm5271, %v5241, 0.0
  %v5277 = vsel %vm5271, %v5248, 0.0
  %v5278 = vsel %vm5271, %v5255, 0.0
  %v5279 = vsel %vm5271, %v5262, 0.0
  %5280 = vst [vmem:[%s5] sm:$0xff] %v5272
  %5281 = vst [vmem:[%s5 + $0x8] sm:$0xff] %v5273
  %5282 = vst [vmem:[%s5 + $0x10] sm:$0xff] %v5274
  %5283 = vst [vmem:[%s5 + $0x18] sm:$0xff] %v5275
  %5284 = vst [vmem:[%s5 + $0x20] sm:$0xff] %v5276
  %5285 = vst [vmem:[%s5 + $0x28] sm:$0xff] %v5277
  %5286 = vst [vmem:[%s5 + $0x30] sm:$0xff] %v5278
  %5287 = vst [vmem:[%s5 + $0x38] sm:$0xff] %v5279
  // Predicated region
  $region22: #{caser_forward.1} parent=0 // pred_check
    _
  $region23: #{caser_forward.1} parent=0 // pred_check_branch
    %5289 = sbr.rel (0) target = $region25
  $region24: #{caser_forward.1} parent=0 // pred_region
    _
  $region25: #{caser_forward.1} parent=0 // pred_fallthru
    _
  // Predicated region
  $region26: #{caser_forward.1} parent=0 // pred_check
    _
  $region27: #{caser_forward.1} parent=0 // pred_check_branch
    %5291 = sbr.rel (0) target = $region29
  $region28: #{caser_forward.1} parent=0 // pred_region
    _
  $region29: #{caser_forward.1} parent=0 // pred_fallthru
    _

</llo_original>
